<compile_context>
chip_gen: v7x
topology: tpu7x:2x2x1
jax: 0.10.0
libtpu: 0.0.40
codegen_flags: <defaults>
</compile_context>

<pallas_src>
import functools

import numpy as np
import jax
import jax.numpy as jnp
from jax.experimental import pallas as pl
from jax.experimental.pallas import tpu as pltpu

K = 3          # conv kernel size
PAD = 1        # "same" padding
C1, C2 = 32, 64
FC1_N = 128
FC2_N = 10
FC2_NPAD = 128  # lane-dense padded fc2 output width


def _tap_masks_and_shifts(batch, h, w):
    """Per-tap row shift (in rows of the spatial-major layout r=(y*W+x)*B+b)
    and 0/1 validity mask (1 iff the 3x3 source pixel is inside the image)."""
    m = batch * h * w
    masks = np.zeros((K * K, m), np.float32)
    shifts = []
    for dy in range(K):
        for dx in range(K):
            t = dy * K + dx
            shifts.append(((dy - PAD) * w + (dx - PAD)) * batch)
            for yy in range(h):
                sy = yy + dy - PAD
                if not (0 <= sy < h):
                    continue
                for xx in range(w):
                    sx = xx + dx - PAD
                    if not (0 <= sx < w):
                        continue
                    base = (yy * w + xx) * batch
                    masks[t, base:base + batch] = 1.0
    return masks, tuple(shifts)


def _sslnet_kernel(xpad_ref, msk_ref, w1_ref, b1_ref, w2c_ref, b2_ref,
                   wfc1_ref, bfc1_ref, wfc2_ref, bfc2_ref,
                   o_ref, y1pad_ref, ycat_ref, y2_ref, y2f_ref,
                   *, batch, n_hw, shifts, sh):
    f32, bf16 = jnp.float32, jnp.bfloat16
    m = batch * n_hw

    # ---- conv1 + ReLU: pure VPU (shifted window of zero-padded x, masked). ----
    acc1 = jnp.zeros((m, C1), f32)
    for t in range(K * K):
        src = xpad_ref[pl.ds(sh + shifts[t], m), :]           # (M, 32) window
        acc1 = acc1 + msk_ref[t] * src * w1_ref[t]             # VPU only
    y1 = jnp.maximum(acc1 + b1_ref[...], 0.0)                  # (M, 32) f32

    # ---- conv2 + ReLU: ONE (M, 288) @ (288, 64) MXU matmul. ----
    y1pad_ref[...] = jnp.zeros((m + 2 * sh, C1), f32)          # zero row pads
    y1pad_ref[pl.ds(sh, m), :] = y1
    for t in range(K * K):
        src = y1pad_ref[pl.ds(sh + shifts[t], m), :]           # shifted copy
        ycat_ref[:, t * C1:(t + 1) * C1] = msk_ref[t] * src    # mask AFTER shift
    acc2 = jnp.dot(ycat_ref[...].astype(bf16), w2c_ref[...],
                   preferred_element_type=f32)                 # (M, 64)
    y2_ref[...] = jnp.maximum(acc2 + b2_ref[...], 0.0)

    # ---- fc1 + ReLU: relayout (M,64) -> (B,1600) once, ONE matmul. ----
    for p in range(n_hw):
        y2f_ref[:, p * C2:(p + 1) * C2] = y2_ref[pl.ds(p * batch, batch), :]
    y3 = jnp.maximum(
        jnp.dot(y2f_ref[...].astype(bf16), wfc1_ref[...],
                preferred_element_type=f32) + bfc1_ref[...], 0.0)   # (B, 128)

    # ---- fc2 (lane-padded to 128 output columns): ONE matmul. ----
    o_ref[...] = (jnp.dot(y3.astype(bf16), wfc2_ref[...],
                          preferred_element_type=f32)
                  + bfc2_ref[...]).astype(o_ref.dtype)


def prepare_params(p):
    """One-time conversion of PyTorch-layout parameters to kernel layout."""
    # conv1 weights: (Cout,1,kh,kw) -> (taps, 1, Cout), tap = dy*3 + dx.
    w1 = jnp.transpose(p["w1"], (2, 3, 1, 0)).reshape(K * K, 1, C1)
    # conv2 weights flattened for the single (M,288)@(288,64) matmul:
    # W2cat[t*32 + cin, cout] = w2[cout, cin, dy, dx].
    w2cat = (jnp.transpose(p["w2"], (2, 3, 1, 0))
             .reshape(K * K * C1, C2).astype(jnp.bfloat16))
    # fc1_w rows use torch's NCHW flatten (c*25 + p); permute rows to (p*64 + c)
    # to match the kernel's (B, 1600) relayout.
    n_hw = p["fc1_w"].shape[0] // C2
    wfc1 = (jnp.transpose(p["fc1_w"].reshape(C2, n_hw, FC1_N), (1, 0, 2))
            .reshape(n_hw * C2, FC1_N).astype(jnp.bfloat16))
    # Lane-dense fc2: pad N = 10 -> 128 (wrapper slices back).
    wfc2 = jnp.pad(p["fc2_w"], ((0, 0), (0, FC2_NPAD - FC2_N))).astype(jnp.bfloat16)
    bfc2 = jnp.pad(p["fc2_b"], (0, FC2_NPAD - FC2_N))
    return {
        "w1": w1, "b1": p["b1"].reshape(1, C1),
        "w2cat": w2cat, "b2": p["b2"].reshape(1, C2),
        "wfc1": wfc1, "bfc1": p["fc1_b"].reshape(1, FC1_N),
        "wfc2": wfc2, "bfc2": bfc2.reshape(1, FC2_NPAD),
    }


@jax.jit
def ssl_net_forward(x_nchw, prep):
    batch, _, h, w = x_nchw.shape
    n_hw = h * w
    m = batch * n_hw
    # Row-shift pad, rounded up to a sublane-tile multiple for aligned stores.
    sh = (PAD * (w + 1) * batch + 7) // 8 * 8

    # NCHW -> rows r = (y*W + x)*B + b, pre-broadcast to C1 lanes, zero row-pad.
    x0 = jnp.transpose(x_nchw, (2, 3, 0, 1)).reshape(m, 1)
    xb = jnp.broadcast_to(x0, (m, C1))
    xpad = jnp.pad(xb, ((sh, sh), (0, 0)))

    masks_np, shifts = _tap_masks_and_shifts(batch, h, w)       # trace-time consts
    msk = jnp.asarray(np.ascontiguousarray(
        np.broadcast_to(masks_np[:, :, None], (K * K, m, C1))))

    vmem = lambda: pl.BlockSpec(memory_space=pltpu.MemorySpace.VMEM)
    out = pl.pallas_call(
        functools.partial(_sslnet_kernel, batch=batch, n_hw=n_hw,
                          shifts=shifts, sh=sh),
        out_shape=jax.ShapeDtypeStruct((batch, FC2_NPAD), jnp.float32),
        in_specs=[vmem() for _ in range(10)],
        out_specs=vmem(),
        scratch_shapes=[
            pltpu.VMEM((m + 2 * sh, C1), jnp.float32),   # zero-padded y1
            pltpu.VMEM((m, K * K * C1), jnp.float32),    # Ycat (M, 288)
            pltpu.VMEM((m, C2), jnp.float32),            # y2   (M, 64)
            pltpu.VMEM((batch, n_hw * C2), jnp.float32), # y2 flat (B, 1600)
        ],
    )(xpad, msk, prep["w1"], prep["b1"], prep["w2cat"], prep["b2"],
      prep["wfc1"], prep["bfc1"], prep["wfc2"], prep["bfc2"])
    # TODO(synk): if batch grows, add a 'parallel' row-tile grid axis so both
    # v7x TensorCores are used; unnecessary at B=2.
    return out[:, :FC2_N]


# ----------------------------------------------------------------------------
# Pure-JAX reference (torch-layout params) for correctness verification.
# ----------------------------------------------------------------------------
def ref_forward(x_nchw, params):
    dn = ("NCHW", "OIHW", "NCHW")
    y = jax.lax.conv_general_dilated(
        x_nchw, params["w1"], (1, 1), ((1, 1), (1, 1)), dimension_numbers=dn)
    y = jnp.maximum(y + params["b1"][None, :, None, None], 0.0)
    y = jax.lax.conv_general_dilated(
        y, params["w2"], (1, 1), ((1, 1), (1, 1)), dimension_numbers=dn)
    y = jnp.maximum(y + params["b2"][None, :, None, None], 0.0)
    y = y.reshape(y.shape[0], -1)
    y = jnp.maximum(y @ params["fc1_w"] + params["fc1_b"], 0.0)
    return y @ params["fc2_w"] + params["fc2_b"]


if __name__ == "__main__":
    # Spatial size must be 5x5 so that 64*5*5 matches fc1's fan-in.
    B, H, W = 2, 5, 5
    key = jax.random.PRNGKey(0)
    ks = jax.random.split(key, 9)

    x = jax.random.normal(ks[0], (B, 1, H, W), dtype=jnp.float32)

    params = {
        # conv weights stored PyTorch-style (Cout, Cin, kh, kw)
        "w1": 0.10 * jax.random.normal(ks[1], (32, 1, 3, 3), dtype=jnp.float32),
        "b1": 0.10 * jax.random.normal(ks[2], (32,), dtype=jnp.float32),
        "w2": 0.10 * jax.random.normal(ks[3], (64, 32, 3, 3), dtype=jnp.float32),
        "b2": 0.10 * jax.random.normal(ks[4], (64,), dtype=jnp.float32),
        # fc weights stored already transposed: (in_features, out_features)
        "fc1_w": 0.05 * jax.random.normal(ks[5], (64 * 5 * 5, 128), dtype=jnp.float32),
        "fc1_b": 0.05 * jax.random.normal(ks[6], (128,), dtype=jnp.float32),
        "fc2_w": 0.05 * jax.random.normal(ks[7], (128, 10), dtype=jnp.float32),
        "fc2_b": 0.05 * jax.random.normal(ks[8], (10,), dtype=jnp.float32),
    }

    prep = prepare_params(params)          # one-time layout conversion
    out = jax.block_until_ready(ssl_net_forward(x, prep))
    assert out.shape == (B, 10), out.shape

    ref = jax.block_until_ready(ref_forward(x, params))
    # bf16 matmul operands (f32 accumulation) -> loosened tolerance vs f32 ref.
    assert jnp.allclose(out, ref, atol=2e-2, rtol=2e-2), (
        float(jnp.max(jnp.abs(out - ref))))

    print("KERNEL_OK")
</pallas_src>

<mosaic_0001>
module attributes {stable_mosaic.version = 11 : i64} {
  func.func @_sslnet_kernel(%arg0: memref<82x32xf32, #tpu.memory_space<vmem>>, %arg1: memref<9x50x32xf32, #tpu.memory_space<vmem>>, %arg2: memref<9x1x32xf32, #tpu.memory_space<vmem>>, %arg3: memref<1x32xf32, #tpu.memory_space<vmem>>, %arg4: memref<288x64xbf16, #tpu.memory_space<vmem>>, %arg5: memref<1x64xf32, #tpu.memory_space<vmem>>, %arg6: memref<1600x128xbf16, #tpu.memory_space<vmem>>, %arg7: memref<1x128xf32, #tpu.memory_space<vmem>>, %arg8: memref<128x128xbf16, #tpu.memory_space<vmem>>, %arg9: memref<1x128xf32, #tpu.memory_space<vmem>>, %arg10: memref<2x128xf32, #tpu.memory_space<vmem>>, %arg11: memref<82x32xf32, #tpu.memory_space<vmem>>, %arg12: memref<50x288xf32, #tpu.memory_space<vmem>>, %arg13: memref<50x64xf32, #tpu.memory_space<vmem>>, %arg14: memref<2x1600xf32, #tpu.memory_space<vmem>>) attributes {dimension_semantics = [], scalar_prefetch = 0 : i64, scratch_operands = 4 : i64, tpu.core_type = #tpu.core_type<tc>} {
    %cst = arith.constant 0.000000e+00 : f32
    %0 = vector.broadcast %cst : f32 to vector<50x32xf32>
    %c4 = arith.constant 4 : index
    %c0 = arith.constant 0 : index
    %1 = vector.load %arg0[%c4, %c0] : memref<82x32xf32, #tpu.memory_space<vmem>>, vector<50x32xf32>
    %c0_0 = arith.constant 0 : index
    %c0_1 = arith.constant 0 : index
    %c0_2 = arith.constant 0 : index
    %2 = vector.load %arg1[%c0_0, %c0_1, %c0_2] : memref<9x50x32xf32, #tpu.memory_space<vmem>>, vector<1x50x32xf32>
    %3 = vector.shape_cast %2 : vector<1x50x32xf32> to vector<50x32xf32>
    %4 = arith.mulf %3, %1 : vector<50x32xf32>
    %c0_3 = arith.constant 0 : index
    %c0_4 = arith.constant 0 : index
    %c0_5 = arith.constant 0 : index
    %5 = vector.load %arg2[%c0_3, %c0_4, %c0_5] : memref<9x1x32xf32, #tpu.memory_space<vmem>>, vector<1x1x32xf32>
    %6 = vector.shape_cast %5 : vector<1x1x32xf32> to vector<1x32xf32>
    %7 = vector.broadcast %6 : vector<1x32xf32> to vector<50x32xf32>
    %8 = arith.mulf %4, %7 : vector<50x32xf32>
    %9 = arith.addf %0, %8 : vector<50x32xf32>
    %c6 = arith.constant 6 : index
    %c0_6 = arith.constant 0 : index
    %10 = vector.load %arg0[%c6, %c0_6] : memref<82x32xf32, #tpu.memory_space<vmem>>, vector<50x32xf32>
    %c1 = arith.constant 1 : index
    %c0_7 = arith.constant 0 : index
    %c0_8 = arith.constant 0 : index
    %11 = vector.load %arg1[%c1, %c0_7, %c0_8] : memref<9x50x32xf32, #tpu.memory_space<vmem>>, vector<1x50x32xf32>
    %12 = vector.shape_cast %11 : vector<1x50x32xf32> to vector<50x32xf32>
    %13 = arith.mulf %12, %10 : vector<50x32xf32>
    %c1_9 = arith.constant 1 : index
    %c0_10 = arith.constant 0 : index
    %c0_11 = arith.constant 0 : index
    %14 = vector.load %arg2[%c1_9, %c0_10, %c0_11] : memref<9x1x32xf32, #tpu.memory_space<vmem>>, vector<1x1x32xf32>
    %15 = vector.shape_cast %14 : vector<1x1x32xf32> to vector<1x32xf32>
    %16 = vector.broadcast %15 : vector<1x32xf32> to vector<50x32xf32>
    %17 = arith.mulf %13, %16 : vector<50x32xf32>
    %18 = arith.addf %9, %17 : vector<50x32xf32>
    %c8 = arith.constant 8 : index
    %c0_12 = arith.constant 0 : index
    %19 = vector.load %arg0[%c8, %c0_12] : memref<82x32xf32, #tpu.memory_space<vmem>>, vector<50x32xf32>
    %c2 = arith.constant 2 : index
    %c0_13 = arith.constant 0 : index
    %c0_14 = arith.constant 0 : index
    %20 = vector.load %arg1[%c2, %c0_13, %c0_14] : memref<9x50x32xf32, #tpu.memory_space<vmem>>, vector<1x50x32xf32>
    %21 = vector.shape_cast %20 : vector<1x50x32xf32> to vector<50x32xf32>
    %22 = arith.mulf %21, %19 : vector<50x32xf32>
    %c2_15 = arith.constant 2 : index
    %c0_16 = arith.constant 0 : index
    %c0_17 = arith.constant 0 : index
    %23 = vector.load %arg2[%c2_15, %c0_16, %c0_17] : memref<9x1x32xf32, #tpu.memory_space<vmem>>, vector<1x1x32xf32>
    %24 = vector.shape_cast %23 : vector<1x1x32xf32> to vector<1x32xf32>
    %25 = vector.broadcast %24 : vector<1x32xf32> to vector<50x32xf32>
    %26 = arith.mulf %22, %25 : vector<50x32xf32>
    %27 = arith.addf %18, %26 : vector<50x32xf32>
    %c14 = arith.constant 14 : index
    %c0_18 = arith.constant 0 : index
    %28 = vector.load %arg0[%c14, %c0_18] : memref<82x32xf32, #tpu.memory_space<vmem>>, vector<50x32xf32>
    %c3 = arith.constant 3 : index
    %c0_19 = arith.constant 0 : index
    %c0_20 = arith.constant 0 : index
    %29 = vector.load %arg1[%c3, %c0_19, %c0_20] : memref<9x50x32xf32, #tpu.memory_space<vmem>>, vector<1x50x32xf32>
    %30 = vector.shape_cast %29 : vector<1x50x32xf32> to vector<50x32xf32>
    %31 = arith.mulf %30, %28 : vector<50x32xf32>
    %c3_21 = arith.constant 3 : index
    %c0_22 = arith.constant 0 : index
    %c0_23 = arith.constant 0 : index
    %32 = vector.load %arg2[%c3_21, %c0_22, %c0_23] : memref<9x1x32xf32, #tpu.memory_space<vmem>>, vector<1x1x32xf32>
    %33 = vector.shape_cast %32 : vector<1x1x32xf32> to vector<1x32xf32>
    %34 = vector.broadcast %33 : vector<1x32xf32> to vector<50x32xf32>
    %35 = arith.mulf %31, %34 : vector<50x32xf32>
    %36 = arith.addf %27, %35 : vector<50x32xf32>
    %c16 = arith.constant 16 : index
    %c0_24 = arith.constant 0 : index
    %37 = vector.load %arg0[%c16, %c0_24] : memref<82x32xf32, #tpu.memory_space<vmem>>, vector<50x32xf32>
    %c4_25 = arith.constant 4 : index
    %c0_26 = arith.constant 0 : index
    %c0_27 = arith.constant 0 : index
    %38 = vector.load %arg1[%c4_25, %c0_26, %c0_27] : memref<9x50x32xf32, #tpu.memory_space<vmem>>, vector<1x50x32xf32>
    %39 = vector.shape_cast %38 : vector<1x50x32xf32> to vector<50x32xf32>
    %40 = arith.mulf %39, %37 : vector<50x32xf32>
    %c4_28 = arith.constant 4 : index
    %c0_29 = arith.constant 0 : index
    %c0_30 = arith.constant 0 : index
    %41 = vector.load %arg2[%c4_28, %c0_29, %c0_30] : memref<9x1x32xf32, #tpu.memory_space<vmem>>, vector<1x1x32xf32>
    %42 = vector.shape_cast %41 : vector<1x1x32xf32> to vector<1x32xf32>
    %43 = vector.broadcast %42 : vector<1x32xf32> to vector<50x32xf32>
    %44 = arith.mulf %40, %43 : vector<50x32xf32>
    %45 = arith.addf %36, %44 : vector<50x32xf32>
    %c18 = arith.constant 18 : index
    %c0_31 = arith.constant 0 : index
    %46 = vector.load %arg0[%c18, %c0_31] : memref<82x32xf32, #tpu.memory_space<vmem>>, vector<50x32xf32>
    %c5 = arith.constant 5 : index
    %c0_32 = arith.constant 0 : index
    %c0_33 = arith.constant 0 : index
    %47 = vector.load %arg1[%c5, %c0_32, %c0_33] : memref<9x50x32xf32, #tpu.memory_space<vmem>>, vector<1x50x32xf32>
    %48 = vector.shape_cast %47 : vector<1x50x32xf32> to vector<50x32xf32>
    %49 = arith.mulf %48, %46 : vector<50x32xf32>
    %c5_34 = arith.constant 5 : index
    %c0_35 = arith.constant 0 : index
    %c0_36 = arith.constant 0 : index
    %50 = vector.load %arg2[%c5_34, %c0_35, %c0_36] : memref<9x1x32xf32, #tpu.memory_space<vmem>>, vector<1x1x32xf32>
    %51 = vector.shape_cast %50 : vector<1x1x32xf32> to vector<1x32xf32>
    %52 = vector.broadcast %51 : vector<1x32xf32> to vector<50x32xf32>
    %53 = arith.mulf %49, %52 : vector<50x32xf32>
    %54 = arith.addf %45, %53 : vector<50x32xf32>
    %c24 = arith.constant 24 : index
    %c0_37 = arith.constant 0 : index
    %55 = vector.load %arg0[%c24, %c0_37] : memref<82x32xf32, #tpu.memory_space<vmem>>, vector<50x32xf32>
    %c6_38 = arith.constant 6 : index
    %c0_39 = arith.constant 0 : index
    %c0_40 = arith.constant 0 : index
    %56 = vector.load %arg1[%c6_38, %c0_39, %c0_40] : memref<9x50x32xf32, #tpu.memory_space<vmem>>, vector<1x50x32xf32>
    %57 = vector.shape_cast %56 : vector<1x50x32xf32> to vector<50x32xf32>
    %58 = arith.mulf %57, %55 : vector<50x32xf32>
    %c6_41 = arith.constant 6 : index
    %c0_42 = arith.constant 0 : index
    %c0_43 = arith.constant 0 : index
    %59 = vector.load %arg2[%c6_41, %c0_42, %c0_43] : memref<9x1x32xf32, #tpu.memory_space<vmem>>, vector<1x1x32xf32>
    %60 = vector.shape_cast %59 : vector<1x1x32xf32> to vector<1x32xf32>
    %61 = vector.broadcast %60 : vector<1x32xf32> to vector<50x32xf32>
    %62 = arith.mulf %58, %61 : vector<50x32xf32>
    %63 = arith.addf %54, %62 : vector<50x32xf32>
    %c26 = arith.constant 26 : index
    %c0_44 = arith.constant 0 : index
    %64 = vector.load %arg0[%c26, %c0_44] : memref<82x32xf32, #tpu.memory_space<vmem>>, vector<50x32xf32>
    %c7 = arith.constant 7 : index
    %c0_45 = arith.constant 0 : index
    %c0_46 = arith.constant 0 : index
    %65 = vector.load %arg1[%c7, %c0_45, %c0_46] : memref<9x50x32xf32, #tpu.memory_space<vmem>>, vector<1x50x32xf32>
    %66 = vector.shape_cast %65 : vector<1x50x32xf32> to vector<50x32xf32>
    %67 = arith.mulf %66, %64 : vector<50x32xf32>
    %c7_47 = arith.constant 7 : index
    %c0_48 = arith.constant 0 : index
    %c0_49 = arith.constant 0 : index
    %68 = vector.load %arg2[%c7_47, %c0_48, %c0_49] : memref<9x1x32xf32, #tpu.memory_space<vmem>>, vector<1x1x32xf32>
    %69 = vector.shape_cast %68 : vector<1x1x32xf32> to vector<1x32xf32>
    %70 = vector.broadcast %69 : vector<1x32xf32> to vector<50x32xf32>
    %71 = arith.mulf %67, %70 : vector<50x32xf32>
    %72 = arith.addf %63, %71 : vector<50x32xf32>
    %c28 = arith.constant 28 : index
    %c0_50 = arith.constant 0 : index
    %73 = vector.load %arg0[%c28, %c0_50] : memref<82x32xf32, #tpu.memory_space<vmem>>, vector<50x32xf32>
    %c8_51 = arith.constant 8 : index
    %c0_52 = arith.constant 0 : index
    %c0_53 = arith.constant 0 : index
    %74 = vector.load %arg1[%c8_51, %c0_52, %c0_53] : memref<9x50x32xf32, #tpu.memory_space<vmem>>, vector<1x50x32xf32>
    %75 = vector.shape_cast %74 : vector<1x50x32xf32> to vector<50x32xf32>
    %76 = arith.mulf %75, %73 : vector<50x32xf32>
    %c8_54 = arith.constant 8 : index
    %c0_55 = arith.constant 0 : index
    %c0_56 = arith.constant 0 : index
    %77 = vector.load %arg2[%c8_54, %c0_55, %c0_56] : memref<9x1x32xf32, #tpu.memory_space<vmem>>, vector<1x1x32xf32>
    %78 = vector.shape_cast %77 : vector<1x1x32xf32> to vector<1x32xf32>
    %79 = vector.broadcast %78 : vector<1x32xf32> to vector<50x32xf32>
    %80 = arith.mulf %76, %79 : vector<50x32xf32>
    %81 = arith.addf %72, %80 : vector<50x32xf32>
    %c0_57 = arith.constant 0 : index
    %c0_58 = arith.constant 0 : index
    %82 = vector.load %arg3[%c0_57, %c0_58] : memref<1x32xf32, #tpu.memory_space<vmem>>, vector<1x32xf32>
    %83 = vector.broadcast %82 : vector<1x32xf32> to vector<50x32xf32>
    %84 = arith.addf %81, %83 : vector<50x32xf32>
    %cst_59 = arith.constant 0.000000e+00 : f32
    %85 = vector.broadcast %cst_59 : f32 to vector<50x32xf32>
    %86 = arith.maximumf %84, %85 : vector<50x32xf32>
    %cst_60 = arith.constant 0.000000e+00 : f32
    %87 = vector.broadcast %cst_60 : f32 to vector<82x32xf32>
    %c0_61 = arith.constant 0 : index
    %c0_62 = arith.constant 0 : index
    %88 = vector.load %arg11[%c0_61, %c0_62] : memref<82x32xf32, #tpu.memory_space<vmem>>, vector<82x32xf32>
    tpu.vector_store %arg11[%c0_61, %c0_62], %87 {strides = array<i32>} : memref<82x32xf32, #tpu.memory_space<vmem>>, vector<82x32xf32>,
    %c16_63 = arith.constant 16 : index
    %c0_64 = arith.constant 0 : index
    %89 = vector.load %arg11[%c16_63, %c0_64] : memref<82x32xf32, #tpu.memory_space<vmem>>, vector<50x32xf32>
    tpu.vector_store %arg11[%c16_63, %c0_64], %86 {strides = array<i32>} : memref<82x32xf32, #tpu.memory_space<vmem>>, vector<50x32xf32>,
    %c4_65 = arith.constant 4 : index
    %c0_66 = arith.constant 0 : index
    %90 = vector.load %arg11[%c4_65, %c0_66] : memref<82x32xf32, #tpu.memory_space<vmem>>, vector<50x32xf32>
    %c0_67 = arith.constant 0 : index
    %c0_68 = arith.constant 0 : index
    %c0_69 = arith.constant 0 : index
    %91 = vector.load %arg1[%c0_67, %c0_68, %c0_69] : memref<9x50x32xf32, #tpu.memory_space<vmem>>, vector<1x50x32xf32>
    %92 = vector.shape_cast %91 : vector<1x50x32xf32> to vector<50x32xf32>
    %93 = arith.mulf %92, %90 : vector<50x32xf32>
    %c0_70 = arith.constant 0 : index
    %c0_71 = arith.constant 0 : index
    %94 = vector.load %arg12[%c0_70, %c0_71] : memref<50x288xf32, #tpu.memory_space<vmem>>, vector<50x32xf32>
    tpu.vector_store %arg12[%c0_70, %c0_71], %93 {strides = array<i32>} : memref<50x288xf32, #tpu.memory_space<vmem>>, vector<50x32xf32>,
    %c6_72 = arith.constant 6 : index
    %c0_73 = arith.constant 0 : index
    %95 = vector.load %arg11[%c6_72, %c0_73] : memref<82x32xf32, #tpu.memory_space<vmem>>, vector<50x32xf32>
    %c1_74 = arith.constant 1 : index
    %c0_75 = arith.constant 0 : index
    %c0_76 = arith.constant 0 : index
    %96 = vector.load %arg1[%c1_74, %c0_75, %c0_76] : memref<9x50x32xf32, #tpu.memory_space<vmem>>, vector<1x50x32xf32>
    %97 = vector.shape_cast %96 : vector<1x50x32xf32> to vector<50x32xf32>
    %98 = arith.mulf %97, %95 : vector<50x32xf32>
    %c0_77 = arith.constant 0 : index
    %c32 = arith.constant 32 : index
    %99 = vector.load %arg12[%c0_77, %c32] : memref<50x288xf32, #tpu.memory_space<vmem>>, vector<50x32xf32>
    tpu.vector_store %arg12[%c0_77, %c32], %98 {strides = array<i32>} : memref<50x288xf32, #tpu.memory_space<vmem>>, vector<50x32xf32>,
    %c8_78 = arith.constant 8 : index
    %c0_79 = arith.constant 0 : index
    %100 = vector.load %arg11[%c8_78, %c0_79] : memref<82x32xf32, #tpu.memory_space<vmem>>, vector<50x32xf32>
    %c2_80 = arith.constant 2 : index
    %c0_81 = arith.constant 0 : index
    %c0_82 = arith.constant 0 : index
    %101 = vector.load %arg1[%c2_80, %c0_81, %c0_82] : memref<9x50x32xf32, #tpu.memory_space<vmem>>, vector<1x50x32xf32>
    %102 = vector.shape_cast %101 : vector<1x50x32xf32> to vector<50x32xf32>
    %103 = arith.mulf %102, %100 : vector<50x32xf32>
    %c0_83 = arith.constant 0 : index
    %c64 = arith.constant 64 : index
    %104 = vector.load %arg12[%c0_83, %c64] : memref<50x288xf32, #tpu.memory_space<vmem>>, vector<50x32xf32>
    tpu.vector_store %arg12[%c0_83, %c64], %103 {strides = array<i32>} : memref<50x288xf32, #tpu.memory_space<vmem>>, vector<50x32xf32>,
    %c14_84 = arith.constant 14 : index
    %c0_85 = arith.constant 0 : index
    %105 = vector.load %arg11[%c14_84, %c0_85] : memref<82x32xf32, #tpu.memory_space<vmem>>, vector<50x32xf32>
    %c3_86 = arith.constant 3 : index
    %c0_87 = arith.constant 0 : index
    %c0_88 = arith.constant 0 : index
    %106 = vector.load %arg1[%c3_86, %c0_87, %c0_88] : memref<9x50x32xf32, #tpu.memory_space<vmem>>, vector<1x50x32xf32>
    %107 = vector.shape_cast %106 : vector<1x50x32xf32> to vector<50x32xf32>
    %108 = arith.mulf %107, %105 : vector<50x32xf32>
    %c0_89 = arith.constant 0 : index
    %c96 = arith.constant 96 : index
    %109 = vector.load %arg12[%c0_89, %c96] : memref<50x288xf32, #tpu.memory_space<vmem>>, vector<50x32xf32>
    tpu.vector_store %arg12[%c0_89, %c96], %108 {strides = array<i32>} : memref<50x288xf32, #tpu.memory_space<vmem>>, vector<50x32xf32>,
    %c16_90 = arith.constant 16 : index
    %c0_91 = arith.constant 0 : index
    %110 = vector.load %arg11[%c16_90, %c0_91] : memref<82x32xf32, #tpu.memory_space<vmem>>, vector<50x32xf32>
    %c4_92 = arith.constant 4 : index
    %c0_93 = arith.constant 0 : index
    %c0_94 = arith.constant 0 : index
    %111 = vector.load %arg1[%c4_92, %c0_93, %c0_94] : memref<9x50x32xf32, #tpu.memory_space<vmem>>, vector<1x50x32xf32>
    %112 = vector.shape_cast %111 : vector<1x50x32xf32> to vector<50x32xf32>
    %113 = arith.mulf %112, %110 : vector<50x32xf32>
    %c0_95 = arith.constant 0 : index
    %c128 = arith.constant 128 : index
    %114 = vector.load %arg12[%c0_95, %c128] : memref<50x288xf32, #tpu.memory_space<vmem>>, vector<50x32xf32>
    tpu.vector_store %arg12[%c0_95, %c128], %113 {strides = array<i32>} : memref<50x288xf32, #tpu.memory_space<vmem>>, vector<50x32xf32>,
    %c18_96 = arith.constant 18 : index
    %c0_97 = arith.constant 0 : index
    %115 = vector.load %arg11[%c18_96, %c0_97] : memref<82x32xf32, #tpu.memory_space<vmem>>, vector<50x32xf32>
    %c5_98 = arith.constant 5 : index
    %c0_99 = arith.constant 0 : index
    %c0_100 = arith.constant 0 : index
    %116 = vector.load %arg1[%c5_98, %c0_99, %c0_100] : memref<9x50x32xf32, #tpu.memory_space<vmem>>, vector<1x50x32xf32>
    %117 = vector.shape_cast %116 : vector<1x50x32xf32> to vector<50x32xf32>
    %118 = arith.mulf %117, %115 : vector<50x32xf32>
    %c0_101 = arith.constant 0 : index
    %c160 = arith.constant 160 : index
    %119 = vector.load %arg12[%c0_101, %c160] : memref<50x288xf32, #tpu.memory_space<vmem>>, vector<50x32xf32>
    tpu.vector_store %arg12[%c0_101, %c160], %118 {strides = array<i32>} : memref<50x288xf32, #tpu.memory_space<vmem>>, vector<50x32xf32>,
    %c24_102 = arith.constant 24 : index
    %c0_103 = arith.constant 0 : index
    %120 = vector.load %arg11[%c24_102, %c0_103] : memref<82x32xf32, #tpu.memory_space<vmem>>, vector<50x32xf32>
    %c6_104 = arith.constant 6 : index
    %c0_105 = arith.constant 0 : index
    %c0_106 = arith.constant 0 : index
    %121 = vector.load %arg1[%c6_104, %c0_105, %c0_106] : memref<9x50x32xf32, #tpu.memory_space<vmem>>, vector<1x50x32xf32>
    %122 = vector.shape_cast %121 : vector<1x50x32xf32> to vector<50x32xf32>
    %123 = arith.mulf %122, %120 : vector<50x32xf32>
    %c0_107 = arith.constant 0 : index
    %c192 = arith.constant 192 : index
    %124 = vector.load %arg12[%c0_107, %c192] : memref<50x288xf32, #tpu.memory_space<vmem>>, vector<50x32xf32>
    tpu.vector_store %arg12[%c0_107, %c192], %123 {strides = array<i32>} : memref<50x288xf32, #tpu.memory_space<vmem>>, vector<50x32xf32>,
    %c26_108 = arith.constant 26 : index
    %c0_109 = arith.constant 0 : index
    %125 = vector.load %arg11[%c26_108, %c0_109] : memref<82x32xf32, #tpu.memory_space<vmem>>, vector<50x32xf32>
    %c7_110 = arith.constant 7 : index
    %c0_111 = arith.constant 0 : index
    %c0_112 = arith.constant 0 : index
    %126 = vector.load %arg1[%c7_110, %c0_111, %c0_112] : memref<9x50x32xf32, #tpu.memory_space<vmem>>, vector<1x50x32xf32>
    %127 = vector.shape_cast %126 : vector<1x50x32xf32> to vector<50x32xf32>
    %128 = arith.mulf %127, %125 : vector<50x32xf32>
    %c0_113 = arith.constant 0 : index
    %c224 = arith.constant 224 : index
    %129 = vector.load %arg12[%c0_113, %c224] : memref<50x288xf32, #tpu.memory_space<vmem>>, vector<50x32xf32>
    tpu.vector_store %arg12[%c0_113, %c224], %128 {strides = array<i32>} : memref<50x288xf32, #tpu.memory_space<vmem>>, vector<50x32xf32>,
    %c28_114 = arith.constant 28 : index
    %c0_115 = arith.constant 0 : index
    %130 = vector.load %arg11[%c28_114, %c0_115] : memref<82x32xf32, #tpu.memory_space<vmem>>, vector<50x32xf32>
    %c8_116 = arith.constant 8 : index
    %c0_117 = arith.constant 0 : index
    %c0_118 = arith.constant 0 : index
    %131 = vector.load %arg1[%c8_116, %c0_117, %c0_118] : memref<9x50x32xf32, #tpu.memory_space<vmem>>, vector<1x50x32xf32>
    %132 = vector.shape_cast %131 : vector<1x50x32xf32> to vector<50x32xf32>
    %133 = arith.mulf %132, %130 : vector<50x32xf32>
    %c0_119 = arith.constant 0 : index
    %c256 = arith.constant 256 : index
    %134 = vector.load %arg12[%c0_119, %c256] : memref<50x288xf32, #tpu.memory_space<vmem>>, vector<50x32xf32>
    tpu.vector_store %arg12[%c0_119, %c256], %133 {strides = array<i32>} : memref<50x288xf32, #tpu.memory_space<vmem>>, vector<50x32xf32>,
    %c0_120 = arith.constant 0 : index
    %c0_121 = arith.constant 0 : index
    %135 = vector.load %arg12[%c0_120, %c0_121] : memref<50x288xf32, #tpu.memory_space<vmem>>, vector<50x288xf32>
    %136 = arith.truncf %135 : vector<50x288xf32> to vector<50x288xbf16>
    %c0_122 = arith.constant 0 : index
    %c0_123 = arith.constant 0 : index
    %137 = vector.load %arg4[%c0_122, %c0_123] : memref<288x64xbf16, #tpu.memory_space<vmem>>, vector<288x64xbf16>
    %cst_124 = arith.constant dense<0.000000e+00> : vector<50x64xf32>
    %138 = tpu.matmul %136, %137, %cst_124 {dimension_numbers = #tpu.dot_dimension_numbers<[1], [0], [0], [1], [0, 0, 1, 1], [], []>} : vector<50x288xbf16>, vector<288x64xbf16>, vector<50x64xf32> -> vector<50x64xf32>
    %c0_125 = arith.constant 0 : index
    %c0_126 = arith.constant 0 : index
    %139 = vector.load %arg5[%c0_125, %c0_126] : memref<1x64xf32, #tpu.memory_space<vmem>>, vector<1x64xf32>
    %140 = vector.broadcast %139 : vector<1x64xf32> to vector<50x64xf32>
    %141 = arith.addf %138, %140 : vector<50x64xf32>
    %cst_127 = arith.constant 0.000000e+00 : f32
    %142 = vector.broadcast %cst_127 : f32 to vector<50x64xf32>
    %143 = arith.maximumf %141, %142 : vector<50x64xf32>
    %c0_128 = arith.constant 0 : index
    %c0_129 = arith.constant 0 : index
    %144 = vector.load %arg13[%c0_128, %c0_129] : memref<50x64xf32, #tpu.memory_space<vmem>>, vector<50x64xf32>
    tpu.vector_store %arg13[%c0_128, %c0_129], %143 {strides = array<i32>} : memref<50x64xf32, #tpu.memory_space<vmem>>, vector<50x64xf32>,
    %c0_130 = arith.constant 0 : index
    %c0_131 = arith.constant 0 : index
    %145 = vector.load %arg13[%c0_130, %c0_131] : memref<50x64xf32, #tpu.memory_space<vmem>>, vector<2x64xf32>
    %c0_132 = arith.constant 0 : index
    %c0_133 = arith.constant 0 : index
    %146 = vector.load %arg14[%c0_132, %c0_133] : memref<2x1600xf32, #tpu.memory_space<vmem>>, vector<2x64xf32>
    tpu.vector_store %arg14[%c0_132, %c0_133], %145 {strides = array<i32>} : memref<2x1600xf32, #tpu.memory_space<vmem>>, vector<2x64xf32>,
    %c2_134 = arith.constant 2 : index
    %c0_135 = arith.constant 0 : index
    %147 = vector.load %arg13[%c2_134, %c0_135] : memref<50x64xf32, #tpu.memory_space<vmem>>, vector<2x64xf32>
    %c0_136 = arith.constant 0 : index
    %c64_137 = arith.constant 64 : index
    %148 = vector.load %arg14[%c0_136, %c64_137] : memref<2x1600xf32, #tpu.memory_space<vmem>>, vector<2x64xf32>
    tpu.vector_store %arg14[%c0_136, %c64_137], %147 {strides = array<i32>} : memref<2x1600xf32, #tpu.memory_space<vmem>>, vector<2x64xf32>,
    %c4_138 = arith.constant 4 : index
    %c0_139 = arith.constant 0 : index
    %149 = vector.load %arg13[%c4_138, %c0_139] : memref<50x64xf32, #tpu.memory_space<vmem>>, vector<2x64xf32>
    %c0_140 = arith.constant 0 : index
    %c128_141 = arith.constant 128 : index
    %150 = vector.load %arg14[%c0_140, %c128_141] : memref<2x1600xf32, #tpu.memory_space<vmem>>, vector<2x64xf32>
    tpu.vector_store %arg14[%c0_140, %c128_141], %149 {strides = array<i32>} : memref<2x1600xf32, #tpu.memory_space<vmem>>, vector<2x64xf32>,
    %c6_142 = arith.constant 6 : index
    %c0_143 = arith.constant 0 : index
    %151 = vector.load %arg13[%c6_142, %c0_143] : memref<50x64xf32, #tpu.memory_space<vmem>>, vector<2x64xf32>
    %c0_144 = arith.constant 0 : index
    %c192_145 = arith.constant 192 : index
    %152 = vector.load %arg14[%c0_144, %c192_145] : memref<2x1600xf32, #tpu.memory_space<vmem>>, vector<2x64xf32>
    tpu.vector_store %arg14[%c0_144, %c192_145], %151 {strides = array<i32>} : memref<2x1600xf32, #tpu.memory_space<vmem>>, vector<2x64xf32>,
    %c8_146 = arith.constant 8 : index
    %c0_147 = arith.constant 0 : index
    %153 = vector.load %arg13[%c8_146, %c0_147] : memref<50x64xf32, #tpu.memory_space<vmem>>, vector<2x64xf32>
    %c0_148 = arith.constant 0 : index
    %c256_149 = arith.constant 256 : index
    %154 = vector.load %arg14[%c0_148, %c256_149] : memref<2x1600xf32, #tpu.memory_space<vmem>>, vector<2x64xf32>
    tpu.vector_store %arg14[%c0_148, %c256_149], %153 {strides = array<i32>} : memref<2x1600xf32, #tpu.memory_space<vmem>>, vector<2x64xf32>,
    %c10 = arith.constant 10 : index
    %c0_150 = arith.constant 0 : index
    %155 = vector.load %arg13[%c10, %c0_150] : memref<50x64xf32, #tpu.memory_space<vmem>>, vector<2x64xf32>
    %c0_151 = arith.constant 0 : index
    %c320 = arith.constant 320 : index
    %156 = vector.load %arg14[%c0_151, %c320] : memref<2x1600xf32, #tpu.memory_space<vmem>>, vector<2x64xf32>
    tpu.vector_store %arg14[%c0_151, %c320], %155 {strides = array<i32>} : memref<2x1600xf32, #tpu.memory_space<vmem>>, vector<2x64xf32>,
    %c12 = arith.constant 12 : index
    %c0_152 = arith.constant 0 : index
    %157 = vector.load %arg13[%c12, %c0_152] : memref<50x64xf32, #tpu.memory_space<vmem>>, vector<2x64xf32>
    %c0_153 = arith.constant 0 : index
    %c384 = arith.constant 384 : index
    %158 = vector.load %arg14[%c0_153, %c384] : memref<2x1600xf32, #tpu.memory_space<vmem>>, vector<2x64xf32>
    tpu.vector_store %arg14[%c0_153, %c384], %157 {strides = array<i32>} : memref<2x1600xf32, #tpu.memory_space<vmem>>, vector<2x64xf32>,
    %c14_154 = arith.constant 14 : index
    %c0_155 = arith.constant 0 : index
    %159 = vector.load %arg13[%c14_154, %c0_155] : memref<50x64xf32, #tpu.memory_space<vmem>>, vector<2x64xf32>
    %c0_156 = arith.constant 0 : index
    %c448 = arith.constant 448 : index
    %160 = vector.load %arg14[%c0_156, %c448] : memref<2x1600xf32, #tpu.memory_space<vmem>>, vector<2x64xf32>
    tpu.vector_store %arg14[%c0_156, %c448], %159 {strides = array<i32>} : memref<2x1600xf32, #tpu.memory_space<vmem>>, vector<2x64xf32>,
    %c16_157 = arith.constant 16 : index
    %c0_158 = arith.constant 0 : index
    %161 = vector.load %arg13[%c16_157, %c0_158] : memref<50x64xf32, #tpu.memory_space<vmem>>, vector<2x64xf32>
    %c0_159 = arith.constant 0 : index
    %c512 = arith.constant 512 : index
    %162 = vector.load %arg14[%c0_159, %c512] : memref<2x1600xf32, #tpu.memory_space<vmem>>, vector<2x64xf32>
    tpu.vector_store %arg14[%c0_159, %c512], %161 {strides = array<i32>} : memref<2x1600xf32, #tpu.memory_space<vmem>>, vector<2x64xf32>,
    %c18_160 = arith.constant 18 : index
    %c0_161 = arith.constant 0 : index
    %163 = vector.load %arg13[%c18_160, %c0_161] : memref<50x64xf32, #tpu.memory_space<vmem>>, vector<2x64xf32>
    %c0_162 = arith.constant 0 : index
    %c576 = arith.constant 576 : index
    %164 = vector.load %arg14[%c0_162, %c576] : memref<2x1600xf32, #tpu.memory_space<vmem>>, vector<2x64xf32>
    tpu.vector_store %arg14[%c0_162, %c576], %163 {strides = array<i32>} : memref<2x1600xf32, #tpu.memory_space<vmem>>, vector<2x64xf32>,
    %c20 = arith.constant 20 : index
    %c0_163 = arith.constant 0 : index
    %165 = vector.load %arg13[%c20, %c0_163] : memref<50x64xf32, #tpu.memory_space<vmem>>, vector<2x64xf32>
    %c0_164 = arith.constant 0 : index
    %c640 = arith.constant 640 : index
    %166 = vector.load %arg14[%c0_164, %c640] : memref<2x1600xf32, #tpu.memory_space<vmem>>, vector<2x64xf32>
    tpu.vector_store %arg14[%c0_164, %c640], %165 {strides = array<i32>} : memref<2x1600xf32, #tpu.memory_space<vmem>>, vector<2x64xf32>,
    %c22 = arith.constant 22 : index
    %c0_165 = arith.constant 0 : index
    %167 = vector.load %arg13[%c22, %c0_165] : memref<50x64xf32, #tpu.memory_space<vmem>>, vector<2x64xf32>
    %c0_166 = arith.constant 0 : index
    %c704 = arith.constant 704 : index
    %168 = vector.load %arg14[%c0_166, %c704] : memref<2x1600xf32, #tpu.memory_space<vmem>>, vector<2x64xf32>
    tpu.vector_store %arg14[%c0_166, %c704], %167 {strides = array<i32>} : memref<2x1600xf32, #tpu.memory_space<vmem>>, vector<2x64xf32>,
    %c24_167 = arith.constant 24 : index
    %c0_168 = arith.constant 0 : index
    %169 = vector.load %arg13[%c24_167, %c0_168] : memref<50x64xf32, #tpu.memory_space<vmem>>, vector<2x64xf32>
    %c0_169 = arith.constant 0 : index
    %c768 = arith.constant 768 : index
    %170 = vector.load %arg14[%c0_169, %c768] : memref<2x1600xf32, #tpu.memory_space<vmem>>, vector<2x64xf32>
    tpu.vector_store %arg14[%c0_169, %c768], %169 {strides = array<i32>} : memref<2x1600xf32, #tpu.memory_space<vmem>>, vector<2x64xf32>,
    %c26_170 = arith.constant 26 : index
    %c0_171 = arith.constant 0 : index
    %171 = vector.load %arg13[%c26_170, %c0_171] : memref<50x64xf32, #tpu.memory_space<vmem>>, vector<2x64xf32>
    %c0_172 = arith.constant 0 : index
    %c832 = arith.constant 832 : index
    %172 = vector.load %arg14[%c0_172, %c832] : memref<2x1600xf32, #tpu.memory_space<vmem>>, vector<2x64xf32>
    tpu.vector_store %arg14[%c0_172, %c832], %171 {strides = array<i32>} : memref<2x1600xf32, #tpu.memory_space<vmem>>, vector<2x64xf32>,
    %c28_173 = arith.constant 28 : index
    %c0_174 = arith.constant 0 : index
    %173 = vector.load %arg13[%c28_173, %c0_174] : memref<50x64xf32, #tpu.memory_space<vmem>>, vector<2x64xf32>
    %c0_175 = arith.constant 0 : index
    %c896 = arith.constant 896 : index
    %174 = vector.load %arg14[%c0_175, %c896] : memref<2x1600xf32, #tpu.memory_space<vmem>>, vector<2x64xf32>
    tpu.vector_store %arg14[%c0_175, %c896], %173 {strides = array<i32>} : memref<2x1600xf32, #tpu.memory_space<vmem>>, vector<2x64xf32>,
    %c30 = arith.constant 30 : index
    %c0_176 = arith.constant 0 : index
    %175 = vector.load %arg13[%c30, %c0_176] : memref<50x64xf32, #tpu.memory_space<vmem>>, vector<2x64xf32>
    %c0_177 = arith.constant 0 : index
    %c960 = arith.constant 960 : index
    %176 = vector.load %arg14[%c0_177, %c960] : memref<2x1600xf32, #tpu.memory_space<vmem>>, vector<2x64xf32>
    tpu.vector_store %arg14[%c0_177, %c960], %175 {strides = array<i32>} : memref<2x1600xf32, #tpu.memory_space<vmem>>, vector<2x64xf32>,
    %c32_178 = arith.constant 32 : index
    %c0_179 = arith.constant 0 : index
    %177 = vector.load %arg13[%c32_178, %c0_179] : memref<50x64xf32, #tpu.memory_space<vmem>>, vector<2x64xf32>
    %c0_180 = arith.constant 0 : index
    %c1024 = arith.constant 1024 : index
    %178 = vector.load %arg14[%c0_180, %c1024] : memref<2x1600xf32, #tpu.memory_space<vmem>>, vector<2x64xf32>
    tpu.vector_store %arg14[%c0_180, %c1024], %177 {strides = array<i32>} : memref<2x1600xf32, #tpu.memory_space<vmem>>, vector<2x64xf32>,
    %c34 = arith.constant 34 : index
    %c0_181 = arith.constant 0 : index
    %179 = vector.load %arg13[%c34, %c0_181] : memref<50x64xf32, #tpu.memory_space<vmem>>, vector<2x64xf32>
    %c0_182 = arith.constant 0 : index
    %c1088 = arith.constant 1088 : index
    %180 = vector.load %arg14[%c0_182, %c1088] : memref<2x1600xf32, #tpu.memory_space<vmem>>, vector<2x64xf32>
    tpu.vector_store %arg14[%c0_182, %c1088], %179 {strides = array<i32>} : memref<2x1600xf32, #tpu.memory_space<vmem>>, vector<2x64xf32>,
    %c36 = arith.constant 36 : index
    %c0_183 = arith.constant 0 : index
    %181 = vector.load %arg13[%c36, %c0_183] : memref<50x64xf32, #tpu.memory_space<vmem>>, vector<2x64xf32>
    %c0_184 = arith.constant 0 : index
    %c1152 = arith.constant 1152 : index
    %182 = vector.load %arg14[%c0_184, %c1152] : memref<2x1600xf32, #tpu.memory_space<vmem>>, vector<2x64xf32>
    tpu.vector_store %arg14[%c0_184, %c1152], %181 {strides = array<i32>} : memref<2x1600xf32, #tpu.memory_space<vmem>>, vector<2x64xf32>,
    %c38 = arith.constant 38 : index
    %c0_185 = arith.constant 0 : index
    %183 = vector.load %arg13[%c38, %c0_185] : memref<50x64xf32, #tpu.memory_space<vmem>>, vector<2x64xf32>
    %c0_186 = arith.constant 0 : index
    %c1216 = arith.constant 1216 : index
    %184 = vector.load %arg14[%c0_186, %c1216] : memref<2x1600xf32, #tpu.memory_space<vmem>>, vector<2x64xf32>
    tpu.vector_store %arg14[%c0_186, %c1216], %183 {strides = array<i32>} : memref<2x1600xf32, #tpu.memory_space<vmem>>, vector<2x64xf32>,
    %c40 = arith.constant 40 : index
    %c0_187 = arith.constant 0 : index
    %185 = vector.load %arg13[%c40, %c0_187] : memref<50x64xf32, #tpu.memory_space<vmem>>, vector<2x64xf32>
    %c0_188 = arith.constant 0 : index
    %c1280 = arith.constant 1280 : index
    %186 = vector.load %arg14[%c0_188, %c1280] : memref<2x1600xf32, #tpu.memory_space<vmem>>, vector<2x64xf32>
    tpu.vector_store %arg14[%c0_188, %c1280], %185 {strides = array<i32>} : memref<2x1600xf32, #tpu.memory_space<vmem>>, vector<2x64xf32>,
    %c42 = arith.constant 42 : index
    %c0_189 = arith.constant 0 : index
    %187 = vector.load %arg13[%c42, %c0_189] : memref<50x64xf32, #tpu.memory_space<vmem>>, vector<2x64xf32>
    %c0_190 = arith.constant 0 : index
    %c1344 = arith.constant 1344 : index
    %188 = vector.load %arg14[%c0_190, %c1344] : memref<2x1600xf32, #tpu.memory_space<vmem>>, vector<2x64xf32>
    tpu.vector_store %arg14[%c0_190, %c1344], %187 {strides = array<i32>} : memref<2x1600xf32, #tpu.memory_space<vmem>>, vector<2x64xf32>,
    %c44 = arith.constant 44 : index
    %c0_191 = arith.constant 0 : index
    %189 = vector.load %arg13[%c44, %c0_191] : memref<50x64xf32, #tpu.memory_space<vmem>>, vector<2x64xf32>
    %c0_192 = arith.constant 0 : index
    %c1408 = arith.constant 1408 : index
    %190 = vector.load %arg14[%c0_192, %c1408] : memref<2x1600xf32, #tpu.memory_space<vmem>>, vector<2x64xf32>
    tpu.vector_store %arg14[%c0_192, %c1408], %189 {strides = array<i32>} : memref<2x1600xf32, #tpu.memory_space<vmem>>, vector<2x64xf32>,
    %c46 = arith.constant 46 : index
    %c0_193 = arith.constant 0 : index
    %191 = vector.load %arg13[%c46, %c0_193] : memref<50x64xf32, #tpu.memory_space<vmem>>, vector<2x64xf32>
    %c0_194 = arith.constant 0 : index
    %c1472 = arith.constant 1472 : index
    %192 = vector.load %arg14[%c0_194, %c1472] : memref<2x1600xf32, #tpu.memory_space<vmem>>, vector<2x64xf32>
    tpu.vector_store %arg14[%c0_194, %c1472], %191 {strides = array<i32>} : memref<2x1600xf32, #tpu.memory_space<vmem>>, vector<2x64xf32>,
    %c48 = arith.constant 48 : index
    %c0_195 = arith.constant 0 : index
    %193 = vector.load %arg13[%c48, %c0_195] : memref<50x64xf32, #tpu.memory_space<vmem>>, vector<2x64xf32>
    %c0_196 = arith.constant 0 : index
    %c1536 = arith.constant 1536 : index
    %194 = vector.load %arg14[%c0_196, %c1536] : memref<2x1600xf32, #tpu.memory_space<vmem>>, vector<2x64xf32>
    tpu.vector_store %arg14[%c0_196, %c1536], %193 {strides = array<i32>} : memref<2x1600xf32, #tpu.memory_space<vmem>>, vector<2x64xf32>,
    %c0_197 = arith.constant 0 : index
    %c0_198 = arith.constant 0 : index
    %195 = vector.load %arg14[%c0_197, %c0_198] : memref<2x1600xf32, #tpu.memory_space<vmem>>, vector<2x1600xf32>
    %196 = arith.truncf %195 : vector<2x1600xf32> to vector<2x1600xbf16>
    %c0_199 = arith.constant 0 : index
    %c0_200 = arith.constant 0 : index
    %197 = vector.load %arg6[%c0_199, %c0_200] : memref<1600x128xbf16, #tpu.memory_space<vmem>>, vector<1600x128xbf16>
    %cst_201 = arith.constant dense<0.000000e+00> : vector<2x128xf32>
    %198 = tpu.matmul %196, %197, %cst_201 {dimension_numbers = #tpu.dot_dimension_numbers<[1], [0], [0], [1], [0, 0, 1, 1], [], []>} : vector<2x1600xbf16>, vector<1600x128xbf16>, vector<2x128xf32> -> vector<2x128xf32>
    %c0_202 = arith.constant 0 : index
    %c0_203 = arith.constant 0 : index
    %199 = vector.load %arg7[%c0_202, %c0_203] : memref<1x128xf32, #tpu.memory_space<vmem>>, vector<1x128xf32>
    %200 = vector.broadcast %199 : vector<1x128xf32> to vector<2x128xf32>
    %201 = arith.addf %198, %200 : vector<2x128xf32>
    %cst_204 = arith.constant 0.000000e+00 : f32
    %202 = vector.broadcast %cst_204 : f32 to vector<2x128xf32>
    %203 = arith.maximumf %201, %202 : vector<2x128xf32>
    %204 = arith.truncf %203 : vector<2x128xf32> to vector<2x128xbf16>
    %c0_205 = arith.constant 0 : index
    %c0_206 = arith.constant 0 : index
    %205 = vector.load %arg8[%c0_205, %c0_206] : memref<128x128xbf16, #tpu.memory_space<vmem>>, vector<128x128xbf16>
    %cst_207 = arith.constant dense<0.000000e+00> : vector<2x128xf32>
    %206 = tpu.matmul %204, %205, %cst_207 {dimension_numbers = #tpu.dot_dimension_numbers<[1], [0], [0], [1], [0, 0, 1, 1], [], []>} : vector<2x128xbf16>, vector<128x128xbf16>, vector<2x128xf32> -> vector<2x128xf32>
    %c0_208 = arith.constant 0 : index
    %c0_209 = arith.constant 0 : index
    %207 = vector.load %arg9[%c0_208, %c0_209] : memref<1x128xf32, #tpu.memory_space<vmem>>, vector<1x128xf32>
    %208 = vector.broadcast %207 : vector<1x128xf32> to vector<2x128xf32>
    %209 = arith.addf %206, %208 : vector<2x128xf32>
    %c0_210 = arith.constant 0 : index
    %c0_211 = arith.constant 0 : index
    %210 = vector.load %arg10[%c0_210, %c0_211] : memref<2x128xf32, #tpu.memory_space<vmem>>, vector<2x128xf32>
    tpu.vector_store %arg10[%c0_210, %c0_211], %209 {strides = array<i32>} : memref<2x128xf32, #tpu.memory_space<vmem>>, vector<2x128xf32>,
    return
  }
}

</mosaic_0001>

<llo_original>
// kernel: ssl_net_forward.1
$region0: #{ssl_net_forward.1}
  #allocation0 [shape = 'u32[]', space=smem, size = 0x4, offset = 0x4, fixed_abs, tag = 'smem constant byte address 0x4 - core index']
  #allocation1 [shape = 'u32[144,128]{1,0:T(1,128)}', space=vmem, size = 0x12000, scoped, tag = 'internal scratch']
  #allocation2 [shape = 'f32[82,32]{1,0:T(8,128)}', space=vmem, size = 0xb000, scoped, tag = 'scratch operand']
  #allocation3 [shape = 'f32[50,288]{1,0:T(8,128)}', space=vmem, size = 0x15000, scoped, tag = 'scratch operand']
  #allocation4 [shape = 'f32[50,64]{1,0:T(8,128)}', space=vmem, size = 0x7000, scoped, tag = 'scratch operand']
  #allocation5 [shape = 'f32[2,1600]{1,0:T(2,128)}', space=vmem, size = 0x3400, scoped, tag = 'scratch operand']
  %s0 = inlined_call_operand.vmem [shape: f32[82,32], index: 0, kind: input, shape index: {}]
  %s1 = inlined_call_operand.hbm [shape: f32[9,50,32], index: 1, kind: input, shape index: {}]
  %s2 = inlined_call_operand.vmem [shape: f32[9,1,32], index: 2, kind: input, shape index: {}]
  %s3 = inlined_call_operand.vmem [shape: f32[1,32], index: 3, kind: input, shape index: {}]
  %s4 = inlined_call_operand.vmem [shape: bf16[288,64], index: 4, kind: input, shape index: {}]
  %s5 = inlined_call_operand.vmem [shape: f32[1,64], index: 5, kind: input, shape index: {}]
  %s6 = inlined_call_operand.hbm [shape: bf16[1600,128], index: 6, kind: input, shape index: {}]
  %s7 = inlined_call_operand.vmem [shape: f32[1,128], index: 7, kind: input, shape index: {}]
  %s8 = inlined_call_operand.vmem [shape: bf16[128,128], index: 8, kind: input, shape index: {}]
  %s9 = inlined_call_operand.vmem [shape: f32[1,128], index: 9, kind: input, shape index: {}]
  %s10 = inlined_call_operand.hbm [shape: f32[2,128], index: 10, kind: output, shape index: {}]
  %s11 = sld [smem:[#allocation0]]
  $region58: #{ssl_net_forward.1} parent=0
    _
  %s13 = ssub.s32 1, %s11
  %s14 = scalar_select 0, %s13, %s11
  $region1: #{ssl_net_forward.1} parent=0
    #allocation6 [shape = 'u8[258048]{0}', space=vmem, size = 0x3f000, scoped, tag = 'input window, operand 1, single buffered']
    #allocation7 [shape = 's32[1]{0}', space=sflag, size = 0x4, scoped, tag = 'scoped memory for ssl_net_forward.1']
    #allocation8 [shape = 's32[1]{0}', space=sflag, size = 0x4, scoped, tag = 'scoped memory for ssl_net_forward.1']
    #allocation9 [shape = 'u8[409600]{0}', space=vmem, size = 0x64000, scoped, tag = 'input window, operand 6, single buffered']
    #allocation10 [shape = 's32[1]{0}', space=sflag, size = 0x4, scoped, tag = 'scoped memory for ssl_net_forward.1']
    #allocation11 [shape = 'u8[1024]{0}', space=vmem, size = 0x400, scoped, tag = 'output window, operand 0, single buffered']
    %15 = vsyncpa [#allocation7], 0
    %16 = vsyncpa [#allocation10], 0
    %17 = vsyncpa [#allocation8], 0
    // Predicated region
    $region2: #{ssl_net_forward.1} parent=1 // pred_check
      _
    $region3: #{ssl_net_forward.1} parent=1 // pred_check_branch
      %19 = sbr.rel (0) target = $region5
    $region4: #{ssl_net_forward.1} parent=1 // pred_region
      _
    $region5: #{ssl_net_forward.1} parent=1 // pred_fallthru
      _
    // Predicated region
    $region6: #{ssl_net_forward.1} parent=1 // pred_check
      _
    $region7: #{ssl_net_forward.1} parent=1 // pred_check_branch
      %21 = sbr.rel (0) target = $region9
    $region8: #{ssl_net_forward.1} parent=1 // pred_region
      %s23 = ssub.s32 8064, 8064
      %24 = vsyncadd [#allocation7], %s23
      %s25 = sshll.u32 [#allocation6], 4
      %s26 = int_to_ptr.vmem [resolvable:$true] %s25
      %31 = dma.hbm_to_vmem [thread:$0]  %s1, 8064, %s26, [#allocation7], 128, 128, 8
    $region9: #{ssl_net_forward.1} parent=1 // pred_fallthru
      _
    // Predicated region
    $region10: #{ssl_net_forward.1} parent=1 // pred_check
      _
    $region11: #{ssl_net_forward.1} parent=1 // pred_check_branch
      %33 = sbr.rel (0) target = $region13
    $region12: #{ssl_net_forward.1} parent=1 // pred_region
      _
    $region13: #{ssl_net_forward.1} parent=1 // pred_fallthru
      _
    // Predicated region
    $region14: #{ssl_net_forward.1} parent=1 // pred_check
      _
    $region15: #{ssl_net_forward.1} parent=1 // pred_check_branch
      %35 = sbr.rel (0) target = $region17
    $region16: #{ssl_net_forward.1} parent=1 // pred_region
      _
    $region17: #{ssl_net_forward.1} parent=1 // pred_fallthru
      _
    // Predicated region
    $region18: #{ssl_net_forward.1} parent=1 // pred_check
      _
    $region19: #{ssl_net_forward.1} parent=1 // pred_check_branch
      %37 = sbr.rel (0) target = $region21
    $region20: #{ssl_net_forward.1} parent=1 // pred_region
      _
    $region21: #{ssl_net_forward.1} parent=1 // pred_fallthru
      _
    // Predicated region
    $region22: #{ssl_net_forward.1} parent=1 // pred_check
      _
    $region23: #{ssl_net_forward.1} parent=1 // pred_check_branch
      %39 = sbr.rel (0) target = $region25
    $region24: #{ssl_net_forward.1} parent=1 // pred_region
      _
    $region25: #{ssl_net_forward.1} parent=1 // pred_fallthru
      _
    // Predicated region
    $region26: #{ssl_net_forward.1} parent=1 // pred_check
      _
    $region27: #{ssl_net_forward.1} parent=1 // pred_check_branch
      %41 = sbr.rel (0) target = $region29
    $region28: #{ssl_net_forward.1} parent=1 // pred_region
      %s43 = ssub.s32 12800, 12800
      %44 = vsyncadd [#allocation10], %s43
      %s45 = sshll.u32 [#allocation9], 4
      %s46 = int_to_ptr.vmem [resolvable:$true] %s45
      %51 = dma.hbm_to_vmem [thread:$0]  %s6, 12800, %s46, [#allocation10], 64, 64, 4
    $region29: #{ssl_net_forward.1} parent=1 // pred_fallthru
      _
    // Predicated region
    $region30: #{ssl_net_forward.1} parent=1 // pred_check
      _
    $region31: #{ssl_net_forward.1} parent=1 // pred_check_branch
      %53 = sbr.rel (0) target = $region33
    $region32: #{ssl_net_forward.1} parent=1 // pred_region
      _
    $region33: #{ssl_net_forward.1} parent=1 // pred_fallthru
      _
    // Predicated region
    $region34: #{ssl_net_forward.1} parent=1 // pred_check
      _
    $region35: #{ssl_net_forward.1} parent=1 // pred_check_branch
      %55 = sbr.rel (0) target = $region37
    $region36: #{ssl_net_forward.1} parent=1 // pred_region
      _
    $region37: #{ssl_net_forward.1} parent=1 // pred_fallthru
      _
    // Predicated region
    $region38: #{ssl_net_forward.1} parent=1 // pred_check
      _
    $region39: #{ssl_net_forward.1} parent=1 // pred_check_branch
      %57 = sbr.rel (0) target = $region41
    $region40: #{ssl_net_forward.1} parent=1 // pred_region
      _
    $region41: #{ssl_net_forward.1} parent=1 // pred_fallthru
      _
    // Predicated region
    $region42: #{ssl_net_forward.1} parent=1 // pred_check
      _
    $region43: #{ssl_net_forward.1} parent=1 // pred_check_branch
      %59 = sbr.rel (0) target = $region45
    $region44: #{ssl_net_forward.1} parent=1 // pred_region
      %60 = dma.done [#allocation7], 8064
    $region45: #{ssl_net_forward.1} parent=1 // pred_fallthru
      _
    // Predicated region
    $region46: #{ssl_net_forward.1} parent=1 // pred_check
      _
    $region47: #{ssl_net_forward.1} parent=1 // pred_check_branch
      %62 = sbr.rel (0) target = $region49
    $region48: #{ssl_net_forward.1} parent=1 // pred_region
      %63 = dma.done [#allocation10], 12800
    $region49: #{ssl_net_forward.1} parent=1 // pred_fallthru
      _
    %v65 = vld [vmem:[%s0 + $0x4] sm:$0xff]
    %v66 = vld [vmem:[%s0 + $0xc] sm:$0xff]
    %v67 = vld [vmem:[%s0 + $0x14] sm:$0xff]
    %v68 = vld [vmem:[%s0 + $0x1c] sm:$0xff]
    %v69 = vld [vmem:[%s0 + $0x24] sm:$0xff]
    %v70 = vld [vmem:[%s0 + $0x2c] sm:$0xff]
    %v71 = vld [vmem:[%s0 + $0x34] sm:$0x3]
    %v72 = vld [vmem:[#allocation6] sm:$0xff]
    %v73 = vld [vmem:[#allocation6 + $0x8] sm:$0xff]
    %v74 = vld [vmem:[#allocation6 + $0x10] sm:$0xff]
    %v75 = vld [vmem:[#allocation6 + $0x18] sm:$0xff]
    %v76 = vld [vmem:[#allocation6 + $0x20] sm:$0xff]
    %v77 = vld [vmem:[#allocation6 + $0x28] sm:$0xff]
    %v78 = vld [vmem:[#allocation6 + $0x30] sm:$0x3]
    %v79 = vmul.f32 %v72, %v65
    %v80 = vmul.f32 %v73, %v66
    %v81 = vmul.f32 %v74, %v67
    %v82 = vmul.f32 %v75, %v68
    %v83 = vmul.f32 %v76, %v69
    %v84 = vmul.f32 %v77, %v70
    %v85 = vmul.f32 %v78, %v71
    %v86 = vld [vmem:[%s2] sm:$0x1]
    %v88 = vlaneseq
    %v89 = vshrl.u32 %v88, 7
    %v90 = vsub.s32 0, %v89
    %v91 = vrot.slane %v86, %v90
    %v93 = vmul.f32 %v79, %v91
    %v94 = vmul.f32 %v80, %v91
    %v95 = vmul.f32 %v81, %v91
    %v96 = vmul.f32 %v82, %v91
    %v97 = vmul.f32 %v83, %v91
    %v98 = vmul.f32 %v84, %v91
    %v99 = vmul.f32 %v85, %v91
    %v100 = vadd.f32 %v93, 0.0
    %v101 = vadd.f32 %v94, 0.0
    %v102 = vadd.f32 %v95, 0.0
    %v103 = vadd.f32 %v96, 0.0
    %v104 = vadd.f32 %v97, 0.0
    %v105 = vadd.f32 %v98, 0.0
    %v106 = vadd.f32 %v99, 0.0
    %v107 = vld [vmem:[%s0 + $0x6] sm:$0xff]
    %v108 = vld [vmem:[%s0 + $0xe] sm:$0xff]
    %v109 = vld [vmem:[%s0 + $0x16] sm:$0xff]
    %v110 = vld [vmem:[%s0 + $0x1e] sm:$0xff]
    %v111 = vld [vmem:[%s0 + $0x26] sm:$0xff]
    %v112 = vld [vmem:[%s0 + $0x2e] sm:$0xff]
    %v113 = vld [vmem:[%s0 + $0x36] sm:$0x3]
    %s114 = scalar_lea.vmem [#allocation6], 56
    %v115 = vld [vmem:[%s114] sm:$0xff]
    %v116 = vld [vmem:[%s114 + $0x8] sm:$0xff]
    %v117 = vld [vmem:[%s114 + $0x10] sm:$0xff]
    %v118 = vld [vmem:[%s114 + $0x18] sm:$0xff]
    %v119 = vld [vmem:[%s114 + $0x20] sm:$0xff]
    %v120 = vld [vmem:[%s114 + $0x28] sm:$0xff]
    %v121 = vld [vmem:[%s114 + $0x30] sm:$0x3]
    %v122 = vmul.f32 %v115, %v107
    %v123 = vmul.f32 %v116, %v108
    %v124 = vmul.f32 %v117, %v109
    %v125 = vmul.f32 %v118, %v110
    %v126 = vmul.f32 %v119, %v111
    %v127 = vmul.f32 %v120, %v112
    %v128 = vmul.f32 %v121, %v113
    %s129 = scalar_lea.vmem %s2, 1
    %v130 = vld [vmem:[%s129] sm:$0x1]
    %v132 = vlaneseq
    %v133 = vshrl.u32 %v132, 7
    %v134 = vsub.s32 0, %v133
    %v135 = vrot.slane %v130, %v134
    %v137 = vmul.f32 %v122, %v135
    %v138 = vmul.f32 %v123, %v135
    %v139 = vmul.f32 %v124, %v135
    %v140 = vmul.f32 %v125, %v135
    %v141 = vmul.f32 %v126, %v135
    %v142 = vmul.f32 %v127, %v135
    %v143 = vmul.f32 %v128, %v135
    %v144 = vadd.f32 %v100, %v137
    %v145 = vadd.f32 %v101, %v138
    %v146 = vadd.f32 %v102, %v139
    %v147 = vadd.f32 %v103, %v140
    %v148 = vadd.f32 %v104, %v141
    %v149 = vadd.f32 %v105, %v142
    %v150 = vadd.f32 %v106, %v143
    %v151 = vld [vmem:[%s0 + $0x8] sm:$0xff]
    %v152 = vld [vmem:[%s0 + $0x10] sm:$0xff]
    %v153 = vld [vmem:[%s0 + $0x18] sm:$0xff]
    %v154 = vld [vmem:[%s0 + $0x20] sm:$0xff]
    %v155 = vld [vmem:[%s0 + $0x28] sm:$0xff]
    %v156 = vld [vmem:[%s0 + $0x30] sm:$0xff]
    %v157 = vld [vmem:[%s0 + $0x38] sm:$0x3]
    %s158 = scalar_lea.vmem [#allocation6], 112
    %v159 = vld [vmem:[%s158] sm:$0xff]
    %v160 = vld [vmem:[%s158 + $0x8] sm:$0xff]
    %v161 = vld [vmem:[%s158 + $0x10] sm:$0xff]
    %v162 = vld [vmem:[%s158 + $0x18] sm:$0xff]
    %v163 = vld [vmem:[%s158 + $0x20] sm:$0xff]
    %v164 = vld [vmem:[%s158 + $0x28] sm:$0xff]
    %v165 = vld [vmem:[%s158 + $0x30] sm:$0x3]
    %v166 = vmul.f32 %v159, %v151
    %v167 = vmul.f32 %v160, %v152
    %v168 = vmul.f32 %v161, %v153
    %v169 = vmul.f32 %v162, %v154
    %v170 = vmul.f32 %v163, %v155
    %v171 = vmul.f32 %v164, %v156
    %v172 = vmul.f32 %v165, %v157
    %s173 = scalar_lea.vmem %s2, 2
    %v174 = vld [vmem:[%s173] sm:$0x1]
    %v176 = vlaneseq
    %v177 = vshrl.u32 %v176, 7
    %v178 = vsub.s32 0, %v177
    %v179 = vrot.slane %v174, %v178
    %v181 = vmul.f32 %v166, %v179
    %v182 = vmul.f32 %v167, %v179
    %v183 = vmul.f32 %v168, %v179
    %v184 = vmul.f32 %v169, %v179
    %v185 = vmul.f32 %v170, %v179
    %v186 = vmul.f32 %v171, %v179
    %v187 = vmul.f32 %v172, %v179
    %v188 = vadd.f32 %v144, %v181
    %v189 = vadd.f32 %v145, %v182
    %v190 = vadd.f32 %v146, %v183
    %v191 = vadd.f32 %v147, %v184
    %v192 = vadd.f32 %v148, %v185
    %v193 = vadd.f32 %v149, %v186
    %v194 = vadd.f32 %v150, %v187
    %v195 = vld [vmem:[%s0 + $0x36] sm:$0xff]
    %v196 = vld [vmem:[%s0 + $0x3e] sm:$0x3]
    %s197 = scalar_lea.vmem [#allocation6], 168
    %v198 = vld [vmem:[%s197] sm:$0xff]
    %v199 = vld [vmem:[%s197 + $0x8] sm:$0xff]
    %v200 = vld [vmem:[%s197 + $0x10] sm:$0xff]
    %v201 = vld [vmem:[%s197 + $0x18] sm:$0xff]
    %v202 = vld [vmem:[%s197 + $0x20] sm:$0xff]
    %v203 = vld [vmem:[%s197 + $0x28] sm:$0xff]
    %v204 = vld [vmem:[%s197 + $0x30] sm:$0x3]
    %v205 = vmul.f32 %v198, %v108
    %v206 = vmul.f32 %v199, %v109
    %v207 = vmul.f32 %v200, %v110
    %v208 = vmul.f32 %v201, %v111
    %v209 = vmul.f32 %v202, %v112
    %v210 = vmul.f32 %v203, %v195
    %v211 = vmul.f32 %v204, %v196
    %s212 = scalar_lea.vmem %s2, 3
    %v213 = vld [vmem:[%s212] sm:$0x1]
    %v215 = vlaneseq
    %v216 = vshrl.u32 %v215, 7
    %v217 = vsub.s32 0, %v216
    %v218 = vrot.slane %v213, %v217
    %v220 = vmul.f32 %v205, %v218
    %v221 = vmul.f32 %v206, %v218
    %v222 = vmul.f32 %v207, %v218
    %v223 = vmul.f32 %v208, %v218
    %v224 = vmul.f32 %v209, %v218
    %v225 = vmul.f32 %v210, %v218
    %v226 = vmul.f32 %v211, %v218
    %v227 = vadd.f32 %v188, %v220
    %v228 = vadd.f32 %v189, %v221
    %v229 = vadd.f32 %v190, %v222
    %v230 = vadd.f32 %v191, %v223
    %v231 = vadd.f32 %v192, %v224
    %v232 = vadd.f32 %v193, %v225
    %v233 = vadd.f32 %v194, %v226
    %v234 = vld [vmem:[%s0 + $0x38] sm:$0xff]
    %v235 = vld [vmem:[%s0 + $0x40] sm:$0x3]
    %s236 = scalar_lea.vmem [#allocation6], 224
    %v237 = vld [vmem:[%s236] sm:$0xff]
    %v238 = vld [vmem:[%s236 + $0x8] sm:$0xff]
    %v239 = vld [vmem:[%s236 + $0x10] sm:$0xff]
    %v240 = vld [vmem:[%s236 + $0x18] sm:$0xff]
    %v241 = vld [vmem:[%s236 + $0x20] sm:$0xff]
    %v242 = vld [vmem:[%s236 + $0x28] sm:$0xff]
    %v243 = vld [vmem:[%s236 + $0x30] sm:$0x3]
    %v244 = vmul.f32 %v237, %v152
    %v245 = vmul.f32 %v238, %v153
    %v246 = vmul.f32 %v239, %v154
    %v247 = vmul.f32 %v240, %v155
    %v248 = vmul.f32 %v241, %v156
    %v249 = vmul.f32 %v242, %v234
    %v250 = vmul.f32 %v243, %v235
    %s251 = scalar_lea.vmem %s2, 4
    %v252 = vld [vmem:[%s251] sm:$0x1]
    %v254 = vlaneseq
    %v255 = vshrl.u32 %v254, 7
    %v256 = vsub.s32 0, %v255
    %v257 = vrot.slane %v252, %v256
    %v259 = vmul.f32 %v244, %v257
    %v260 = vmul.f32 %v245, %v257
    %v261 = vmul.f32 %v246, %v257
    %v262 = vmul.f32 %v247, %v257
    %v263 = vmul.f32 %v248, %v257
    %v264 = vmul.f32 %v249, %v257
    %v265 = vmul.f32 %v250, %v257
    %v266 = vadd.f32 %v227, %v259
    %v267 = vadd.f32 %v228, %v260
    %v268 = vadd.f32 %v229, %v261
    %v269 = vadd.f32 %v230, %v262
    %v270 = vadd.f32 %v231, %v263
    %v271 = vadd.f32 %v232, %v264
    %v272 = vadd.f32 %v233, %v265
    %v273 = vld [vmem:[%s0 + $0x12] sm:$0xff]
    %v274 = vld [vmem:[%s0 + $0x1a] sm:$0xff]
    %v275 = vld [vmem:[%s0 + $0x22] sm:$0xff]
    %v276 = vld [vmem:[%s0 + $0x2a] sm:$0xff]
    %v277 = vld [vmem:[%s0 + $0x32] sm:$0xff]
    %v278 = vld [vmem:[%s0 + $0x3a] sm:$0xff]
    %v279 = vld [vmem:[%s0 + $0x42] sm:$0x3]
    %s280 = scalar_lea.vmem [#allocation6], 280
    %v281 = vld [vmem:[%s280] sm:$0xff]
    %v282 = vld [vmem:[%s280 + $0x8] sm:$0xff]
    %v283 = vld [vmem:[%s280 + $0x10] sm:$0xff]
    %v284 = vld [vmem:[%s280 + $0x18] sm:$0xff]
    %v285 = vld [vmem:[%s280 + $0x20] sm:$0xff]
    %v286 = vld [vmem:[%s280 + $0x28] sm:$0xff]
    %v287 = vld [vmem:[%s280 + $0x30] sm:$0x3]
    %v288 = vmul.f32 %v281, %v273
    %v289 = vmul.f32 %v282, %v274
    %v290 = vmul.f32 %v283, %v275
    %v291 = vmul.f32 %v284, %v276
    %v292 = vmul.f32 %v285, %v277
    %v293 = vmul.f32 %v286, %v278
    %v294 = vmul.f32 %v287, %v279
    %s295 = scalar_lea.vmem %s2, 5
    %v296 = vld [vmem:[%s295] sm:$0x1]
    %v298 = vlaneseq
    %v299 = vshrl.u32 %v298, 7
    %v300 = vsub.s32 0, %v299
    %v301 = vrot.slane %v296, %v300
    %v303 = vmul.f32 %v288, %v301
    %v304 = vmul.f32 %v289, %v301
    %v305 = vmul.f32 %v290, %v301
    %v306 = vmul.f32 %v291, %v301
    %v307 = vmul.f32 %v292, %v301
    %v308 = vmul.f32 %v293, %v301
    %v309 = vmul.f32 %v294, %v301
    %v310 = vadd.f32 %v266, %v303
    %v311 = vadd.f32 %v267, %v304
    %v312 = vadd.f32 %v268, %v305
    %v313 = vadd.f32 %v269, %v306
    %v314 = vadd.f32 %v270, %v307
    %v315 = vadd.f32 %v271, %v308
    %v316 = vadd.f32 %v272, %v309
    %v317 = vld [vmem:[%s0 + $0x40] sm:$0xff]
    %v318 = vld [vmem:[%s0 + $0x48] sm:$0x3]
    %s319 = scalar_lea.vmem [#allocation6], 336
    %v320 = vld [vmem:[%s319] sm:$0xff]
    %v321 = vld [vmem:[%s319 + $0x8] sm:$0xff]
    %v322 = vld [vmem:[%s319 + $0x10] sm:$0xff]
    %v323 = vld [vmem:[%s319 + $0x18] sm:$0xff]
    %v324 = vld [vmem:[%s319 + $0x20] sm:$0xff]
    %v325 = vld [vmem:[%s319 + $0x28] sm:$0xff]
    %v326 = vld [vmem:[%s319 + $0x30] sm:$0x3]
    %v327 = vmul.f32 %v320, %v153
    %v328 = vmul.f32 %v321, %v154
    %v329 = vmul.f32 %v322, %v155
    %v330 = vmul.f32 %v323, %v156
    %v331 = vmul.f32 %v324, %v234
    %v332 = vmul.f32 %v325, %v317
    %v333 = vmul.f32 %v326, %v318
    %s334 = scalar_lea.vmem %s2, 6
    %v335 = vld [vmem:[%s334] sm:$0x1]
    %v337 = vlaneseq
    %v338 = vshrl.u32 %v337, 7
    %v339 = vsub.s32 0, %v338
    %v340 = vrot.slane %v335, %v339
    %v342 = vmul.f32 %v327, %v340
    %v343 = vmul.f32 %v328, %v340
    %v344 = vmul.f32 %v329, %v340
    %v345 = vmul.f32 %v330, %v340
    %v346 = vmul.f32 %v331, %v340
    %v347 = vmul.f32 %v332, %v340
    %v348 = vmul.f32 %v333, %v340
    %v349 = vadd.f32 %v310, %v342
    %v350 = vadd.f32 %v311, %v343
    %v351 = vadd.f32 %v312, %v344
    %v352 = vadd.f32 %v313, %v345
    %v353 = vadd.f32 %v314, %v346
    %v354 = vadd.f32 %v315, %v347
    %v355 = vadd.f32 %v316, %v348
    %v356 = vld [vmem:[%s0 + $0x42] sm:$0xff]
    %v357 = vld [vmem:[%s0 + $0x4a] sm:$0x3]
    %s358 = scalar_lea.vmem [#allocation6], 392
    %v359 = vld [vmem:[%s358] sm:$0xff]
    %v360 = vld [vmem:[%s358 + $0x8] sm:$0xff]
    %v361 = vld [vmem:[%s358 + $0x10] sm:$0xff]
    %v362 = vld [vmem:[%s358 + $0x18] sm:$0xff]
    %v363 = vld [vmem:[%s358 + $0x20] sm:$0xff]
    %v364 = vld [vmem:[%s358 + $0x28] sm:$0xff]
    %v365 = vld [vmem:[%s358 + $0x30] sm:$0x3]
    %v366 = vmul.f32 %v359, %v274
    %v367 = vmul.f32 %v360, %v275
    %v368 = vmul.f32 %v361, %v276
    %v369 = vmul.f32 %v362, %v277
    %v370 = vmul.f32 %v363, %v278
    %v371 = vmul.f32 %v364, %v356
    %v372 = vmul.f32 %v365, %v357
    %s373 = scalar_lea.vmem %s2, 7
    %v374 = vld [vmem:[%s373] sm:$0x1]
    %v376 = vlaneseq
    %v377 = vshrl.u32 %v376, 7
    %v378 = vsub.s32 0, %v377
    %v379 = vrot.slane %v374, %v378
    %v381 = vmul.f32 %v366, %v379
    %v382 = vmul.f32 %v367, %v379
    %v383 = vmul.f32 %v368, %v379
    %v384 = vmul.f32 %v369, %v379
    %v385 = vmul.f32 %v370, %v379
    %v386 = vmul.f32 %v371, %v379
    %v387 = vmul.f32 %v372, %v379
    %v388 = vadd.f32 %v349, %v381
    %v389 = vadd.f32 %v350, %v382
    %v390 = vadd.f32 %v351, %v383
    %v391 = vadd.f32 %v352, %v384
    %v392 = vadd.f32 %v353, %v385
    %v393 = vadd.f32 %v354, %v386
    %v394 = vadd.f32 %v355, %v387
    %v395 = vld [vmem:[%s0 + $0x34] sm:$0xff]
    %v396 = vld [vmem:[%s0 + $0x3c] sm:$0xff]
    %v397 = vld [vmem:[%s0 + $0x44] sm:$0xff]
    %v398 = vld [vmem:[%s0 + $0x4c] sm:$0x3]
    %s399 = scalar_lea.vmem [#allocation6], 448
    %v400 = vld [vmem:[%s399] sm:$0xff]
    %v401 = vld [vmem:[%s399 + $0x8] sm:$0xff]
    %v402 = vld [vmem:[%s399 + $0x10] sm:$0xff]
    %v403 = vld [vmem:[%s399 + $0x18] sm:$0xff]
    %v404 = vld [vmem:[%s399 + $0x20] sm:$0xff]
    %v405 = vld [vmem:[%s399 + $0x28] sm:$0xff]
    %v406 = vld [vmem:[%s399 + $0x30] sm:$0x3]
    %v407 = vmul.f32 %v400, %v68
    %v408 = vmul.f32 %v401, %v69
    %v409 = vmul.f32 %v402, %v70
    %v410 = vmul.f32 %v403, %v395
    %v411 = vmul.f32 %v404, %v396
    %v412 = vmul.f32 %v405, %v397
    %v413 = vmul.f32 %v406, %v398
    %s414 = scalar_lea.vmem %s2, 8
    %v415 = vld [vmem:[%s414] sm:$0x1]
    %v417 = vlaneseq
    %v418 = vshrl.u32 %v417, 7
    %v419 = vsub.s32 0, %v418
    %v420 = vrot.slane %v415, %v419
    %v422 = vmul.f32 %v407, %v420
    %v423 = vmul.f32 %v408, %v420
    %v424 = vmul.f32 %v409, %v420
    %v425 = vmul.f32 %v410, %v420
    %v426 = vmul.f32 %v411, %v420
    %v427 = vmul.f32 %v412, %v420
    %v428 = vmul.f32 %v413, %v420
    %v429 = vadd.f32 %v388, %v422
    %v430 = vadd.f32 %v389, %v423
    %v431 = vadd.f32 %v390, %v424
    %v432 = vadd.f32 %v391, %v425
    %v433 = vadd.f32 %v392, %v426
    %v434 = vadd.f32 %v393, %v427
    %v435 = vadd.f32 %v394, %v428
    %v436 = vld [vmem:[%s3] sm:$0x1]
    %v438 = vlaneseq
    %v439 = vshrl.u32 %v438, 7
    %v440 = vsub.s32 0, %v439
    %v441 = vrot.slane %v436, %v440
    %v443 = vadd.f32 %v429, %v441
    %v444 = vadd.f32 %v430, %v441
    %v445 = vadd.f32 %v431, %v441
    %v446 = vadd.f32 %v432, %v441
    %v447 = vadd.f32 %v433, %v441
    %v448 = vadd.f32 %v434, %v441
    %v449 = vadd.f32 %v435, %v441
    %v450 = vmax.f32 %v443, 0.0
    %v451 = vmax.f32 %v444, 0.0
    %v452 = vmax.f32 %v445, 0.0
    %v453 = vmax.f32 %v446, 0.0
    %v454 = vmax.f32 %v447, 0.0
    %v455 = vmax.f32 %v448, 0.0
    %v456 = vmax.f32 %v449, 0.0
    %vm457 = vcmask 261120
    %458 = vst.msk [vmem:[#allocation2] sm:$0xff] %vm457, 0.0
    %459 = vst.msk [vmem:[#allocation2 + $0x8] sm:$0xff] %vm457, 0.0
    %460 = vst.msk [vmem:[#allocation2 + $0x10] sm:$0xff] %vm457, 0.0
    %461 = vst.msk [vmem:[#allocation2 + $0x18] sm:$0xff] %vm457, 0.0
    %462 = vst.msk [vmem:[#allocation2 + $0x20] sm:$0xff] %vm457, 0.0
    %463 = vst.msk [vmem:[#allocation2 + $0x28] sm:$0xff] %vm457, 0.0
    %464 = vst.msk [vmem:[#allocation2 + $0x30] sm:$0xff] %vm457, 0.0
    %465 = vst.msk [vmem:[#allocation2 + $0x38] sm:$0xff] %vm457, 0.0
    %466 = vst.msk [vmem:[#allocation2 + $0x40] sm:$0xff] %vm457, 0.0
    %467 = vst.msk [vmem:[#allocation2 + $0x48] sm:$0xff] %vm457, 0.0
    %vm468 = vcmask 254976
    %469 = vst.msk [vmem:[#allocation2 + $0x50] sm:$0x3] %vm468, 0.0
    %470 = vst.msk [vmem:[#allocation2 + $0x10] sm:$0xff] %vm457, %v450
    %471 = vst.msk [vmem:[#allocation2 + $0x18] sm:$0xff] %vm457, %v451
    %472 = vst.msk [vmem:[#allocation2 + $0x20] sm:$0xff] %vm457, %v452
    %473 = vst.msk [vmem:[#allocation2 + $0x28] sm:$0xff] %vm457, %v453
    %474 = vst.msk [vmem:[#allocation2 + $0x30] sm:$0xff] %vm457, %v454
    %475 = vst.msk [vmem:[#allocation2 + $0x38] sm:$0xff] %vm457, %v455
    %476 = vst.msk [vmem:[#allocation2 + $0x40] sm:$0x3] %vm468, %v456
    %v477 = vld [vmem:[#allocation2 + $0x4] sm:$0xff]
    %v478 = vld [vmem:[#allocation2 + $0xc] sm:$0xff]
    %v479 = vld [vmem:[#allocation2 + $0x14] sm:$0xff]
    %v480 = vld [vmem:[#allocation2 + $0x1c] sm:$0xff]
    %v481 = vld [vmem:[#allocation2 + $0x24] sm:$0xff]
    %v482 = vld [vmem:[#allocation2 + $0x2c] sm:$0xff]
    %v483 = vld [vmem:[#allocation2 + $0x34] sm:$0x3]
    %v484 = vld [vmem:[#allocation6] sm:$0xff]
    %v485 = vld [vmem:[#allocation6 + $0x8] sm:$0xff]
    %v486 = vld [vmem:[#allocation6 + $0x10] sm:$0xff]
    %v487 = vld [vmem:[#allocation6 + $0x18] sm:$0xff]
    %v488 = vld [vmem:[#allocation6 + $0x20] sm:$0xff]
    %v489 = vld [vmem:[#allocation6 + $0x28] sm:$0xff]
    %v490 = vld [vmem:[#allocation6 + $0x30] sm:$0x3]
    %v491 = vmul.f32 %v484, %v477
    %v492 = vmul.f32 %v485, %v478
    %v493 = vmul.f32 %v486, %v479
    %v494 = vmul.f32 %v487, %v480
    %v495 = vmul.f32 %v488, %v481
    %v496 = vmul.f32 %v489, %v482
    %v497 = vmul.f32 %v490, %v483
    %498 = vst.msk [vmem:[#allocation3] sm:$0xff] %vm457, %v491
    %499 = vst.msk [vmem:[#allocation3 + $0x18] sm:$0xff] %vm457, %v492
    %500 = vst.msk [vmem:[#allocation3 + $0x30] sm:$0xff] %vm457, %v493
    %501 = vst.msk [vmem:[#allocation3 + $0x48] sm:$0xff] %vm457, %v494
    %502 = vst.msk [vmem:[#allocation3 + $0x60] sm:$0xff] %vm457, %v495
    %503 = vst.msk [vmem:[#allocation3 + $0x78] sm:$0xff] %vm457, %v496
    %504 = vst.msk [vmem:[#allocation3 + $0x90] sm:$0x3] %vm468, %v497
    %v505 = vld [vmem:[#allocation2 + $0x6] sm:$0xff]
    %v506 = vld [vmem:[#allocation2 + $0xe] sm:$0xff]
    %v507 = vld [vmem:[#allocation2 + $0x16] sm:$0xff]
    %v508 = vld [vmem:[#allocation2 + $0x1e] sm:$0xff]
    %v509 = vld [vmem:[#allocation2 + $0x26] sm:$0xff]
    %v510 = vld [vmem:[#allocation2 + $0x2e] sm:$0xff]
    %v511 = vld [vmem:[#allocation2 + $0x36] sm:$0x3]
    %v512 = vld [vmem:[%s114] sm:$0xff]
    %v513 = vld [vmem:[%s114 + $0x8] sm:$0xff]
    %v514 = vld [vmem:[%s114 + $0x10] sm:$0xff]
    %v515 = vld [vmem:[%s114 + $0x18] sm:$0xff]
    %v516 = vld [vmem:[%s114 + $0x20] sm:$0xff]
    %v517 = vld [vmem:[%s114 + $0x28] sm:$0xff]
    %v518 = vld [vmem:[%s114 + $0x30] sm:$0x3]
    %v519 = vmul.f32 %v512, %v505
    %v520 = vmul.f32 %v513, %v506
    %v521 = vmul.f32 %v514, %v507
    %v522 = vmul.f32 %v515, %v508
    %v523 = vmul.f32 %v516, %v509
    %v524 = vmul.f32 %v517, %v510
    %v525 = vmul.f32 %v518, %v511
    %533 = vrot.lane.b32.xlu0 %v519, 32
    %v534 = vpop.permute.xlu0 %533
    %535 = vrot.lane.b32.xlu0 %v520, 32
    %v536 = vpop.permute.xlu0 %535
    %537 = vrot.lane.b32.xlu0 %v521, 32
    %v538 = vpop.permute.xlu0 %537
    %539 = vrot.lane.b32.xlu0 %v522, 32
    %v540 = vpop.permute.xlu0 %539
    %541 = vrot.lane.b32.xlu0 %v523, 32
    %v542 = vpop.permute.xlu0 %541
    %543 = vrot.lane.b32.xlu0 %v524, 32
    %v544 = vpop.permute.xlu0 %543
    %545 = vrot.lane.b32.xlu0 %v525, 32
    %v546 = vpop.permute.xlu0 %545
    %vm554 = vcmask 523520
    %555 = vst.msk [vmem:[#allocation3] sm:$0xff] %vm554, %v534
    %556 = vst.msk [vmem:[#allocation3 + $0x18] sm:$0xff] %vm554, %v536
    %557 = vst.msk [vmem:[#allocation3 + $0x30] sm:$0xff] %vm554, %v538
    %558 = vst.msk [vmem:[#allocation3 + $0x48] sm:$0xff] %vm554, %v540
    %559 = vst.msk [vmem:[#allocation3 + $0x60] sm:$0xff] %vm554, %v542
    %560 = vst.msk [vmem:[#allocation3 + $0x78] sm:$0xff] %vm554, %v544
    %vm561 = vcmask 517376
    %562 = vst.msk [vmem:[#allocation3 + $0x90] sm:$0x3] %vm561, %v546
    %v563 = vld [vmem:[#allocation2 + $0x8] sm:$0xff]
    %v564 = vld [vmem:[#allocation2 + $0x10] sm:$0xff]
    %v565 = vld [vmem:[#allocation2 + $0x18] sm:$0xff]
    %v566 = vld [vmem:[#allocation2 + $0x20] sm:$0xff]
    %v567 = vld [vmem:[#allocation2 + $0x28] sm:$0xff]
    %v568 = vld [vmem:[#allocation2 + $0x30] sm:$0xff]
    %v569 = vld [vmem:[#allocation2 + $0x38] sm:$0x3]
    %v570 = vld [vmem:[%s158] sm:$0xff]
    %v571 = vld [vmem:[%s158 + $0x8] sm:$0xff]
    %v572 = vld [vmem:[%s158 + $0x10] sm:$0xff]
    %v573 = vld [vmem:[%s158 + $0x18] sm:$0xff]
    %v574 = vld [vmem:[%s158 + $0x20] sm:$0xff]
    %v575 = vld [vmem:[%s158 + $0x28] sm:$0xff]
    %v576 = vld [vmem:[%s158 + $0x30] sm:$0x3]
    %v577 = vmul.f32 %v570, %v563
    %v578 = vmul.f32 %v571, %v564
    %v579 = vmul.f32 %v572, %v565
    %v580 = vmul.f32 %v573, %v566
    %v581 = vmul.f32 %v574, %v567
    %v582 = vmul.f32 %v575, %v568
    %v583 = vmul.f32 %v576, %v569
    %591 = vrot.lane.b32.xlu0 %v577, 64
    %v592 = vpop.permute.xlu0 %591
    %593 = vrot.lane.b32.xlu0 %v578, 64
    %v594 = vpop.permute.xlu0 %593
    %595 = vrot.lane.b32.xlu0 %v579, 64
    %v596 = vpop.permute.xlu0 %595
    %597 = vrot.lane.b32.xlu0 %v580, 64
    %v598 = vpop.permute.xlu0 %597
    %599 = vrot.lane.b32.xlu0 %v581, 64
    %v600 = vpop.permute.xlu0 %599
    %601 = vrot.lane.b32.xlu0 %v582, 64
    %v602 = vpop.permute.xlu0 %601
    %603 = vrot.lane.b32.xlu0 %v583, 64
    %v604 = vpop.permute.xlu0 %603
    %vm612 = vcmask 785920
    %613 = vst.msk [vmem:[#allocation3] sm:$0xff] %vm612, %v592
    %614 = vst.msk [vmem:[#allocation3 + $0x18] sm:$0xff] %vm612, %v594
    %615 = vst.msk [vmem:[#allocation3 + $0x30] sm:$0xff] %vm612, %v596
    %616 = vst.msk [vmem:[#allocation3 + $0x48] sm:$0xff] %vm612, %v598
    %617 = vst.msk [vmem:[#allocation3 + $0x60] sm:$0xff] %vm612, %v600
    %618 = vst.msk [vmem:[#allocation3 + $0x78] sm:$0xff] %vm612, %v602
    %vm619 = vcmask 779776
    %620 = vst.msk [vmem:[#allocation3 + $0x90] sm:$0x3] %vm619, %v604
    %v621 = vld [vmem:[#allocation2 + $0xe] sm:$0xff]
    %v622 = vld [vmem:[#allocation2 + $0x16] sm:$0xff]
    %v623 = vld [vmem:[#allocation2 + $0x1e] sm:$0xff]
    %v624 = vld [vmem:[#allocation2 + $0x26] sm:$0xff]
    %v625 = vld [vmem:[#allocation2 + $0x2e] sm:$0xff]
    %v626 = vld [vmem:[#allocation2 + $0x36] sm:$0xff]
    %v627 = vld [vmem:[#allocation2 + $0x3e] sm:$0x3]
    %v628 = vld [vmem:[%s197] sm:$0xff]
    %v629 = vld [vmem:[%s197 + $0x8] sm:$0xff]
    %v630 = vld [vmem:[%s197 + $0x10] sm:$0xff]
    %v631 = vld [vmem:[%s197 + $0x18] sm:$0xff]
    %v632 = vld [vmem:[%s197 + $0x20] sm:$0xff]
    %v633 = vld [vmem:[%s197 + $0x28] sm:$0xff]
    %v634 = vld [vmem:[%s197 + $0x30] sm:$0x3]
    %v635 = vmul.f32 %v628, %v621
    %v636 = vmul.f32 %v629, %v622
    %v637 = vmul.f32 %v630, %v623
    %v638 = vmul.f32 %v631, %v624
    %v639 = vmul.f32 %v632, %v625
    %v640 = vmul.f32 %v633, %v626
    %v641 = vmul.f32 %v634, %v627
    %649 = vrot.lane.b32.xlu0 %v635, 96
    %v650 = vpop.permute.xlu0 %649
    %651 = vrot.lane.b32.xlu0 %v636, 96
    %v652 = vpop.permute.xlu0 %651
    %653 = vrot.lane.b32.xlu0 %v637, 96
    %v654 = vpop.permute.xlu0 %653
    %655 = vrot.lane.b32.xlu0 %v638, 96
    %v656 = vpop.permute.xlu0 %655
    %657 = vrot.lane.b32.xlu0 %v639, 96
    %v658 = vpop.permute.xlu0 %657
    %659 = vrot.lane.b32.xlu0 %v640, 96
    %v660 = vpop.permute.xlu0 %659
    %661 = vrot.lane.b32.xlu0 %v641, 96
    %v662 = vpop.permute.xlu0 %661
    %vm670 = vcmask 1048320
    %671 = vst.msk [vmem:[#allocation3] sm:$0xff] %vm670, %v650
    %672 = vst.msk [vmem:[#allocation3 + $0x18] sm:$0xff] %vm670, %v652
    %673 = vst.msk [vmem:[#allocation3 + $0x30] sm:$0xff] %vm670, %v654
    %674 = vst.msk [vmem:[#allocation3 + $0x48] sm:$0xff] %vm670, %v656
    %675 = vst.msk [vmem:[#allocation3 + $0x60] sm:$0xff] %vm670, %v658
    %676 = vst.msk [vmem:[#allocation3 + $0x78] sm:$0xff] %vm670, %v660
    %vm677 = vcmask 1042176
    %678 = vst.msk [vmem:[#allocation3 + $0x90] sm:$0x3] %vm677, %v662
    %v679 = vld [vmem:[#allocation2 + $0x10] sm:$0xff]
    %v680 = vld [vmem:[#allocation2 + $0x18] sm:$0xff]
    %v681 = vld [vmem:[#allocation2 + $0x20] sm:$0xff]
    %v682 = vld [vmem:[#allocation2 + $0x28] sm:$0xff]
    %v683 = vld [vmem:[#allocation2 + $0x30] sm:$0xff]
    %v684 = vld [vmem:[#allocation2 + $0x38] sm:$0xff]
    %v685 = vld [vmem:[#allocation2 + $0x40] sm:$0x3]
    %v686 = vld [vmem:[%s236] sm:$0xff]
    %v687 = vld [vmem:[%s236 + $0x8] sm:$0xff]
    %v688 = vld [vmem:[%s236 + $0x10] sm:$0xff]
    %v689 = vld [vmem:[%s236 + $0x18] sm:$0xff]
    %v690 = vld [vmem:[%s236 + $0x20] sm:$0xff]
    %v691 = vld [vmem:[%s236 + $0x28] sm:$0xff]
    %v692 = vld [vmem:[%s236 + $0x30] sm:$0x3]
    %v693 = vmul.f32 %v686, %v679
    %v694 = vmul.f32 %v687, %v680
    %v695 = vmul.f32 %v688, %v681
    %v696 = vmul.f32 %v689, %v682
    %v697 = vmul.f32 %v690, %v683
    %v698 = vmul.f32 %v691, %v684
    %v699 = vmul.f32 %v692, %v685
    %700 = vst.msk [vmem:[#allocation3 + $0x8] sm:$0xff] %vm457, %v693
    %701 = vst.msk [vmem:[#allocation3 + $0x20] sm:$0xff] %vm457, %v694
    %702 = vst.msk [vmem:[#allocation3 + $0x38] sm:$0xff] %vm457, %v695
    %703 = vst.msk [vmem:[#allocation3 + $0x50] sm:$0xff] %vm457, %v696
    %704 = vst.msk [vmem:[#allocation3 + $0x68] sm:$0xff] %vm457, %v697
    %705 = vst.msk [vmem:[#allocation3 + $0x80] sm:$0xff] %vm457, %v698
    %706 = vst.msk [vmem:[#allocation3 + $0x98] sm:$0x3] %vm468, %v699
    %v707 = vld [vmem:[#allocation2 + $0x12] sm:$0xff]
    %v708 = vld [vmem:[#allocation2 + $0x1a] sm:$0xff]
    %v709 = vld [vmem:[#allocation2 + $0x22] sm:$0xff]
    %v710 = vld [vmem:[#allocation2 + $0x2a] sm:$0xff]
    %v711 = vld [vmem:[#allocation2 + $0x32] sm:$0xff]
    %v712 = vld [vmem:[#allocation2 + $0x3a] sm:$0xff]
    %v713 = vld [vmem:[#allocation2 + $0x42] sm:$0x3]
    %v714 = vld [vmem:[%s280] sm:$0xff]
    %v715 = vld [vmem:[%s280 + $0x8] sm:$0xff]
    %v716 = vld [vmem:[%s280 + $0x10] sm:$0xff]
    %v717 = vld [vmem:[%s280 + $0x18] sm:$0xff]
    %v718 = vld [vmem:[%s280 + $0x20] sm:$0xff]
    %v719 = vld [vmem:[%s280 + $0x28] sm:$0xff]
    %v720 = vld [vmem:[%s280 + $0x30] sm:$0x3]
    %v721 = vmul.f32 %v714, %v707
    %v722 = vmul.f32 %v715, %v708
    %v723 = vmul.f32 %v716, %v709
    %v724 = vmul.f32 %v717, %v710
    %v725 = vmul.f32 %v718, %v711
    %v726 = vmul.f32 %v719, %v712
    %v727 = vmul.f32 %v720, %v713
    %735 = vrot.lane.b32.xlu0 %v721, 32
    %v736 = vpop.permute.xlu0 %735
    %737 = vrot.lane.b32.xlu0 %v722, 32
    %v738 = vpop.permute.xlu0 %737
    %739 = vrot.lane.b32.xlu0 %v723, 32
    %v740 = vpop.permute.xlu0 %739
    %741 = vrot.lane.b32.xlu0 %v724, 32
    %v742 = vpop.permute.xlu0 %741
    %743 = vrot.lane.b32.xlu0 %v725, 32
    %v744 = vpop.permute.xlu0 %743
    %745 = vrot.lane.b32.xlu0 %v726, 32
    %v746 = vpop.permute.xlu0 %745
    %747 = vrot.lane.b32.xlu0 %v727, 32
    %v748 = vpop.permute.xlu0 %747
    %756 = vst.msk [vmem:[#allocation3 + $0x8] sm:$0xff] %vm554, %v736
    %757 = vst.msk [vmem:[#allocation3 + $0x20] sm:$0xff] %vm554, %v738
    %758 = vst.msk [vmem:[#allocation3 + $0x38] sm:$0xff] %vm554, %v740
    %759 = vst.msk [vmem:[#allocation3 + $0x50] sm:$0xff] %vm554, %v742
    %760 = vst.msk [vmem:[#allocation3 + $0x68] sm:$0xff] %vm554, %v744
    %761 = vst.msk [vmem:[#allocation3 + $0x80] sm:$0xff] %vm554, %v746
    %762 = vst.msk [vmem:[#allocation3 + $0x98] sm:$0x3] %vm561, %v748
    %v763 = vld [vmem:[#allocation2 + $0x18] sm:$0xff]
    %v764 = vld [vmem:[#allocation2 + $0x20] sm:$0xff]
    %v765 = vld [vmem:[#allocation2 + $0x28] sm:$0xff]
    %v766 = vld [vmem:[#allocation2 + $0x30] sm:$0xff]
    %v767 = vld [vmem:[#allocation2 + $0x38] sm:$0xff]
    %v768 = vld [vmem:[#allocation2 + $0x40] sm:$0xff]
    %v769 = vld [vmem:[#allocation2 + $0x48] sm:$0x3]
    %v770 = vld [vmem:[%s319] sm:$0xff]
    %v771 = vld [vmem:[%s319 + $0x8] sm:$0xff]
    %v772 = vld [vmem:[%s319 + $0x10] sm:$0xff]
    %v773 = vld [vmem:[%s319 + $0x18] sm:$0xff]
    %v774 = vld [vmem:[%s319 + $0x20] sm:$0xff]
    %v775 = vld [vmem:[%s319 + $0x28] sm:$0xff]
    %v776 = vld [vmem:[%s319 + $0x30] sm:$0x3]
    %v777 = vmul.f32 %v770, %v763
    %v778 = vmul.f32 %v771, %v764
    %v779 = vmul.f32 %v772, %v765
    %v780 = vmul.f32 %v773, %v766
    %v781 = vmul.f32 %v774, %v767
    %v782 = vmul.f32 %v775, %v768
    %v783 = vmul.f32 %v776, %v769
    %791 = vrot.lane.b32.xlu0 %v777, 64
    %v792 = vpop.permute.xlu0 %791
    %793 = vrot.lane.b32.xlu0 %v778, 64
    %v794 = vpop.permute.xlu0 %793
    %795 = vrot.lane.b32.xlu0 %v779, 64
    %v796 = vpop.permute.xlu0 %795
    %797 = vrot.lane.b32.xlu0 %v780, 64
    %v798 = vpop.permute.xlu0 %797
    %799 = vrot.lane.b32.xlu0 %v781, 64
    %v800 = vpop.permute.xlu0 %799
    %801 = vrot.lane.b32.xlu0 %v782, 64
    %v802 = vpop.permute.xlu0 %801
    %803 = vrot.lane.b32.xlu0 %v783, 64
    %v804 = vpop.permute.xlu0 %803
    %812 = vst.msk [vmem:[#allocation3 + $0x8] sm:$0xff] %vm612, %v792
    %813 = vst.msk [vmem:[#allocation3 + $0x20] sm:$0xff] %vm612, %v794
    %814 = vst.msk [vmem:[#allocation3 + $0x38] sm:$0xff] %vm612, %v796
    %815 = vst.msk [vmem:[#allocation3 + $0x50] sm:$0xff] %vm612, %v798
    %816 = vst.msk [vmem:[#allocation3 + $0x68] sm:$0xff] %vm612, %v800
    %817 = vst.msk [vmem:[#allocation3 + $0x80] sm:$0xff] %vm612, %v802
    %818 = vst.msk [vmem:[#allocation3 + $0x98] sm:$0x3] %vm619, %v804
    %v819 = vld [vmem:[#allocation2 + $0x1a] sm:$0xff]
    %v820 = vld [vmem:[#allocation2 + $0x22] sm:$0xff]
    %v821 = vld [vmem:[#allocation2 + $0x2a] sm:$0xff]
    %v822 = vld [vmem:[#allocation2 + $0x32] sm:$0xff]
    %v823 = vld [vmem:[#allocation2 + $0x3a] sm:$0xff]
    %v824 = vld [vmem:[#allocation2 + $0x42] sm:$0xff]
    %v825 = vld [vmem:[#allocation2 + $0x4a] sm:$0x3]
    %v826 = vld [vmem:[%s358] sm:$0xff]
    %v827 = vld [vmem:[%s358 + $0x8] sm:$0xff]
    %v828 = vld [vmem:[%s358 + $0x10] sm:$0xff]
    %v829 = vld [vmem:[%s358 + $0x18] sm:$0xff]
    %v830 = vld [vmem:[%s358 + $0x20] sm:$0xff]
    %v831 = vld [vmem:[%s358 + $0x28] sm:$0xff]
    %v832 = vld [vmem:[%s358 + $0x30] sm:$0x3]
    %v833 = vmul.f32 %v826, %v819
    %v834 = vmul.f32 %v827, %v820
    %v835 = vmul.f32 %v828, %v821
    %v836 = vmul.f32 %v829, %v822
    %v837 = vmul.f32 %v830, %v823
    %v838 = vmul.f32 %v831, %v824
    %v839 = vmul.f32 %v832, %v825
    %847 = vrot.lane.b32.xlu0 %v833, 96
    %v848 = vpop.permute.xlu0 %847
    %849 = vrot.lane.b32.xlu0 %v834, 96
    %v850 = vpop.permute.xlu0 %849
    %851 = vrot.lane.b32.xlu0 %v835, 96
    %v852 = vpop.permute.xlu0 %851
    %853 = vrot.lane.b32.xlu0 %v836, 96
    %v854 = vpop.permute.xlu0 %853
    %855 = vrot.lane.b32.xlu0 %v837, 96
    %v856 = vpop.permute.xlu0 %855
    %857 = vrot.lane.b32.xlu0 %v838, 96
    %v858 = vpop.permute.xlu0 %857
    %859 = vrot.lane.b32.xlu0 %v839, 96
    %v860 = vpop.permute.xlu0 %859
    %868 = vst.msk [vmem:[#allocation3 + $0x8] sm:$0xff] %vm670, %v848
    %869 = vst.msk [vmem:[#allocation3 + $0x20] sm:$0xff] %vm670, %v850
    %870 = vst.msk [vmem:[#allocation3 + $0x38] sm:$0xff] %vm670, %v852
    %871 = vst.msk [vmem:[#allocation3 + $0x50] sm:$0xff] %vm670, %v854
    %872 = vst.msk [vmem:[#allocation3 + $0x68] sm:$0xff] %vm670, %v856
    %873 = vst.msk [vmem:[#allocation3 + $0x80] sm:$0xff] %vm670, %v858
    %874 = vst.msk [vmem:[#allocation3 + $0x98] sm:$0x3] %vm677, %v860
    %v875 = vld [vmem:[#allocation2 + $0x1c] sm:$0xff]
    %v876 = vld [vmem:[#allocation2 + $0x24] sm:$0xff]
    %v877 = vld [vmem:[#allocation2 + $0x2c] sm:$0xff]
    %v878 = vld [vmem:[#allocation2 + $0x34] sm:$0xff]
    %v879 = vld [vmem:[#allocation2 + $0x3c] sm:$0xff]
    %v880 = vld [vmem:[#allocation2 + $0x44] sm:$0xff]
    %v881 = vld [vmem:[#allocation2 + $0x4c] sm:$0x3]
    %v882 = vld [vmem:[%s399] sm:$0xff]
    %v883 = vld [vmem:[%s399 + $0x8] sm:$0xff]
    %v884 = vld [vmem:[%s399 + $0x10] sm:$0xff]
    %v885 = vld [vmem:[%s399 + $0x18] sm:$0xff]
    %v886 = vld [vmem:[%s399 + $0x20] sm:$0xff]
    %v887 = vld [vmem:[%s399 + $0x28] sm:$0xff]
    %v888 = vld [vmem:[%s399 + $0x30] sm:$0x3]
    %v889 = vmul.f32 %v882, %v875
    %v890 = vmul.f32 %v883, %v876
    %v891 = vmul.f32 %v884, %v877
    %v892 = vmul.f32 %v885, %v878
    %v893 = vmul.f32 %v886, %v879
    %v894 = vmul.f32 %v887, %v880
    %v895 = vmul.f32 %v888, %v881
    %896 = vst.msk [vmem:[#allocation3 + $0x10] sm:$0xff] %vm457, %v889
    %897 = vst.msk [vmem:[#allocation3 + $0x28] sm:$0xff] %vm457, %v890
    %898 = vst.msk [vmem:[#allocation3 + $0x40] sm:$0xff] %vm457, %v891
    %899 = vst.msk [vmem:[#allocation3 + $0x58] sm:$0xff] %vm457, %v892
    %900 = vst.msk [vmem:[#allocation3 + $0x70] sm:$0xff] %vm457, %v893
    %901 = vst.msk [vmem:[#allocation3 + $0x88] sm:$0xff] %vm457, %v894
    %902 = vst.msk [vmem:[#allocation3 + $0xa0] sm:$0x3] %vm468, %v895
    %v903 = vld [vmem:[#allocation3] sm:$0xff]
    %v904 = vld [vmem:[#allocation3 + $0x8] sm:$0xff]
    %v905 = vld [vmem:[#allocation3 + $0x10] sm:$0xff]
    %v906 = vld [vmem:[#allocation3 + $0x18] sm:$0xff]
    %v907 = vld [vmem:[#allocation3 + $0x20] sm:$0xff]
    %v908 = vld [vmem:[#allocation3 + $0x28] sm:$0xff]
    %v909 = vld [vmem:[#allocation3 + $0x30] sm:$0xff]
    %v910 = vld [vmem:[#allocation3 + $0x38] sm:$0xff]
    %v911 = vld [vmem:[#allocation3 + $0x40] sm:$0xff]
    %v912 = vld [vmem:[#allocation3 + $0x48] sm:$0xff]
    %v913 = vld [vmem:[#allocation3 + $0x50] sm:$0xff]
    %v914 = vld [vmem:[#allocation3 + $0x58] sm:$0xff]
    %v915 = vld [vmem:[#allocation3 + $0x60] sm:$0xff]
    %v916 = vld [vmem:[#allocation3 + $0x68] sm:$0xff]
    %v917 = vld [vmem:[#allocation3 + $0x70] sm:$0xff]
    %v918 = vld [vmem:[#allocation3 + $0x78] sm:$0xff]
    %v919 = vld [vmem:[#allocation3 + $0x80] sm:$0xff]
    %v920 = vld [vmem:[#allocation3 + $0x88] sm:$0xff]
    %v921 = vld [vmem:[#allocation3 + $0x90] sm:$0x3]
    %v922 = vld [vmem:[#allocation3 + $0x98] sm:$0x3]
    %v923 = vld [vmem:[#allocation3 + $0xa0] sm:$0x3]
    %v924 = vpack.c.bf16 %v906, %v903
    %v925 = vpack.c.bf16 %v907, %v904
    %v926 = vpack.c.bf16 %v908, %v905
    %v927 = vpack.c.bf16 %v912, %v909
    %v928 = vpack.c.bf16 %v913, %v910
    %v929 = vpack.c.bf16 %v914, %v911
    %v930 = vpack.c.bf16 %v918, %v915
    %v931 = vpack.c.bf16 %v919, %v916
    %v932 = vpack.c.bf16 %v920, %v917
    %v933 = vpack.c.bf16 %v921, %v921
    %v934 = vpack.c.bf16 %v922, %v922
    %v935 = vpack.c.bf16 %v923, %v923
    %v936 = vld [vmem:[%s4] sm:$0xf]
    %v937 = vld [vmem:[%s4 + $0x4] sm:$0xf]
    %v938 = vld [vmem:[%s4 + $0x8] sm:$0xf]
    %v939 = vld [vmem:[%s4 + $0xc] sm:$0xf]
    %v940 = vld [vmem:[%s4 + $0x10] sm:$0xf]
    %v941 = vld [vmem:[%s4 + $0x14] sm:$0xf]
    %v942 = vld [vmem:[%s4 + $0x18] sm:$0xf]
    %v943 = vld [vmem:[%s4 + $0x1c] sm:$0xf]
    %v944 = vld [vmem:[%s4 + $0x20] sm:$0xf]
    %v945 = vld [vmem:[%s4 + $0x24] sm:$0xf]
    %v946 = vld [vmem:[%s4 + $0x28] sm:$0xf]
    %v947 = vld [vmem:[%s4 + $0x2c] sm:$0xf]
    %v948 = vld [vmem:[%s4 + $0x30] sm:$0xf]
    %v949 = vld [vmem:[%s4 + $0x34] sm:$0xf]
    %v950 = vld [vmem:[%s4 + $0x38] sm:$0xf]
    %v951 = vld [vmem:[%s4 + $0x3c] sm:$0xf]
    %v952 = vld [vmem:[%s4 + $0x40] sm:$0xf]
    %v953 = vld [vmem:[%s4 + $0x44] sm:$0xf]
    %v954 = vld [vmem:[%s4 + $0x48] sm:$0xf]
    %v955 = vld [vmem:[%s4 + $0x4c] sm:$0xf]
    %v956 = vld [vmem:[%s4 + $0x50] sm:$0xf]
    %v957 = vld [vmem:[%s4 + $0x54] sm:$0xf]
    %v958 = vld [vmem:[%s4 + $0x58] sm:$0xf]
    %v959 = vld [vmem:[%s4 + $0x5c] sm:$0xf]
    %v960 = vld [vmem:[%s4 + $0x60] sm:$0xf]
    %v961 = vld [vmem:[%s4 + $0x64] sm:$0xf]
    %v962 = vld [vmem:[%s4 + $0x68] sm:$0xf]
    %v963 = vld [vmem:[%s4 + $0x6c] sm:$0xf]
    %v964 = vld [vmem:[%s4 + $0x70] sm:$0xf]
    %v965 = vld [vmem:[%s4 + $0x74] sm:$0xf]
    %v966 = vld [vmem:[%s4 + $0x78] sm:$0xf]
    %v967 = vld [vmem:[%s4 + $0x7c] sm:$0xf]
    %v968 = vld [vmem:[%s4 + $0x80] sm:$0xf]
    %v969 = vld [vmem:[%s4 + $0x84] sm:$0xf]
    %v970 = vld [vmem:[%s4 + $0x88] sm:$0xf]
    %v971 = vld [vmem:[%s4 + $0x8c] sm:$0xf]
    %v972 = vld [vmem:[%s5] sm:$0x1]
    %v974 = vlaneseq
    %v975 = vshrl.u32 %v974, 7
    %v976 = vsub.s32 0, %v975
    %v977 = vrot.slane %v972, %v976
    %v1015 = vunpack.c.l.b16 %v936
    %v1016 = vunpack.c.l.b16 %v937
    %v1017 = vunpack.c.l.b16 %v938
    %v1018 = vunpack.c.l.b16 %v939
    %v1019 = vunpack.c.l.b16 %v940
    %v1020 = vunpack.c.l.b16 %v941
    %v1021 = vunpack.c.l.b16 %v942
    %v1022 = vunpack.c.l.b16 %v943
    %v1023 = vunpack.c.l.b16 %v944
    %v1024 = vunpack.c.l.b16 %v945
    %v1025 = vunpack.c.l.b16 %v946
    %v1026 = vunpack.c.l.b16 %v947
    %v1027 = vunpack.c.l.b16 %v948
    %v1028 = vunpack.c.l.b16 %v949
    %v1029 = vunpack.c.l.b16 %v950
    %v1030 = vunpack.c.l.b16 %v951
    %v1031 = vunpack.c.l.b16 %v952
    %v1032 = vunpack.c.l.b16 %v953
    %v1033 = vunpack.c.l.b16 %v954
    %v1034 = vunpack.c.l.b16 %v955
    %v1035 = vunpack.c.l.b16 %v956
    %v1036 = vunpack.c.l.b16 %v957
    %v1037 = vunpack.c.l.b16 %v958
    %v1038 = vunpack.c.l.b16 %v959
    %v1039 = vunpack.c.l.b16 %v960
    %v1040 = vunpack.c.l.b16 %v961
    %v1041 = vunpack.c.l.b16 %v962
    %v1042 = vunpack.c.l.b16 %v963
    %v1043 = vunpack.c.l.b16 %v964
    %v1044 = vunpack.c.l.b16 %v965
    %v1045 = vunpack.c.l.b16 %v966
    %v1046 = vunpack.c.l.b16 %v967
    %v1047 = vunpack.c.l.b16 %v968
    %v1048 = vunpack.c.l.b16 %v969
    %v1049 = vunpack.c.l.b16 %v970
    %v1050 = vunpack.c.l.b16 %v971
    %v1051 = vpack.c.b16 %v1016, %v1015
    %v1052 = vpack.c.b16 %v1018, %v1017
    %v1053 = vpack.c.b16 %v1020, %v1019
    %v1054 = vpack.c.b16 %v1022, %v1021
    %v1055 = vpack.c.b16 %v1024, %v1023
    %v1056 = vpack.c.b16 %v1026, %v1025
    %v1057 = vpack.c.b16 %v1028, %v1027
    %v1058 = vpack.c.b16 %v1030, %v1029
    %v1059 = vpack.c.b16 %v1032, %v1031
    %v1060 = vpack.c.b16 %v1034, %v1033
    %v1061 = vpack.c.b16 %v1036, %v1035
    %v1062 = vpack.c.b16 %v1038, %v1037
    %v1063 = vpack.c.b16 %v1040, %v1039
    %v1064 = vpack.c.b16 %v1042, %v1041
    %v1065 = vpack.c.b16 %v1044, %v1043
    %v1066 = vpack.c.b16 %v1046, %v1045
    %v1067 = vpack.c.b16 %v1048, %v1047
    %v1068 = vpack.c.b16 %v1050, %v1049
    %v1088 = vsel %vm457, %v926, 0
    %v1091 = vsel %vm457, %v929, 0
    %v1094 = vsel %vm457, %v932, 0
    %v1097 = vsel %vm457, %v935, 0
    %1099 = vmatprep.subr.bf16.mxu0 0
    %1100 = vmatpush1.bf16.msra.mxu0 %v1051
    %1101 = vmatprep.subr.bf16.mxu0 0
    %1102 = vmatpush1.bf16.msra.mxu0 %v1052
    %1103 = vmatprep.subr.bf16.mxu0 0
    %1104 = vmatpush1.bf16.msra.mxu0 %v1053
    %1105 = vmatprep.subr.bf16.mxu0 0
    %1106 = vmatpush1.bf16.msra.mxu0 %v1054
    %1107 = vmatprep.subr.bf16.mxu0 0
    %1108 = vmatpush1.bf16.msra.mxu0 %v1055
    %1109 = vmatprep.subr.bf16.mxu0 0
    %1110 = vmatpush1.bf16.msra.mxu0 %v1056
    %1111 = vmatprep.subr.bf16.mxu0 0
    %1112 = vmatpush1.bf16.msra.mxu0 %v1057
    %1113 = vmatprep.subr.bf16.mxu0 0
    %1114 = vmatpush1.bf16.msra.mxu0 %v1058
    %1115 = vmatprep.subr.bf16.mxu0 0
    %1116 = vmatpush1.bf16.msra.mxu0 %v1059
    %1117 = vmatprep.subr.bf16.mxu0 0
    %1118 = vmatpush1.bf16.msra.mxu0 %v1060
    %1119 = vmatprep.subr.bf16.mxu0 0
    %1120 = vmatpush1.bf16.msra.mxu0 %v1061
    %1121 = vmatprep.subr.bf16.mxu0 0
    %1122 = vmatpush1.bf16.msra.mxu0 %v1062
    %1123 = vmatprep.subr.bf16.mxu0 0
    %1124 = vmatpush1.bf16.msra.mxu0 %v1063
    %1125 = vmatprep.subr.bf16.mxu0 0
    %1126 = vmatpush1.bf16.msra.mxu0 %v1064
    %1127 = vmatprep.subr.bf16.mxu0 0
    %1128 = vmatpush1.bf16.msra.mxu0 %v1065
    %1129 = vmatprep.subr.bf16.mxu0 0
    %1130 = vmatpush1.bf16.msra.mxu0 %v1066
    %1131 = vmatprep.mubr.bf16.mxu0 %v925
    %1132 = vmatmul.mubr.bf16.gmra.mrb[0].mxu0 %v924
    %v1133 = vpop.f32.mrb[0].mxu0
    %v1134 = vadd.f32 %v977, %v1133
    %v1135 = vpop.f32.mrb[0].mxu0
    %v1136 = vpop.f32.mrb[0].mxu0
    %v1137 = vadd.f32 %v977, %v1136
    %v1138 = vpop.f32.mrb[0].mxu0
    %1139 = vmatprep.mubr.bf16.mxu0 %v928
    %1140 = vmatmul.mubr.bf16.gmra.mrb[0].mxu0 %v927
    %v1141 = vpop.f32.mrb[0].mxu0
    %v1142 = vadd.f32 %v977, %v1141
    %v1143 = vpop.f32.mrb[0].mxu0
    %v1144 = vpop.f32.mrb[0].mxu0
    %v1145 = vadd.f32 %v977, %v1144
    %v1146 = vpop.f32.mrb[0].mxu0
    %1147 = vmatprep.mubr.bf16.mxu0 %v931
    %1148 = vmatmul.mubr.bf16.gmra.mrb[0].mxu0 %v930
    %v1149 = vpop.f32.mrb[0].mxu0
    %v1150 = vadd.f32 %v977, %v1149
    %v1151 = vpop.f32.mrb[0].mxu0
    %v1152 = vpop.f32.mrb[0].mxu0
    %v1153 = vadd.f32 %v977, %v1152
    %v1154 = vpop.f32.mrb[0].mxu0
    %1155 = vmatprep.mubr.bf16.mxu0 %v934
    %1156 = vmatmul.mubr.bf16.gmra.mrb[0].mxu0 %v933
    %v1157 = vpop.f32.mrb[0].mxu0
    %v1158 = vadd.f32 %v977, %v1157
    %v1159 = vpop.f32.mrb[0].mxu0
    %v1160 = vpop.f32.mrb[0].mxu0
    %v1161 = vpop.f32.mrb[0].mxu0
    %1162 = vdwg.mxu0
    %1163 = vmatprep.subr.bf16.mxu0 0
    %1164 = vmatpush1.bf16.msra.mxu0 %v1067
    %1165 = vmatprep.subr.bf16.mxu0 0
    %1166 = vmatpush1.bf16.msra.mxu0 %v1068
    %1167 = vmatprep.subr.bf16.mxu0 0
    %1168 = vmatpush1.bf16.msra.mxu0 0
    %1169 = vmatprep.subr.bf16.mxu0 0
    %1170 = vmatpush1.bf16.msra.mxu0 0
    %1171 = vmatprep.subr.bf16.mxu0 0
    %1172 = vmatpush1.bf16.msra.mxu0 0
    %1173 = vmatprep.subr.bf16.mxu0 0
    %1174 = vmatpush1.bf16.msra.mxu0 0
    %1175 = vmatprep.subr.bf16.mxu0 0
    %1176 = vmatpush1.bf16.msra.mxu0 0
    %1177 = vmatprep.subr.bf16.mxu0 0
    %1178 = vmatpush1.bf16.msra.mxu0 0
    %1179 = vmatprep.subr.bf16.mxu0 0
    %1180 = vmatpush1.bf16.msra.mxu0 0
    %1181 = vmatprep.subr.bf16.mxu0 0
    %1182 = vmatpush1.bf16.msra.mxu0 0
    %1183 = vmatprep.subr.bf16.mxu0 0
    %1184 = vmatpush1.bf16.msra.mxu0 0
    %1185 = vmatprep.subr.bf16.mxu0 0
    %1186 = vmatpush1.bf16.msra.mxu0 0
    %1187 = vmatprep.subr.bf16.mxu0 0
    %1188 = vmatpush1.bf16.msra.mxu0 0
    %1189 = vmatprep.subr.bf16.mxu0 0
    %1190 = vmatpush1.bf16.msra.mxu0 0
    %1191 = vmatprep.subr.bf16.mxu0 0
    %1192 = vmatpush1.bf16.msra.mxu0 0
    %1193 = vmatprep.subr.bf16.mxu0 0
    %1194 = vmatpush1.bf16.msra.mxu0 0
    %1195 = vmatprep.mubr.bf16.mxu0 0
    %1196 = vmatmul.mubr.bf16.gmra.mrb[0].mxu0 %v1088
    %v1197 = vpop.f32.mrb[0].mxu0
    %v1198 = vadd.f32 %v1134, %v1197
    %v1199 = vpop.f32.mrb[0].mxu0
    %v1200 = vpop.f32.mrb[0].mxu0
    %v1201 = vadd.f32 %v1137, %v1200
    %v1202 = vpop.f32.mrb[0].mxu0
    %1203 = vmatprep.mubr.bf16.mxu0 0
    %1204 = vmatmul.mubr.bf16.gmra.mrb[0].mxu0 %v1091
    %v1205 = vpop.f32.mrb[0].mxu0
    %v1206 = vadd.f32 %v1142, %v1205
    %v1207 = vpop.f32.mrb[0].mxu0
    %v1208 = vpop.f32.mrb[0].mxu0
    %v1209 = vadd.f32 %v1145, %v1208
    %v1210 = vpop.f32.mrb[0].mxu0
    %1211 = vmatprep.mubr.bf16.mxu0 0
    %1212 = vmatmul.mubr.bf16.gmra.mrb[0].mxu0 %v1094
    %v1213 = vpop.f32.mrb[0].mxu0
    %v1214 = vadd.f32 %v1150, %v1213
    %v1215 = vpop.f32.mrb[0].mxu0
    %v1216 = vpop.f32.mrb[0].mxu0
    %v1217 = vadd.f32 %v1153, %v1216
    %v1218 = vpop.f32.mrb[0].mxu0
    %1219 = vmatprep.mubr.bf16.mxu0 0
    %1220 = vmatmul.mubr.bf16.gmra.mrb[0].mxu0 %v1097
    %v1221 = vpop.f32.mrb[0].mxu0
    %v1222 = vadd.f32 %v1158, %v1221
    %v1223 = vpop.f32.mrb[0].mxu0
    %v1224 = vpop.f32.mrb[0].mxu0
    %v1225 = vpop.f32.mrb[0].mxu0
    %1226 = vdwg.mxu0
    %v1227 = vmax.f32 %v1198, 0.0
    %v1228 = vmax.f32 %v1201, 0.0
    %v1229 = vmax.f32 %v1206, 0.0
    %v1230 = vmax.f32 %v1209, 0.0
    %v1231 = vmax.f32 %v1214, 0.0
    %v1232 = vmax.f32 %v1217, 0.0
    %v1233 = vmax.f32 %v1222, 0.0
    %vm1234 = vcmask 523264
    %1235 = vst.msk [vmem:[#allocation4] sm:$0xff] %vm1234, %v1227
    %1236 = vst.msk [vmem:[#allocation4 + $0x8] sm:$0xff] %vm1234, %v1228
    %1237 = vst.msk [vmem:[#allocation4 + $0x10] sm:$0xff] %vm1234, %v1229
    %1238 = vst.msk [vmem:[#allocation4 + $0x18] sm:$0xff] %vm1234, %v1230
    %1239 = vst.msk [vmem:[#allocation4 + $0x20] sm:$0xff] %vm1234, %v1231
    %1240 = vst.msk [vmem:[#allocation4 + $0x28] sm:$0xff] %vm1234, %v1232
    %vm1241 = vcmask 517120
    %1242 = vst.msk [vmem:[#allocation4 + $0x30] sm:$0x3] %vm1241, %v1233
    %v1243 = vld [vmem:[#allocation4] sm:$0x3]
    %1244 = vst.msk [vmem:[#allocation5] sm:$0x3] %vm1241, %v1243
    %v1245 = vld [vmem:[#allocation4 + $0x2] sm:$0x3]
    %v1248 = vunpack.c.l.s4 1983009808
    %v1249 = vunpack.c.0.s8 %v1248
    %v1250 = vlaneseq
    %v1251 = vshrl.u32 %v1250, 7
    %v1252 = vsub.s32 %v1249, %v1251
    %v1253 = vrot.slane %v1245, %v1252
    %1254 = vrot.lane.b32.xlu0 %v1253, 64
    %v1255 = vpop.permute.xlu0 %1254
    %vm1257 = vcmask 1041920
    %1258 = vst.msk [vmem:[#allocation5] sm:$0x3] %vm1257, %v1255
    %v1259 = vld [vmem:[#allocation4 + $0x4] sm:$0x3]
    %1260 = vst.msk [vmem:[#allocation5 + $0x2] sm:$0x3] %vm1241, %v1259
    %v1261 = vld [vmem:[#allocation4 + $0x6] sm:$0x3]
    %v1264 = vunpack.c.l.s4 1983009808
    %v1265 = vunpack.c.0.s8 %v1264
    %v1266 = vlaneseq
    %v1267 = vshrl.u32 %v1266, 7
    %v1268 = vsub.s32 %v1265, %v1267
    %v1269 = vrot.slane %v1261, %v1268
    %1270 = vrot.lane.b32.xlu0 %v1269, 64
    %v1271 = vpop.permute.xlu0 %1270
    %1273 = vst.msk [vmem:[#allocation5 + $0x2] sm:$0x3] %vm1257, %v1271
    %v1274 = vld [vmem:[#allocation4 + $0x8] sm:$0x3]
    %1275 = vst.msk [vmem:[#allocation5 + $0x4] sm:$0x3] %vm1241, %v1274
    %v1276 = vld [vmem:[#allocation4 + $0xa] sm:$0x3]
    %v1279 = vunpack.c.l.s4 1983009808
    %v1280 = vunpack.c.0.s8 %v1279
    %v1281 = vlaneseq
    %v1282 = vshrl.u32 %v1281, 7
    %v1283 = vsub.s32 %v1280, %v1282
    %v1284 = vrot.slane %v1276, %v1283
    %1285 = vrot.lane.b32.xlu0 %v1284, 64
    %v1286 = vpop.permute.xlu0 %1285
    %1288 = vst.msk [vmem:[#allocation5 + $0x4] sm:$0x3] %vm1257, %v1286
    %v1289 = vld [vmem:[#allocation4 + $0xc] sm:$0x3]
    %1290 = vst.msk [vmem:[#allocation5 + $0x6] sm:$0x3] %vm1241, %v1289
    %v1291 = vld [vmem:[#allocation4 + $0xe] sm:$0x3]
    %v1294 = vunpack.c.l.s4 1983009808
    %v1295 = vunpack.c.0.s8 %v1294
    %v1296 = vlaneseq
    %v1297 = vshrl.u32 %v1296, 7
    %v1298 = vsub.s32 %v1295, %v1297
    %v1299 = vrot.slane %v1291, %v1298
    %1300 = vrot.lane.b32.xlu0 %v1299, 64
    %v1301 = vpop.permute.xlu0 %1300
    %1303 = vst.msk [vmem:[#allocation5 + $0x6] sm:$0x3] %vm1257, %v1301
    %v1304 = vld [vmem:[#allocation4 + $0x10] sm:$0x3]
    %1305 = vst.msk [vmem:[#allocation5 + $0x8] sm:$0x3] %vm1241, %v1304
    %v1306 = vld [vmem:[#allocation4 + $0x12] sm:$0x3]
    %v1309 = vunpack.c.l.s4 1983009808
    %v1310 = vunpack.c.0.s8 %v1309
    %v1311 = vlaneseq
    %v1312 = vshrl.u32 %v1311, 7
    %v1313 = vsub.s32 %v1310, %v1312
    %v1314 = vrot.slane %v1306, %v1313
    %1315 = vrot.lane.b32.xlu0 %v1314, 64
    %v1316 = vpop.permute.xlu0 %1315
    %1318 = vst.msk [vmem:[#allocation5 + $0x8] sm:$0x3] %vm1257, %v1316
    %v1319 = vld [vmem:[#allocation4 + $0x14] sm:$0x3]
    %1320 = vst.msk [vmem:[#allocation5 + $0xa] sm:$0x3] %vm1241, %v1319
    %v1321 = vld [vmem:[#allocation4 + $0x16] sm:$0x3]
    %v1324 = vunpack.c.l.s4 1983009808
    %v1325 = vunpack.c.0.s8 %v1324
    %v1326 = vlaneseq
    %v1327 = vshrl.u32 %v1326, 7
    %v1328 = vsub.s32 %v1325, %v1327
    %v1329 = vrot.slane %v1321, %v1328
    %1330 = vrot.lane.b32.xlu0 %v1329, 64
    %v1331 = vpop.permute.xlu0 %1330
    %1333 = vst.msk [vmem:[#allocation5 + $0xa] sm:$0x3] %vm1257, %v1331
    %v1334 = vld [vmem:[#allocation4 + $0x18] sm:$0x3]
    %1335 = vst.msk [vmem:[#allocation5 + $0xc] sm:$0x3] %vm1241, %v1334
    %v1336 = vld [vmem:[#allocation4 + $0x1a] sm:$0x3]
    %v1339 = vunpack.c.l.s4 1983009808
    %v1340 = vunpack.c.0.s8 %v1339
    %v1341 = vlaneseq
    %v1342 = vshrl.u32 %v1341, 7
    %v1343 = vsub.s32 %v1340, %v1342
    %v1344 = vrot.slane %v1336, %v1343
    %1345 = vrot.lane.b32.xlu0 %v1344, 64
    %v1346 = vpop.permute.xlu0 %1345
    %1348 = vst.msk [vmem:[#allocation5 + $0xc] sm:$0x3] %vm1257, %v1346
    %v1349 = vld [vmem:[#allocation4 + $0x1c] sm:$0x3]
    %1350 = vst.msk [vmem:[#allocation5 + $0xe] sm:$0x3] %vm1241, %v1349
    %v1351 = vld [vmem:[#allocation4 + $0x1e] sm:$0x3]
    %v1354 = vunpack.c.l.s4 1983009808
    %v1355 = vunpack.c.0.s8 %v1354
    %v1356 = vlaneseq
    %v1357 = vshrl.u32 %v1356, 7
    %v1358 = vsub.s32 %v1355, %v1357
    %v1359 = vrot.slane %v1351, %v1358
    %1360 = vrot.lane.b32.xlu0 %v1359, 64
    %v1361 = vpop.permute.xlu0 %1360
    %1363 = vst.msk [vmem:[#allocation5 + $0xe] sm:$0x3] %vm1257, %v1361
    %v1364 = vld [vmem:[#allocation4 + $0x20] sm:$0x3]
    %1365 = vst.msk [vmem:[#allocation5 + $0x10] sm:$0x3] %vm1241, %v1364
    %v1366 = vld [vmem:[#allocation4 + $0x22] sm:$0x3]
    %v1369 = vunpack.c.l.s4 1983009808
    %v1370 = vunpack.c.0.s8 %v1369
    %v1371 = vlaneseq
    %v1372 = vshrl.u32 %v1371, 7
    %v1373 = vsub.s32 %v1370, %v1372
    %v1374 = vrot.slane %v1366, %v1373
    %1375 = vrot.lane.b32.xlu0 %v1374, 64
    %v1376 = vpop.permute.xlu0 %1375
    %1378 = vst.msk [vmem:[#allocation5 + $0x10] sm:$0x3] %vm1257, %v1376
    %v1379 = vld [vmem:[#allocation4 + $0x24] sm:$0x3]
    %1380 = vst.msk [vmem:[#allocation5 + $0x12] sm:$0x3] %vm1241, %v1379
    %v1381 = vld [vmem:[#allocation4 + $0x26] sm:$0x3]
    %v1384 = vunpack.c.l.s4 1983009808
    %v1385 = vunpack.c.0.s8 %v1384
    %v1386 = vlaneseq
    %v1387 = vshrl.u32 %v1386, 7
    %v1388 = vsub.s32 %v1385, %v1387
    %v1389 = vrot.slane %v1381, %v1388
    %1390 = vrot.lane.b32.xlu0 %v1389, 64
    %v1391 = vpop.permute.xlu0 %1390
    %1393 = vst.msk [vmem:[#allocation5 + $0x12] sm:$0x3] %vm1257, %v1391
    %v1394 = vld [vmem:[#allocation4 + $0x28] sm:$0x3]
    %1395 = vst.msk [vmem:[#allocation5 + $0x14] sm:$0x3] %vm1241, %v1394
    %v1396 = vld [vmem:[#allocation4 + $0x2a] sm:$0x3]
    %v1399 = vunpack.c.l.s4 1983009808
    %v1400 = vunpack.c.0.s8 %v1399
    %v1401 = vlaneseq
    %v1402 = vshrl.u32 %v1401, 7
    %v1403 = vsub.s32 %v1400, %v1402
    %v1404 = vrot.slane %v1396, %v1403
    %1405 = vrot.lane.b32.xlu0 %v1404, 64
    %v1406 = vpop.permute.xlu0 %1405
    %1408 = vst.msk [vmem:[#allocation5 + $0x14] sm:$0x3] %vm1257, %v1406
    %v1409 = vld [vmem:[#allocation4 + $0x2c] sm:$0x3]
    %1410 = vst.msk [vmem:[#allocation5 + $0x16] sm:$0x3] %vm1241, %v1409
    %v1411 = vld [vmem:[#allocation4 + $0x2e] sm:$0x3]
    %v1414 = vunpack.c.l.s4 1983009808
    %v1415 = vunpack.c.0.s8 %v1414
    %v1416 = vlaneseq
    %v1417 = vshrl.u32 %v1416, 7
    %v1418 = vsub.s32 %v1415, %v1417
    %v1419 = vrot.slane %v1411, %v1418
    %1420 = vrot.lane.b32.xlu0 %v1419, 64
    %v1421 = vpop.permute.xlu0 %1420
    %1423 = vst.msk [vmem:[#allocation5 + $0x16] sm:$0x3] %vm1257, %v1421
    %v1424 = vld [vmem:[#allocation4 + $0x30] sm:$0x3]
    %1425 = vst.msk [vmem:[#allocation5 + $0x18] sm:$0x3] %vm1241, %v1424
    %v1426 = vld [vmem:[#allocation5] sm:$0xff]
    %v1427 = vld [vmem:[#allocation5 + $0x8] sm:$0xff]
    %v1428 = vld [vmem:[#allocation5 + $0x10] sm:$0xff]
    %v1429 = vld [vmem:[#allocation5 + $0x18] sm:$0x3]
    %v1434 = vcombine.high %v1426, %v1426
    %v1436 = vunpack.c.l.s4 1983009808
    %v1437 = vunpack.c.0.s8 %v1436
    %v1438 = vlaneseq
    %v1439 = vshrl.u32 %v1438, 7
    %v1440 = vsub.s32 %v1437, %v1439
    %v1441 = vrot.slane %v1426, %v1440
    %v1443 = vunpack.c.l.s4 1983009808
    %v1444 = vunpack.c.0.s8 %v1443
    %v1445 = vlaneseq
    %v1446 = vshrl.u32 %v1445, 7
    %v1447 = vsub.s32 %v1444, %v1446
    %v1448 = vrot.slane %v1434, %v1447
    %v1449 = vcombine.high %v1441, %v1441
    %v1450 = vcombine.high %v1448, %v1448
    %v1451 = vcombine.high %v1427, %v1427
    %v1453 = vunpack.c.l.s4 1983009808
    %v1454 = vunpack.c.0.s8 %v1453
    %v1455 = vlaneseq
    %v1456 = vshrl.u32 %v1455, 7
    %v1457 = vsub.s32 %v1454, %v1456
    %v1458 = vrot.slane %v1427, %v1457
    %v1460 = vunpack.c.l.s4 1983009808
    %v1461 = vunpack.c.0.s8 %v1460
    %v1462 = vlaneseq
    %v1463 = vshrl.u32 %v1462, 7
    %v1464 = vsub.s32 %v1461, %v1463
    %v1465 = vrot.slane %v1451, %v1464
    %v1466 = vcombine.high %v1458, %v1458
    %v1467 = vcombine.high %v1465, %v1465
    %v1468 = vcombine.high %v1428, %v1428
    %v1470 = vunpack.c.l.s4 1983009808
    %v1471 = vunpack.c.0.s8 %v1470
    %v1472 = vlaneseq
    %v1473 = vshrl.u32 %v1472, 7
    %v1474 = vsub.s32 %v1471, %v1473
    %v1475 = vrot.slane %v1428, %v1474
    %v1477 = vunpack.c.l.s4 1983009808
    %v1478 = vunpack.c.0.s8 %v1477
    %v1479 = vlaneseq
    %v1480 = vshrl.u32 %v1479, 7
    %v1481 = vsub.s32 %v1478, %v1480
    %v1482 = vrot.slane %v1468, %v1481
    %v1483 = vcombine.high %v1475, %v1475
    %v1484 = vcombine.high %v1482, %v1482
    %v1486 = vunpack.c.l.s4 1983009808
    %v1487 = vunpack.c.0.s8 %v1486
    %v1488 = vlaneseq
    %v1489 = vshrl.u32 %v1488, 7
    %v1490 = vsub.s32 %v1487, %v1489
    %v1491 = vrot.slane %v1429, %v1490
    %v1505 = vpack.c.bf16 %v1441, %v1441
    %v1506 = vpack.c.bf16 %v1449, %v1449
    %v1507 = vpack.c.bf16 %v1448, %v1448
    %v1508 = vpack.c.bf16 %v1450, %v1450
    %v1509 = vpack.c.bf16 %v1458, %v1458
    %v1510 = vpack.c.bf16 %v1466, %v1466
    %v1511 = vpack.c.bf16 %v1465, %v1465
    %v1512 = vpack.c.bf16 %v1467, %v1467
    %v1513 = vpack.c.bf16 %v1475, %v1475
    %v1514 = vpack.c.bf16 %v1483, %v1483
    %v1515 = vpack.c.bf16 %v1482, %v1482
    %v1516 = vpack.c.bf16 %v1484, %v1484
    %v1517 = vpack.c.bf16 %v1491, %v1491
    %v1518 = vld [vmem:[#allocation9] sm:$0xf]
    %v1519 = vld [vmem:[#allocation9 + $0x4] sm:$0xf]
    %v1520 = vld [vmem:[#allocation9 + $0x8] sm:$0xf]
    %v1521 = vld [vmem:[#allocation9 + $0xc] sm:$0xf]
    %v1522 = vld [vmem:[#allocation9 + $0x10] sm:$0xf]
    %v1523 = vld [vmem:[#allocation9 + $0x14] sm:$0xf]
    %v1524 = vld [vmem:[#allocation9 + $0x18] sm:$0xf]
    %v1525 = vld [vmem:[#allocation9 + $0x1c] sm:$0xf]
    %v1526 = vld [vmem:[#allocation9 + $0x20] sm:$0xf]
    %v1527 = vld [vmem:[#allocation9 + $0x24] sm:$0xf]
    %v1528 = vld [vmem:[#allocation9 + $0x28] sm:$0xf]
    %v1529 = vld [vmem:[#allocation9 + $0x2c] sm:$0xf]
    %v1530 = vld [vmem:[#allocation9 + $0x30] sm:$0xf]
    %v1531 = vld [vmem:[#allocation9 + $0x34] sm:$0xf]
    %v1532 = vld [vmem:[#allocation9 + $0x38] sm:$0xf]
    %v1533 = vld [vmem:[#allocation9 + $0x3c] sm:$0xf]
    %v1534 = vld [vmem:[#allocation9 + $0x40] sm:$0xf]
    %v1535 = vld [vmem:[#allocation9 + $0x44] sm:$0xf]
    %v1536 = vld [vmem:[#allocation9 + $0x48] sm:$0xf]
    %v1537 = vld [vmem:[#allocation9 + $0x4c] sm:$0xf]
    %v1538 = vld [vmem:[#allocation9 + $0x50] sm:$0xf]
    %v1539 = vld [vmem:[#allocation9 + $0x54] sm:$0xf]
    %v1540 = vld [vmem:[#allocation9 + $0x58] sm:$0xf]
    %v1541 = vld [vmem:[#allocation9 + $0x5c] sm:$0xf]
    %v1542 = vld [vmem:[#allocation9 + $0x60] sm:$0xf]
    %v1543 = vld [vmem:[#allocation9 + $0x64] sm:$0xf]
    %v1544 = vld [vmem:[#allocation9 + $0x68] sm:$0xf]
    %v1545 = vld [vmem:[#allocation9 + $0x6c] sm:$0xf]
    %v1546 = vld [vmem:[#allocation9 + $0x70] sm:$0xf]
    %v1547 = vld [vmem:[#allocation9 + $0x74] sm:$0xf]
    %v1548 = vld [vmem:[#allocation9 + $0x78] sm:$0xf]
    %v1549 = vld [vmem:[#allocation9 + $0x7c] sm:$0xf]
    %v1550 = vld [vmem:[#allocation9 + $0x80] sm:$0xf]
    %v1551 = vld [vmem:[#allocation9 + $0x84] sm:$0xf]
    %v1552 = vld [vmem:[#allocation9 + $0x88] sm:$0xf]
    %v1553 = vld [vmem:[#allocation9 + $0x8c] sm:$0xf]
    %v1554 = vld [vmem:[#allocation9 + $0x90] sm:$0xf]
    %v1555 = vld [vmem:[#allocation9 + $0x94] sm:$0xf]
    %v1556 = vld [vmem:[#allocation9 + $0x98] sm:$0xf]
    %v1557 = vld [vmem:[#allocation9 + $0x9c] sm:$0xf]
    %v1558 = vld [vmem:[#allocation9 + $0xa0] sm:$0xf]
    %v1559 = vld [vmem:[#allocation9 + $0xa4] sm:$0xf]
    %v1560 = vld [vmem:[#allocation9 + $0xa8] sm:$0xf]
    %v1561 = vld [vmem:[#allocation9 + $0xac] sm:$0xf]
    %v1562 = vld [vmem:[#allocation9 + $0xb0] sm:$0xf]
    %v1563 = vld [vmem:[#allocation9 + $0xb4] sm:$0xf]
    %v1564 = vld [vmem:[#allocation9 + $0xb8] sm:$0xf]
    %v1565 = vld [vmem:[#allocation9 + $0xbc] sm:$0xf]
    %v1566 = vld [vmem:[#allocation9 + $0xc0] sm:$0xf]
    %v1567 = vld [vmem:[#allocation9 + $0xc4] sm:$0xf]
    %v1568 = vld [vmem:[#allocation9 + $0xc8] sm:$0xf]
    %v1569 = vld [vmem:[#allocation9 + $0xcc] sm:$0xf]
    %v1570 = vld [vmem:[#allocation9 + $0xd0] sm:$0xf]
    %v1571 = vld [vmem:[#allocation9 + $0xd4] sm:$0xf]
    %v1572 = vld [vmem:[#allocation9 + $0xd8] sm:$0xf]
    %v1573 = vld [vmem:[#allocation9 + $0xdc] sm:$0xf]
    %v1574 = vld [vmem:[#allocation9 + $0xe0] sm:$0xf]
    %v1575 = vld [vmem:[#allocation9 + $0xe4] sm:$0xf]
    %v1576 = vld [vmem:[#allocation9 + $0xe8] sm:$0xf]
    %v1577 = vld [vmem:[#allocation9 + $0xec] sm:$0xf]
    %v1578 = vld [vmem:[#allocation9 + $0xf0] sm:$0xf]
    %v1579 = vld [vmem:[#allocation9 + $0xf4] sm:$0xf]
    %v1580 = vld [vmem:[#allocation9 + $0xf8] sm:$0xf]
    %v1581 = vld [vmem:[#allocation9 + $0xfc] sm:$0xf]
    %v1582 = vld [vmem:[#allocation9 + $0x100] sm:$0xf]
    %v1583 = vld [vmem:[#allocation9 + $0x104] sm:$0xf]
    %v1584 = vld [vmem:[#allocation9 + $0x108] sm:$0xf]
    %v1585 = vld [vmem:[#allocation9 + $0x10c] sm:$0xf]
    %v1586 = vld [vmem:[#allocation9 + $0x110] sm:$0xf]
    %v1587 = vld [vmem:[#allocation9 + $0x114] sm:$0xf]
    %v1588 = vld [vmem:[#allocation9 + $0x118] sm:$0xf]
    %v1589 = vld [vmem:[#allocation9 + $0x11c] sm:$0xf]
    %v1590 = vld [vmem:[#allocation9 + $0x120] sm:$0xf]
    %v1591 = vld [vmem:[#allocation9 + $0x124] sm:$0xf]
    %v1592 = vld [vmem:[#allocation9 + $0x128] sm:$0xf]
    %v1593 = vld [vmem:[#allocation9 + $0x12c] sm:$0xf]
    %v1594 = vld [vmem:[#allocation9 + $0x130] sm:$0xf]
    %v1595 = vld [vmem:[#allocation9 + $0x134] sm:$0xf]
    %v1596 = vld [vmem:[#allocation9 + $0x138] sm:$0xf]
    %v1597 = vld [vmem:[#allocation9 + $0x13c] sm:$0xf]
    %v1598 = vld [vmem:[#allocation9 + $0x140] sm:$0xf]
    %v1599 = vld [vmem:[#allocation9 + $0x144] sm:$0xf]
    %v1600 = vld [vmem:[#allocation9 + $0x148] sm:$0xf]
    %v1601 = vld [vmem:[#allocation9 + $0x14c] sm:$0xf]
    %v1602 = vld [vmem:[#allocation9 + $0x150] sm:$0xf]
    %v1603 = vld [vmem:[#allocation9 + $0x154] sm:$0xf]
    %v1604 = vld [vmem:[#allocation9 + $0x158] sm:$0xf]
    %v1605 = vld [vmem:[#allocation9 + $0x15c] sm:$0xf]
    %v1606 = vld [vmem:[#allocation9 + $0x160] sm:$0xf]
    %v1607 = vld [vmem:[#allocation9 + $0x164] sm:$0xf]
    %v1608 = vld [vmem:[#allocation9 + $0x168] sm:$0xf]
    %v1609 = vld [vmem:[#allocation9 + $0x16c] sm:$0xf]
    %v1610 = vld [vmem:[#allocation9 + $0x170] sm:$0xf]
    %v1611 = vld [vmem:[#allocation9 + $0x174] sm:$0xf]
    %v1612 = vld [vmem:[#allocation9 + $0x178] sm:$0xf]
    %v1613 = vld [vmem:[#allocation9 + $0x17c] sm:$0xf]
    %v1614 = vld [vmem:[#allocation9 + $0x180] sm:$0xf]
    %v1615 = vld [vmem:[#allocation9 + $0x184] sm:$0xf]
    %v1616 = vld [vmem:[#allocation9 + $0x188] sm:$0xf]
    %v1617 = vld [vmem:[#allocation9 + $0x18c] sm:$0xf]
    %v1618 = vld [vmem:[#allocation9 + $0x190] sm:$0xf]
    %v1619 = vld [vmem:[#allocation9 + $0x194] sm:$0xf]
    %v1620 = vld [vmem:[#allocation9 + $0x198] sm:$0xf]
    %v1621 = vld [vmem:[#allocation9 + $0x19c] sm:$0xf]
    %v1622 = vld [vmem:[#allocation9 + $0x1a0] sm:$0xf]
    %v1623 = vld [vmem:[#allocation9 + $0x1a4] sm:$0xf]
    %v1624 = vld [vmem:[#allocation9 + $0x1a8] sm:$0xf]
    %v1625 = vld [vmem:[#allocation9 + $0x1ac] sm:$0xf]
    %v1626 = vld [vmem:[#allocation9 + $0x1b0] sm:$0xf]
    %v1627 = vld [vmem:[#allocation9 + $0x1b4] sm:$0xf]
    %v1628 = vld [vmem:[#allocation9 + $0x1b8] sm:$0xf]
    %v1629 = vld [vmem:[#allocation9 + $0x1bc] sm:$0xf]
    %v1630 = vld [vmem:[#allocation9 + $0x1c0] sm:$0xf]
    %v1631 = vld [vmem:[#allocation9 + $0x1c4] sm:$0xf]
    %v1632 = vld [vmem:[#allocation9 + $0x1c8] sm:$0xf]
    %v1633 = vld [vmem:[#allocation9 + $0x1cc] sm:$0xf]
    %v1634 = vld [vmem:[#allocation9 + $0x1d0] sm:$0xf]
    %v1635 = vld [vmem:[#allocation9 + $0x1d4] sm:$0xf]
    %v1636 = vld [vmem:[#allocation9 + $0x1d8] sm:$0xf]
    %v1637 = vld [vmem:[#allocation9 + $0x1dc] sm:$0xf]
    %v1638 = vld [vmem:[#allocation9 + $0x1e0] sm:$0xf]
    %v1639 = vld [vmem:[#allocation9 + $0x1e4] sm:$0xf]
    %v1640 = vld [vmem:[#allocation9 + $0x1e8] sm:$0xf]
    %v1641 = vld [vmem:[#allocation9 + $0x1ec] sm:$0xf]
    %v1642 = vld [vmem:[#allocation9 + $0x1f0] sm:$0xf]
    %v1643 = vld [vmem:[#allocation9 + $0x1f4] sm:$0xf]
    %v1644 = vld [vmem:[#allocation9 + $0x1f8] sm:$0xf]
    %v1645 = vld [vmem:[#allocation9 + $0x1fc] sm:$0xf]
    %v1646 = vld [vmem:[#allocation9 + $0x200] sm:$0xf]
    %v1647 = vld [vmem:[#allocation9 + $0x204] sm:$0xf]
    %v1648 = vld [vmem:[#allocation9 + $0x208] sm:$0xf]
    %v1649 = vld [vmem:[#allocation9 + $0x20c] sm:$0xf]
    %v1650 = vld [vmem:[#allocation9 + $0x210] sm:$0xf]
    %v1651 = vld [vmem:[#allocation9 + $0x214] sm:$0xf]
    %v1652 = vld [vmem:[#allocation9 + $0x218] sm:$0xf]
    %v1653 = vld [vmem:[#allocation9 + $0x21c] sm:$0xf]
    %v1654 = vld [vmem:[#allocation9 + $0x220] sm:$0xf]
    %v1655 = vld [vmem:[#allocation9 + $0x224] sm:$0xf]
    %v1656 = vld [vmem:[#allocation9 + $0x228] sm:$0xf]
    %v1657 = vld [vmem:[#allocation9 + $0x22c] sm:$0xf]
    %v1658 = vld [vmem:[#allocation9 + $0x230] sm:$0xf]
    %v1659 = vld [vmem:[#allocation9 + $0x234] sm:$0xf]
    %v1660 = vld [vmem:[#allocation9 + $0x238] sm:$0xf]
    %v1661 = vld [vmem:[#allocation9 + $0x23c] sm:$0xf]
    %v1662 = vld [vmem:[#allocation9 + $0x240] sm:$0xf]
    %v1663 = vld [vmem:[#allocation9 + $0x244] sm:$0xf]
    %v1664 = vld [vmem:[#allocation9 + $0x248] sm:$0xf]
    %v1665 = vld [vmem:[#allocation9 + $0x24c] sm:$0xf]
    %v1666 = vld [vmem:[#allocation9 + $0x250] sm:$0xf]
    %v1667 = vld [vmem:[#allocation9 + $0x254] sm:$0xf]
    %v1668 = vld [vmem:[#allocation9 + $0x258] sm:$0xf]
    %v1669 = vld [vmem:[#allocation9 + $0x25c] sm:$0xf]
    %v1670 = vld [vmem:[#allocation9 + $0x260] sm:$0xf]
    %v1671 = vld [vmem:[#allocation9 + $0x264] sm:$0xf]
    %v1672 = vld [vmem:[#allocation9 + $0x268] sm:$0xf]
    %v1673 = vld [vmem:[#allocation9 + $0x26c] sm:$0xf]
    %v1674 = vld [vmem:[#allocation9 + $0x270] sm:$0xf]
    %v1675 = vld [vmem:[#allocation9 + $0x274] sm:$0xf]
    %v1676 = vld [vmem:[#allocation9 + $0x278] sm:$0xf]
    %v1677 = vld [vmem:[#allocation9 + $0x27c] sm:$0xf]
    %v1678 = vld [vmem:[#allocation9 + $0x280] sm:$0xf]
    %v1679 = vld [vmem:[#allocation9 + $0x284] sm:$0xf]
    %v1680 = vld [vmem:[#allocation9 + $0x288] sm:$0xf]
    %v1681 = vld [vmem:[#allocation9 + $0x28c] sm:$0xf]
    %v1682 = vld [vmem:[#allocation9 + $0x290] sm:$0xf]
    %v1683 = vld [vmem:[#allocation9 + $0x294] sm:$0xf]
    %v1684 = vld [vmem:[#allocation9 + $0x298] sm:$0xf]
    %v1685 = vld [vmem:[#allocation9 + $0x29c] sm:$0xf]
    %v1686 = vld [vmem:[#allocation9 + $0x2a0] sm:$0xf]
    %v1687 = vld [vmem:[#allocation9 + $0x2a4] sm:$0xf]
    %v1688 = vld [vmem:[#allocation9 + $0x2a8] sm:$0xf]
    %v1689 = vld [vmem:[#allocation9 + $0x2ac] sm:$0xf]
    %v1690 = vld [vmem:[#allocation9 + $0x2b0] sm:$0xf]
    %v1691 = vld [vmem:[#allocation9 + $0x2b4] sm:$0xf]
    %v1692 = vld [vmem:[#allocation9 + $0x2b8] sm:$0xf]
    %v1693 = vld [vmem:[#allocation9 + $0x2bc] sm:$0xf]
    %v1694 = vld [vmem:[#allocation9 + $0x2c0] sm:$0xf]
    %v1695 = vld [vmem:[#allocation9 + $0x2c4] sm:$0xf]
    %v1696 = vld [vmem:[#allocation9 + $0x2c8] sm:$0xf]
    %v1697 = vld [vmem:[#allocation9 + $0x2cc] sm:$0xf]
    %v1698 = vld [vmem:[#allocation9 + $0x2d0] sm:$0xf]
    %v1699 = vld [vmem:[#allocation9 + $0x2d4] sm:$0xf]
    %v1700 = vld [vmem:[#allocation9 + $0x2d8] sm:$0xf]
    %v1701 = vld [vmem:[#allocation9 + $0x2dc] sm:$0xf]
    %v1702 = vld [vmem:[#allocation9 + $0x2e0] sm:$0xf]
    %v1703 = vld [vmem:[#allocation9 + $0x2e4] sm:$0xf]
    %v1704 = vld [vmem:[#allocation9 + $0x2e8] sm:$0xf]
    %v1705 = vld [vmem:[#allocation9 + $0x2ec] sm:$0xf]
    %v1706 = vld [vmem:[#allocation9 + $0x2f0] sm:$0xf]
    %v1707 = vld [vmem:[#allocation9 + $0x2f4] sm:$0xf]
    %v1708 = vld [vmem:[#allocation9 + $0x2f8] sm:$0xf]
    %v1709 = vld [vmem:[#allocation9 + $0x2fc] sm:$0xf]
    %v1710 = vld [vmem:[#allocation9 + $0x300] sm:$0xf]
    %v1711 = vld [vmem:[#allocation9 + $0x304] sm:$0xf]
    %v1712 = vld [vmem:[#allocation9 + $0x308] sm:$0xf]
    %v1713 = vld [vmem:[#allocation9 + $0x30c] sm:$0xf]
    %v1714 = vld [vmem:[#allocation9 + $0x310] sm:$0xf]
    %v1715 = vld [vmem:[#allocation9 + $0x314] sm:$0xf]
    %v1716 = vld [vmem:[#allocation9 + $0x318] sm:$0xf]
    %v1717 = vld [vmem:[#allocation9 + $0x31c] sm:$0xf]
    %v1718 = vld [vmem:[%s7] sm:$0x1]
    %v1720 = vlaneseq
    %v1721 = vshrl.u32 %v1720, 7
    %v1722 = vsub.s32 0, %v1721
    %v1723 = vrot.slane %v1718, %v1722
    %v1925 = vunpack.c.l.b16 %v1518
    %v1926 = vunpack.c.l.b16 %v1519
    %v1927 = vunpack.c.l.b16 %v1520
    %v1928 = vunpack.c.l.b16 %v1521
    %v1929 = vunpack.c.l.b16 %v1522
    %v1930 = vunpack.c.l.b16 %v1523
    %v1931 = vunpack.c.l.b16 %v1524
    %v1932 = vunpack.c.l.b16 %v1525
    %v1933 = vunpack.c.l.b16 %v1526
    %v1934 = vunpack.c.l.b16 %v1527
    %v1935 = vunpack.c.l.b16 %v1528
    %v1936 = vunpack.c.l.b16 %v1529
    %v1937 = vunpack.c.l.b16 %v1530
    %v1938 = vunpack.c.l.b16 %v1531
    %v1939 = vunpack.c.l.b16 %v1532
    %v1940 = vunpack.c.l.b16 %v1533
    %v1941 = vunpack.c.l.b16 %v1534
    %v1942 = vunpack.c.l.b16 %v1535
    %v1943 = vunpack.c.l.b16 %v1536
    %v1944 = vunpack.c.l.b16 %v1537
    %v1945 = vunpack.c.l.b16 %v1538
    %v1946 = vunpack.c.l.b16 %v1539
    %v1947 = vunpack.c.l.b16 %v1540
    %v1948 = vunpack.c.l.b16 %v1541
    %v1949 = vunpack.c.l.b16 %v1542
    %v1950 = vunpack.c.l.b16 %v1543
    %v1951 = vunpack.c.l.b16 %v1544
    %v1952 = vunpack.c.l.b16 %v1545
    %v1953 = vunpack.c.l.b16 %v1546
    %v1954 = vunpack.c.l.b16 %v1547
    %v1955 = vunpack.c.l.b16 %v1548
    %v1956 = vunpack.c.l.b16 %v1549
    %v1957 = vunpack.c.l.b16 %v1550
    %v1958 = vunpack.c.l.b16 %v1551
    %v1959 = vunpack.c.l.b16 %v1552
    %v1960 = vunpack.c.l.b16 %v1553
    %v1961 = vunpack.c.l.b16 %v1554
    %v1962 = vunpack.c.l.b16 %v1555
    %v1963 = vunpack.c.l.b16 %v1556
    %v1964 = vunpack.c.l.b16 %v1557
    %v1965 = vunpack.c.l.b16 %v1558
    %v1966 = vunpack.c.l.b16 %v1559
    %v1967 = vunpack.c.l.b16 %v1560
    %v1968 = vunpack.c.l.b16 %v1561
    %v1969 = vunpack.c.l.b16 %v1562
    %v1970 = vunpack.c.l.b16 %v1563
    %v1971 = vunpack.c.l.b16 %v1564
    %v1972 = vunpack.c.l.b16 %v1565
    %v1973 = vunpack.c.l.b16 %v1566
    %v1974 = vunpack.c.l.b16 %v1567
    %v1975 = vunpack.c.l.b16 %v1568
    %v1976 = vunpack.c.l.b16 %v1569
    %v1977 = vunpack.c.l.b16 %v1570
    %v1978 = vunpack.c.l.b16 %v1571
    %v1979 = vunpack.c.l.b16 %v1572
    %v1980 = vunpack.c.l.b16 %v1573
    %v1981 = vunpack.c.l.b16 %v1574
    %v1982 = vunpack.c.l.b16 %v1575
    %v1983 = vunpack.c.l.b16 %v1576
    %v1984 = vunpack.c.l.b16 %v1577
    %v1985 = vunpack.c.l.b16 %v1578
    %v1986 = vunpack.c.l.b16 %v1579
    %v1987 = vunpack.c.l.b16 %v1580
    %v1988 = vunpack.c.l.b16 %v1581
    %v1989 = vunpack.c.l.b16 %v1582
    %v1990 = vunpack.c.l.b16 %v1583
    %v1991 = vunpack.c.l.b16 %v1584
    %v1992 = vunpack.c.l.b16 %v1585
    %v1993 = vunpack.c.l.b16 %v1586
    %v1994 = vunpack.c.l.b16 %v1587
    %v1995 = vunpack.c.l.b16 %v1588
    %v1996 = vunpack.c.l.b16 %v1589
    %v1997 = vunpack.c.l.b16 %v1590
    %v1998 = vunpack.c.l.b16 %v1591
    %v1999 = vunpack.c.l.b16 %v1592
    %v2000 = vunpack.c.l.b16 %v1593
    %v2001 = vunpack.c.l.b16 %v1594
    %v2002 = vunpack.c.l.b16 %v1595
    %v2003 = vunpack.c.l.b16 %v1596
    %v2004 = vunpack.c.l.b16 %v1597
    %v2005 = vunpack.c.l.b16 %v1598
    %v2006 = vunpack.c.l.b16 %v1599
    %v2007 = vunpack.c.l.b16 %v1600
    %v2008 = vunpack.c.l.b16 %v1601
    %v2009 = vunpack.c.l.b16 %v1602
    %v2010 = vunpack.c.l.b16 %v1603
    %v2011 = vunpack.c.l.b16 %v1604
    %v2012 = vunpack.c.l.b16 %v1605
    %v2013 = vunpack.c.l.b16 %v1606
    %v2014 = vunpack.c.l.b16 %v1607
    %v2015 = vunpack.c.l.b16 %v1608
    %v2016 = vunpack.c.l.b16 %v1609
    %v2017 = vunpack.c.l.b16 %v1610
    %v2018 = vunpack.c.l.b16 %v1611
    %v2019 = vunpack.c.l.b16 %v1612
    %v2020 = vunpack.c.l.b16 %v1613
    %v2021 = vunpack.c.l.b16 %v1614
    %v2022 = vunpack.c.l.b16 %v1615
    %v2023 = vunpack.c.l.b16 %v1616
    %v2024 = vunpack.c.l.b16 %v1617
    %v2025 = vunpack.c.l.b16 %v1618
    %v2026 = vunpack.c.l.b16 %v1619
    %v2027 = vunpack.c.l.b16 %v1620
    %v2028 = vunpack.c.l.b16 %v1621
    %v2029 = vunpack.c.l.b16 %v1622
    %v2030 = vunpack.c.l.b16 %v1623
    %v2031 = vunpack.c.l.b16 %v1624
    %v2032 = vunpack.c.l.b16 %v1625
    %v2033 = vunpack.c.l.b16 %v1626
    %v2034 = vunpack.c.l.b16 %v1627
    %v2035 = vunpack.c.l.b16 %v1628
    %v2036 = vunpack.c.l.b16 %v1629
    %v2037 = vunpack.c.l.b16 %v1630
    %v2038 = vunpack.c.l.b16 %v1631
    %v2039 = vunpack.c.l.b16 %v1632
    %v2040 = vunpack.c.l.b16 %v1633
    %v2041 = vunpack.c.l.b16 %v1634
    %v2042 = vunpack.c.l.b16 %v1635
    %v2043 = vunpack.c.l.b16 %v1636
    %v2044 = vunpack.c.l.b16 %v1637
    %v2045 = vunpack.c.l.b16 %v1638
    %v2046 = vunpack.c.l.b16 %v1639
    %v2047 = vunpack.c.l.b16 %v1640
    %v2048 = vunpack.c.l.b16 %v1641
    %v2049 = vunpack.c.l.b16 %v1642
    %v2050 = vunpack.c.l.b16 %v1643
    %v2051 = vunpack.c.l.b16 %v1644
    %v2052 = vunpack.c.l.b16 %v1645
    %v2053 = vunpack.c.l.b16 %v1646
    %v2054 = vunpack.c.l.b16 %v1647
    %v2055 = vunpack.c.l.b16 %v1648
    %v2056 = vunpack.c.l.b16 %v1649
    %v2057 = vunpack.c.l.b16 %v1650
    %v2058 = vunpack.c.l.b16 %v1651
    %v2059 = vunpack.c.l.b16 %v1652
    %v2060 = vunpack.c.l.b16 %v1653
    %v2061 = vunpack.c.l.b16 %v1654
    %v2062 = vunpack.c.l.b16 %v1655
    %v2063 = vunpack.c.l.b16 %v1656
    %v2064 = vunpack.c.l.b16 %v1657
    %v2065 = vunpack.c.l.b16 %v1658
    %v2066 = vunpack.c.l.b16 %v1659
    %v2067 = vunpack.c.l.b16 %v1660
    %v2068 = vunpack.c.l.b16 %v1661
    %v2069 = vunpack.c.l.b16 %v1662
    %v2070 = vunpack.c.l.b16 %v1663
    %v2071 = vunpack.c.l.b16 %v1664
    %v2072 = vunpack.c.l.b16 %v1665
    %v2073 = vunpack.c.l.b16 %v1666
    %v2074 = vunpack.c.l.b16 %v1667
    %v2075 = vunpack.c.l.b16 %v1668
    %v2076 = vunpack.c.l.b16 %v1669
    %v2077 = vunpack.c.l.b16 %v1670
    %v2078 = vunpack.c.l.b16 %v1671
    %v2079 = vunpack.c.l.b16 %v1672
    %v2080 = vunpack.c.l.b16 %v1673
    %v2081 = vunpack.c.l.b16 %v1674
    %v2082 = vunpack.c.l.b16 %v1675
    %v2083 = vunpack.c.l.b16 %v1676
    %v2084 = vunpack.c.l.b16 %v1677
    %v2085 = vunpack.c.l.b16 %v1678
    %v2086 = vunpack.c.l.b16 %v1679
    %v2087 = vunpack.c.l.b16 %v1680
    %v2088 = vunpack.c.l.b16 %v1681
    %v2089 = vunpack.c.l.b16 %v1682
    %v2090 = vunpack.c.l.b16 %v1683
    %v2091 = vunpack.c.l.b16 %v1684
    %v2092 = vunpack.c.l.b16 %v1685
    %v2093 = vunpack.c.l.b16 %v1686
    %v2094 = vunpack.c.l.b16 %v1687
    %v2095 = vunpack.c.l.b16 %v1688
    %v2096 = vunpack.c.l.b16 %v1689
    %v2097 = vunpack.c.l.b16 %v1690
    %v2098 = vunpack.c.l.b16 %v1691
    %v2099 = vunpack.c.l.b16 %v1692
    %v2100 = vunpack.c.l.b16 %v1693
    %v2101 = vunpack.c.l.b16 %v1694
    %v2102 = vunpack.c.l.b16 %v1695
    %v2103 = vunpack.c.l.b16 %v1696
    %v2104 = vunpack.c.l.b16 %v1697
    %v2105 = vunpack.c.l.b16 %v1698
    %v2106 = vunpack.c.l.b16 %v1699
    %v2107 = vunpack.c.l.b16 %v1700
    %v2108 = vunpack.c.l.b16 %v1701
    %v2109 = vunpack.c.l.b16 %v1702
    %v2110 = vunpack.c.l.b16 %v1703
    %v2111 = vunpack.c.l.b16 %v1704
    %v2112 = vunpack.c.l.b16 %v1705
    %v2113 = vunpack.c.l.b16 %v1706
    %v2114 = vunpack.c.l.b16 %v1707
    %v2115 = vunpack.c.l.b16 %v1708
    %v2116 = vunpack.c.l.b16 %v1709
    %v2117 = vunpack.c.l.b16 %v1710
    %v2118 = vunpack.c.l.b16 %v1711
    %v2119 = vunpack.c.l.b16 %v1712
    %v2120 = vunpack.c.l.b16 %v1713
    %v2121 = vunpack.c.l.b16 %v1714
    %v2122 = vunpack.c.l.b16 %v1715
    %v2123 = vunpack.c.l.b16 %v1716
    %v2124 = vunpack.c.l.b16 %v1717
    %v2125 = vpack.c.b16 %v1926, %v1925
    %v2126 = vpack.c.b16 %v1928, %v1927
    %v2127 = vpack.c.b16 %v1930, %v1929
    %v2128 = vpack.c.b16 %v1932, %v1931
    %v2129 = vpack.c.b16 %v1934, %v1933
    %v2130 = vpack.c.b16 %v1936, %v1935
    %v2131 = vpack.c.b16 %v1938, %v1937
    %v2132 = vpack.c.b16 %v1940, %v1939
    %v2133 = vpack.c.b16 %v1942, %v1941
    %v2134 = vpack.c.b16 %v1944, %v1943
    %v2135 = vpack.c.b16 %v1946, %v1945
    %v2136 = vpack.c.b16 %v1948, %v1947
    %v2137 = vpack.c.b16 %v1950, %v1949
    %v2138 = vpack.c.b16 %v1952, %v1951
    %v2139 = vpack.c.b16 %v1954, %v1953
    %v2140 = vpack.c.b16 %v1956, %v1955
    %v2141 = vpack.c.b16 %v1958, %v1957
    %v2142 = vpack.c.b16 %v1960, %v1959
    %v2143 = vpack.c.b16 %v1962, %v1961
    %v2144 = vpack.c.b16 %v1964, %v1963
    %v2145 = vpack.c.b16 %v1966, %v1965
    %v2146 = vpack.c.b16 %v1968, %v1967
    %v2147 = vpack.c.b16 %v1970, %v1969
    %v2148 = vpack.c.b16 %v1972, %v1971
    %v2149 = vpack.c.b16 %v1974, %v1973
    %v2150 = vpack.c.b16 %v1976, %v1975
    %v2151 = vpack.c.b16 %v1978, %v1977
    %v2152 = vpack.c.b16 %v1980, %v1979
    %v2153 = vpack.c.b16 %v1982, %v1981
    %v2154 = vpack.c.b16 %v1984, %v1983
    %v2155 = vpack.c.b16 %v1986, %v1985
    %v2156 = vpack.c.b16 %v1988, %v1987
    %v2157 = vpack.c.b16 %v1990, %v1989
    %v2158 = vpack.c.b16 %v1992, %v1991
    %v2159 = vpack.c.b16 %v1994, %v1993
    %v2160 = vpack.c.b16 %v1996, %v1995
    %v2161 = vpack.c.b16 %v1998, %v1997
    %v2162 = vpack.c.b16 %v2000, %v1999
    %v2163 = vpack.c.b16 %v2002, %v2001
    %v2164 = vpack.c.b16 %v2004, %v2003
    %v2165 = vpack.c.b16 %v2006, %v2005
    %v2166 = vpack.c.b16 %v2008, %v2007
    %v2167 = vpack.c.b16 %v2010, %v2009
    %v2168 = vpack.c.b16 %v2012, %v2011
    %v2169 = vpack.c.b16 %v2014, %v2013
    %v2170 = vpack.c.b16 %v2016, %v2015
    %v2171 = vpack.c.b16 %v2018, %v2017
    %v2172 = vpack.c.b16 %v2020, %v2019
    %v2173 = vpack.c.b16 %v2022, %v2021
    %v2174 = vpack.c.b16 %v2024, %v2023
    %v2175 = vpack.c.b16 %v2026, %v2025
    %v2176 = vpack.c.b16 %v2028, %v2027
    %v2177 = vpack.c.b16 %v2030, %v2029
    %v2178 = vpack.c.b16 %v2032, %v2031
    %v2179 = vpack.c.b16 %v2034, %v2033
    %v2180 = vpack.c.b16 %v2036, %v2035
    %v2181 = vpack.c.b16 %v2038, %v2037
    %v2182 = vpack.c.b16 %v2040, %v2039
    %v2183 = vpack.c.b16 %v2042, %v2041
    %v2184 = vpack.c.b16 %v2044, %v2043
    %v2185 = vpack.c.b16 %v2046, %v2045
    %v2186 = vpack.c.b16 %v2048, %v2047
    %v2187 = vpack.c.b16 %v2050, %v2049
    %v2188 = vpack.c.b16 %v2052, %v2051
    %v2189 = vpack.c.b16 %v2054, %v2053
    %v2190 = vpack.c.b16 %v2056, %v2055
    %v2191 = vpack.c.b16 %v2058, %v2057
    %v2192 = vpack.c.b16 %v2060, %v2059
    %v2193 = vpack.c.b16 %v2062, %v2061
    %v2194 = vpack.c.b16 %v2064, %v2063
    %v2195 = vpack.c.b16 %v2066, %v2065
    %v2196 = vpack.c.b16 %v2068, %v2067
    %v2197 = vpack.c.b16 %v2070, %v2069
    %v2198 = vpack.c.b16 %v2072, %v2071
    %v2199 = vpack.c.b16 %v2074, %v2073
    %v2200 = vpack.c.b16 %v2076, %v2075
    %v2201 = vpack.c.b16 %v2078, %v2077
    %v2202 = vpack.c.b16 %v2080, %v2079
    %v2203 = vpack.c.b16 %v2082, %v2081
    %v2204 = vpack.c.b16 %v2084, %v2083
    %v2205 = vpack.c.b16 %v2086, %v2085
    %v2206 = vpack.c.b16 %v2088, %v2087
    %v2207 = vpack.c.b16 %v2090, %v2089
    %v2208 = vpack.c.b16 %v2092, %v2091
    %v2209 = vpack.c.b16 %v2094, %v2093
    %v2210 = vpack.c.b16 %v2096, %v2095
    %v2211 = vpack.c.b16 %v2098, %v2097
    %v2212 = vpack.c.b16 %v2100, %v2099
    %v2213 = vpack.c.b16 %v2102, %v2101
    %v2214 = vpack.c.b16 %v2104, %v2103
    %v2215 = vpack.c.b16 %v2106, %v2105
    %v2216 = vpack.c.b16 %v2108, %v2107
    %v2217 = vpack.c.b16 %v2110, %v2109
    %v2218 = vpack.c.b16 %v2112, %v2111
    %v2219 = vpack.c.b16 %v2114, %v2113
    %v2220 = vpack.c.b16 %v2116, %v2115
    %v2221 = vpack.c.b16 %v2118, %v2117
    %v2222 = vpack.c.b16 %v2120, %v2119
    %v2223 = vpack.c.b16 %v2122, %v2121
    %v2224 = vpack.c.b16 %v2124, %v2123
    %v2326 = vsel %vm1234, %v1517, 0
    %2328 = vmatprep.subr.bf16.mxu0 0
    %2329 = vmatpush1.bf16.msra.mxu0 %v2125
    %2330 = vmatprep.subr.bf16.mxu0 0
    %2331 = vmatpush1.bf16.msra.mxu0 %v2126
    %2332 = vmatprep.subr.bf16.mxu0 0
    %2333 = vmatpush1.bf16.msra.mxu0 %v2127
    %2334 = vmatprep.subr.bf16.mxu0 0
    %2335 = vmatpush1.bf16.msra.mxu0 %v2128
    %2336 = vmatprep.subr.bf16.mxu0 0
    %2337 = vmatpush1.bf16.msra.mxu0 %v2129
    %2338 = vmatprep.subr.bf16.mxu0 0
    %2339 = vmatpush1.bf16.msra.mxu0 %v2130
    %2340 = vmatprep.subr.bf16.mxu0 0
    %2341 = vmatpush1.bf16.msra.mxu0 %v2131
    %2342 = vmatprep.subr.bf16.mxu0 0
    %2343 = vmatpush1.bf16.msra.mxu0 %v2132
    %2344 = vmatprep.subr.bf16.mxu0 0
    %2345 = vmatpush1.bf16.msra.mxu0 %v2133
    %2346 = vmatprep.subr.bf16.mxu0 0
    %2347 = vmatpush1.bf16.msra.mxu0 %v2134
    %2348 = vmatprep.subr.bf16.mxu0 0
    %2349 = vmatpush1.bf16.msra.mxu0 %v2135
    %2350 = vmatprep.subr.bf16.mxu0 0
    %2351 = vmatpush1.bf16.msra.mxu0 %v2136
    %2352 = vmatprep.subr.bf16.mxu0 0
    %2353 = vmatpush1.bf16.msra.mxu0 %v2137
    %2354 = vmatprep.subr.bf16.mxu0 0
    %2355 = vmatpush1.bf16.msra.mxu0 %v2138
    %2356 = vmatprep.subr.bf16.mxu0 0
    %2357 = vmatpush1.bf16.msra.mxu0 %v2139
    %2358 = vmatprep.subr.bf16.mxu0 0
    %2359 = vmatpush1.bf16.msra.mxu0 %v2140
    %2360 = vmatprep.mubr.bf16.mxu0 %v1506
    %2361 = vmatmul.mubr.bf16.gmra.mrb[0].mxu0 %v1505
    %v2362 = vpop.f32.mrb[0].mxu0
    %v2363 = vadd.f32 %v1723, %v2362
    %v2364 = vpop.f32.mrb[0].mxu0
    %v2365 = vpop.f32.mrb[0].mxu0
    %v2366 = vpop.f32.mrb[0].mxu0
    %2367 = vdwg.mxu0
    %2368 = vmatprep.subr.bf16.mxu0 0
    %2369 = vmatpush1.bf16.msra.mxu0 %v2141
    %2370 = vmatprep.subr.bf16.mxu0 0
    %2371 = vmatpush1.bf16.msra.mxu0 %v2142
    %2372 = vmatprep.subr.bf16.mxu0 0
    %2373 = vmatpush1.bf16.msra.mxu0 %v2143
    %2374 = vmatprep.subr.bf16.mxu0 0
    %2375 = vmatpush1.bf16.msra.mxu0 %v2144
    %2376 = vmatprep.subr.bf16.mxu0 0
    %2377 = vmatpush1.bf16.msra.mxu0 %v2145
    %2378 = vmatprep.subr.bf16.mxu0 0
    %2379 = vmatpush1.bf16.msra.mxu0 %v2146
    %2380 = vmatprep.subr.bf16.mxu0 0
    %2381 = vmatpush1.bf16.msra.mxu0 %v2147
    %2382 = vmatprep.subr.bf16.mxu0 0
    %2383 = vmatpush1.bf16.msra.mxu0 %v2148
    %2384 = vmatprep.subr.bf16.mxu0 0
    %2385 = vmatpush1.bf16.msra.mxu0 %v2149
    %2386 = vmatprep.subr.bf16.mxu0 0
    %2387 = vmatpush1.bf16.msra.mxu0 %v2150
    %2388 = vmatprep.subr.bf16.mxu0 0
    %2389 = vmatpush1.bf16.msra.mxu0 %v2151
    %2390 = vmatprep.subr.bf16.mxu0 0
    %2391 = vmatpush1.bf16.msra.mxu0 %v2152
    %2392 = vmatprep.subr.bf16.mxu0 0
    %2393 = vmatpush1.bf16.msra.mxu0 %v2153
    %2394 = vmatprep.subr.bf16.mxu0 0
    %2395 = vmatpush1.bf16.msra.mxu0 %v2154
    %2396 = vmatprep.subr.bf16.mxu0 0
    %2397 = vmatpush1.bf16.msra.mxu0 %v2155
    %2398 = vmatprep.subr.bf16.mxu0 0
    %2399 = vmatpush1.bf16.msra.mxu0 %v2156
    %2400 = vmatprep.mubr.bf16.mxu0 %v1508
    %2401 = vmatmul.mubr.bf16.gmra.mrb[0].mxu0 %v1507
    %v2402 = vpop.f32.mrb[0].mxu0
    %v2403 = vadd.f32 %v2363, %v2402
    %v2404 = vpop.f32.mrb[0].mxu0
    %v2405 = vpop.f32.mrb[0].mxu0
    %v2406 = vpop.f32.mrb[0].mxu0
    %2407 = vdwg.mxu0
    %2408 = vmatprep.subr.bf16.mxu0 0
    %2409 = vmatpush1.bf16.msra.mxu0 %v2157
    %2410 = vmatprep.subr.bf16.mxu0 0
    %2411 = vmatpush1.bf16.msra.mxu0 %v2158
    %2412 = vmatprep.subr.bf16.mxu0 0
    %2413 = vmatpush1.bf16.msra.mxu0 %v2159
    %2414 = vmatprep.subr.bf16.mxu0 0
    %2415 = vmatpush1.bf16.msra.mxu0 %v2160
    %2416 = vmatprep.subr.bf16.mxu0 0
    %2417 = vmatpush1.bf16.msra.mxu0 %v2161
    %2418 = vmatprep.subr.bf16.mxu0 0
    %2419 = vmatpush1.bf16.msra.mxu0 %v2162
    %2420 = vmatprep.subr.bf16.mxu0 0
    %2421 = vmatpush1.bf16.msra.mxu0 %v2163
    %2422 = vmatprep.subr.bf16.mxu0 0
    %2423 = vmatpush1.bf16.msra.mxu0 %v2164
    %2424 = vmatprep.subr.bf16.mxu0 0
    %2425 = vmatpush1.bf16.msra.mxu0 %v2165
    %2426 = vmatprep.subr.bf16.mxu0 0
    %2427 = vmatpush1.bf16.msra.mxu0 %v2166
    %2428 = vmatprep.subr.bf16.mxu0 0
    %2429 = vmatpush1.bf16.msra.mxu0 %v2167
    %2430 = vmatprep.subr.bf16.mxu0 0
    %2431 = vmatpush1.bf16.msra.mxu0 %v2168
    %2432 = vmatprep.subr.bf16.mxu0 0
    %2433 = vmatpush1.bf16.msra.mxu0 %v2169
    %2434 = vmatprep.subr.bf16.mxu0 0
    %2435 = vmatpush1.bf16.msra.mxu0 %v2170
    %2436 = vmatprep.subr.bf16.mxu0 0
    %2437 = vmatpush1.bf16.msra.mxu0 %v2171
    %2438 = vmatprep.subr.bf16.mxu0 0
    %2439 = vmatpush1.bf16.msra.mxu0 %v2172
    %2440 = vmatprep.mubr.bf16.mxu0 %v1510
    %2441 = vmatmul.mubr.bf16.gmra.mrb[0].mxu0 %v1509
    %v2442 = vpop.f32.mrb[0].mxu0
    %v2443 = vadd.f32 %v2403, %v2442
    %v2444 = vpop.f32.mrb[0].mxu0
    %v2445 = vpop.f32.mrb[0].mxu0
    %v2446 = vpop.f32.mrb[0].mxu0
    %2447 = vdwg.mxu0
    %2448 = vmatprep.subr.bf16.mxu0 0
    %2449 = vmatpush1.bf16.msra.mxu0 %v2173
    %2450 = vmatprep.subr.bf16.mxu0 0
    %2451 = vmatpush1.bf16.msra.mxu0 %v2174
    %2452 = vmatprep.subr.bf16.mxu0 0
    %2453 = vmatpush1.bf16.msra.mxu0 %v2175
    %2454 = vmatprep.subr.bf16.mxu0 0
    %2455 = vmatpush1.bf16.msra.mxu0 %v2176
    %2456 = vmatprep.subr.bf16.mxu0 0
    %2457 = vmatpush1.bf16.msra.mxu0 %v2177
    %2458 = vmatprep.subr.bf16.mxu0 0
    %2459 = vmatpush1.bf16.msra.mxu0 %v2178
    %2460 = vmatprep.subr.bf16.mxu0 0
    %2461 = vmatpush1.bf16.msra.mxu0 %v2179
    %2462 = vmatprep.subr.bf16.mxu0 0
    %2463 = vmatpush1.bf16.msra.mxu0 %v2180
    %2464 = vmatprep.subr.bf16.mxu0 0
    %2465 = vmatpush1.bf16.msra.mxu0 %v2181
    %2466 = vmatprep.subr.bf16.mxu0 0
    %2467 = vmatpush1.bf16.msra.mxu0 %v2182
    %2468 = vmatprep.subr.bf16.mxu0 0
    %2469 = vmatpush1.bf16.msra.mxu0 %v2183
    %2470 = vmatprep.subr.bf16.mxu0 0
    %2471 = vmatpush1.bf16.msra.mxu0 %v2184
    %2472 = vmatprep.subr.bf16.mxu0 0
    %2473 = vmatpush1.bf16.msra.mxu0 %v2185
    %2474 = vmatprep.subr.bf16.mxu0 0
    %2475 = vmatpush1.bf16.msra.mxu0 %v2186
    %2476 = vmatprep.subr.bf16.mxu0 0
    %2477 = vmatpush1.bf16.msra.mxu0 %v2187
    %2478 = vmatprep.subr.bf16.mxu0 0
    %2479 = vmatpush1.bf16.msra.mxu0 %v2188
    %2480 = vmatprep.mubr.bf16.mxu0 %v1512
    %2481 = vmatmul.mubr.bf16.gmra.mrb[0].mxu0 %v1511
    %v2482 = vpop.f32.mrb[0].mxu0
    %v2483 = vadd.f32 %v2443, %v2482
    %v2484 = vpop.f32.mrb[0].mxu0
    %v2485 = vpop.f32.mrb[0].mxu0
    %v2486 = vpop.f32.mrb[0].mxu0
    %2487 = vdwg.mxu0
    %2488 = vmatprep.subr.bf16.mxu0 0
    %2489 = vmatpush1.bf16.msra.mxu0 %v2189
    %2490 = vmatprep.subr.bf16.mxu0 0
    %2491 = vmatpush1.bf16.msra.mxu0 %v2190
    %2492 = vmatprep.subr.bf16.mxu0 0
    %2493 = vmatpush1.bf16.msra.mxu0 %v2191
    %2494 = vmatprep.subr.bf16.mxu0 0
    %2495 = vmatpush1.bf16.msra.mxu0 %v2192
    %2496 = vmatprep.subr.bf16.mxu0 0
    %2497 = vmatpush1.bf16.msra.mxu0 %v2193
    %2498 = vmatprep.subr.bf16.mxu0 0
    %2499 = vmatpush1.bf16.msra.mxu0 %v2194
    %2500 = vmatprep.subr.bf16.mxu0 0
    %2501 = vmatpush1.bf16.msra.mxu0 %v2195
    %2502 = vmatprep.subr.bf16.mxu0 0
    %2503 = vmatpush1.bf16.msra.mxu0 %v2196
    %2504 = vmatprep.subr.bf16.mxu0 0
    %2505 = vmatpush1.bf16.msra.mxu0 %v2197
    %2506 = vmatprep.subr.bf16.mxu0 0
    %2507 = vmatpush1.bf16.msra.mxu0 %v2198
    %2508 = vmatprep.subr.bf16.mxu0 0
    %2509 = vmatpush1.bf16.msra.mxu0 %v2199
    %2510 = vmatprep.subr.bf16.mxu0 0
    %2511 = vmatpush1.bf16.msra.mxu0 %v2200
    %2512 = vmatprep.subr.bf16.mxu0 0
    %2513 = vmatpush1.bf16.msra.mxu0 %v2201
    %2514 = vmatprep.subr.bf16.mxu0 0
    %2515 = vmatpush1.bf16.msra.mxu0 %v2202
    %2516 = vmatprep.subr.bf16.mxu0 0
    %2517 = vmatpush1.bf16.msra.mxu0 %v2203
    %2518 = vmatprep.subr.bf16.mxu0 0
    %2519 = vmatpush1.bf16.msra.mxu0 %v2204
    %2520 = vmatprep.mubr.bf16.mxu0 %v1514
    %2521 = vmatmul.mubr.bf16.gmra.mrb[0].mxu0 %v1513
    %v2522 = vpop.f32.mrb[0].mxu0
    %v2523 = vadd.f32 %v2483, %v2522
    %v2524 = vpop.f32.mrb[0].mxu0
    %v2525 = vpop.f32.mrb[0].mxu0
    %v2526 = vpop.f32.mrb[0].mxu0
    %2527 = vdwg.mxu0
    %2528 = vmatprep.subr.bf16.mxu0 0
    %2529 = vmatpush1.bf16.msra.mxu0 %v2205
    %2530 = vmatprep.subr.bf16.mxu0 0
    %2531 = vmatpush1.bf16.msra.mxu0 %v2206
    %2532 = vmatprep.subr.bf16.mxu0 0
    %2533 = vmatpush1.bf16.msra.mxu0 %v2207
    %2534 = vmatprep.subr.bf16.mxu0 0
    %2535 = vmatpush1.bf16.msra.mxu0 %v2208
    %2536 = vmatprep.subr.bf16.mxu0 0
    %2537 = vmatpush1.bf16.msra.mxu0 %v2209
    %2538 = vmatprep.subr.bf16.mxu0 0
    %2539 = vmatpush1.bf16.msra.mxu0 %v2210
    %2540 = vmatprep.subr.bf16.mxu0 0
    %2541 = vmatpush1.bf16.msra.mxu0 %v2211
    %2542 = vmatprep.subr.bf16.mxu0 0
    %2543 = vmatpush1.bf16.msra.mxu0 %v2212
    %2544 = vmatprep.subr.bf16.mxu0 0
    %2545 = vmatpush1.bf16.msra.mxu0 %v2213
    %2546 = vmatprep.subr.bf16.mxu0 0
    %2547 = vmatpush1.bf16.msra.mxu0 %v2214
    %2548 = vmatprep.subr.bf16.mxu0 0
    %2549 = vmatpush1.bf16.msra.mxu0 %v2215
    %2550 = vmatprep.subr.bf16.mxu0 0
    %2551 = vmatpush1.bf16.msra.mxu0 %v2216
    %2552 = vmatprep.subr.bf16.mxu0 0
    %2553 = vmatpush1.bf16.msra.mxu0 %v2217
    %2554 = vmatprep.subr.bf16.mxu0 0
    %2555 = vmatpush1.bf16.msra.mxu0 %v2218
    %2556 = vmatprep.subr.bf16.mxu0 0
    %2557 = vmatpush1.bf16.msra.mxu0 %v2219
    %2558 = vmatprep.subr.bf16.mxu0 0
    %2559 = vmatpush1.bf16.msra.mxu0 %v2220
    %2560 = vmatprep.mubr.bf16.mxu0 %v1516
    %2561 = vmatmul.mubr.bf16.gmra.mrb[0].mxu0 %v1515
    %v2562 = vpop.f32.mrb[0].mxu0
    %v2563 = vadd.f32 %v2523, %v2562
    %v2564 = vpop.f32.mrb[0].mxu0
    %v2565 = vpop.f32.mrb[0].mxu0
    %v2566 = vpop.f32.mrb[0].mxu0
    %2567 = vdwg.mxu0
    %2568 = vmatprep.subr.bf16.mxu0 0
    %2569 = vmatpush1.bf16.msra.mxu0 %v2221
    %2570 = vmatprep.subr.bf16.mxu0 0
    %2571 = vmatpush1.bf16.msra.mxu0 %v2222
    %2572 = vmatprep.subr.bf16.mxu0 0
    %2573 = vmatpush1.bf16.msra.mxu0 %v2223
    %2574 = vmatprep.subr.bf16.mxu0 0
    %2575 = vmatpush1.bf16.msra.mxu0 %v2224
    %2576 = vmatprep.subr.bf16.mxu0 0
    %2577 = vmatpush1.bf16.msra.mxu0 0
    %2578 = vmatprep.subr.bf16.mxu0 0
    %2579 = vmatpush1.bf16.msra.mxu0 0
    %2580 = vmatprep.subr.bf16.mxu0 0
    %2581 = vmatpush1.bf16.msra.mxu0 0
    %2582 = vmatprep.subr.bf16.mxu0 0
    %2583 = vmatpush1.bf16.msra.mxu0 0
    %2584 = vmatprep.subr.bf16.mxu0 0
    %2585 = vmatpush1.bf16.msra.mxu0 0
    %2586 = vmatprep.subr.bf16.mxu0 0
    %2587 = vmatpush1.bf16.msra.mxu0 0
    %2588 = vmatprep.subr.bf16.mxu0 0
    %2589 = vmatpush1.bf16.msra.mxu0 0
    %2590 = vmatprep.subr.bf16.mxu0 0
    %2591 = vmatpush1.bf16.msra.mxu0 0
    %2592 = vmatprep.subr.bf16.mxu0 0
    %2593 = vmatpush1.bf16.msra.mxu0 0
    %2594 = vmatprep.subr.bf16.mxu0 0
    %2595 = vmatpush1.bf16.msra.mxu0 0
    %2596 = vmatprep.subr.bf16.mxu0 0
    %2597 = vmatpush1.bf16.msra.mxu0 0
    %2598 = vmatprep.subr.bf16.mxu0 0
    %2599 = vmatpush1.bf16.msra.mxu0 0
    %2600 = vmatprep.mubr.bf16.mxu0 0
    %2601 = vmatmul.mubr.bf16.gmra.mrb[0].mxu0 %v2326
    %v2602 = vpop.f32.mrb[0].mxu0
    %v2603 = vadd.f32 %v2563, %v2602
    %v2604 = vpop.f32.mrb[0].mxu0
    %v2605 = vpop.f32.mrb[0].mxu0
    %v2606 = vpop.f32.mrb[0].mxu0
    %2607 = vdwg.mxu0
    %v2608 = vmax.f32 %v2603, 0.0
    %v2609 = vpack.c.bf16 %v2608, %v2608
    %v2610 = vld [vmem:[%s8] sm:$0xf]
    %v2611 = vld [vmem:[%s8 + $0x4] sm:$0xf]
    %v2612 = vld [vmem:[%s8 + $0x8] sm:$0xf]
    %v2613 = vld [vmem:[%s8 + $0xc] sm:$0xf]
    %v2614 = vld [vmem:[%s8 + $0x10] sm:$0xf]
    %v2615 = vld [vmem:[%s8 + $0x14] sm:$0xf]
    %v2616 = vld [vmem:[%s8 + $0x18] sm:$0xf]
    %v2617 = vld [vmem:[%s8 + $0x1c] sm:$0xf]
    %v2618 = vld [vmem:[%s8 + $0x20] sm:$0xf]
    %v2619 = vld [vmem:[%s8 + $0x24] sm:$0xf]
    %v2620 = vld [vmem:[%s8 + $0x28] sm:$0xf]
    %v2621 = vld [vmem:[%s8 + $0x2c] sm:$0xf]
    %v2622 = vld [vmem:[%s8 + $0x30] sm:$0xf]
    %v2623 = vld [vmem:[%s8 + $0x34] sm:$0xf]
    %v2624 = vld [vmem:[%s8 + $0x38] sm:$0xf]
    %v2625 = vld [vmem:[%s8 + $0x3c] sm:$0xf]
    %v2626 = vld [vmem:[%s9] sm:$0x1]
    %v2628 = vlaneseq
    %v2629 = vshrl.u32 %v2628, 7
    %v2630 = vsub.s32 0, %v2629
    %v2631 = vrot.slane %v2626, %v2630
    %v2649 = vunpack.c.l.b16 %v2610
    %v2650 = vunpack.c.l.b16 %v2611
    %v2651 = vunpack.c.l.b16 %v2612
    %v2652 = vunpack.c.l.b16 %v2613
    %v2653 = vunpack.c.l.b16 %v2614
    %v2654 = vunpack.c.l.b16 %v2615
    %v2655 = vunpack.c.l.b16 %v2616
    %v2656 = vunpack.c.l.b16 %v2617
    %v2657 = vunpack.c.l.b16 %v2618
    %v2658 = vunpack.c.l.b16 %v2619
    %v2659 = vunpack.c.l.b16 %v2620
    %v2660 = vunpack.c.l.b16 %v2621
    %v2661 = vunpack.c.l.b16 %v2622
    %v2662 = vunpack.c.l.b16 %v2623
    %v2663 = vunpack.c.l.b16 %v2624
    %v2664 = vunpack.c.l.b16 %v2625
    %v2665 = vpack.c.b16 %v2650, %v2649
    %v2666 = vpack.c.b16 %v2652, %v2651
    %v2667 = vpack.c.b16 %v2654, %v2653
    %v2668 = vpack.c.b16 %v2656, %v2655
    %v2669 = vpack.c.b16 %v2658, %v2657
    %v2670 = vpack.c.b16 %v2660, %v2659
    %v2671 = vpack.c.b16 %v2662, %v2661
    %v2672 = vpack.c.b16 %v2664, %v2663
    %2681 = vmatprep.subr.bf16.mxu0 0
    %2682 = vmatpush1.bf16.msra.mxu0 %v2665
    %2683 = vmatprep.subr.bf16.mxu0 0
    %2684 = vmatpush1.bf16.msra.mxu0 %v2666
    %2685 = vmatprep.subr.bf16.mxu0 0
    %2686 = vmatpush1.bf16.msra.mxu0 %v2667
    %2687 = vmatprep.subr.bf16.mxu0 0
    %2688 = vmatpush1.bf16.msra.mxu0 %v2668
    %2689 = vmatprep.subr.bf16.mxu0 0
    %2690 = vmatpush1.bf16.msra.mxu0 %v2669
    %2691 = vmatprep.subr.bf16.mxu0 0
    %2692 = vmatpush1.bf16.msra.mxu0 %v2670
    %2693 = vmatprep.subr.bf16.mxu0 0
    %2694 = vmatpush1.bf16.msra.mxu0 %v2671
    %2695 = vmatprep.subr.bf16.mxu0 0
    %2696 = vmatpush1.bf16.msra.mxu0 %v2672
    %2697 = vmatprep.subr.bf16.mxu0 0
    %2698 = vmatpush1.bf16.msra.mxu0 0
    %2699 = vmatprep.subr.bf16.mxu0 0
    %2700 = vmatpush1.bf16.msra.mxu0 0
    %2701 = vmatprep.subr.bf16.mxu0 0
    %2702 = vmatpush1.bf16.msra.mxu0 0
    %2703 = vmatprep.subr.bf16.mxu0 0
    %2704 = vmatpush1.bf16.msra.mxu0 0
    %2705 = vmatprep.subr.bf16.mxu0 0
    %2706 = vmatpush1.bf16.msra.mxu0 0
    %2707 = vmatprep.subr.bf16.mxu0 0
    %2708 = vmatpush1.bf16.msra.mxu0 0
    %2709 = vmatprep.subr.bf16.mxu0 0
    %2710 = vmatpush1.bf16.msra.mxu0 0
    %2711 = vmatprep.subr.bf16.mxu0 0
    %2712 = vmatpush1.bf16.msra.mxu0 0
    %2713 = vmatprep.mubr.bf16.mxu0 0
    %2714 = vmatmul.mubr.bf16.gmra.mrb[0].mxu0 %v2609
    %v2715 = vpop.f32.mrb[0].mxu0
    %v2716 = vadd.f32 %v2631, %v2715
    %v2717 = vpop.f32.mrb[0].mxu0
    %v2718 = vpop.f32.mrb[0].mxu0
    %v2719 = vpop.f32.mrb[0].mxu0
    %2720 = vdwg.mxu0
    %2721 = vst [vmem:[#allocation11] sm:$0x3] %v2716
    // Predicated region
    $region50: #{ssl_net_forward.1} parent=1 // pred_check
      _
    $region51: #{ssl_net_forward.1} parent=1 // pred_check_branch
      %2723 = sbr.rel (0) target = $region53
    $region52: #{ssl_net_forward.1} parent=1 // pred_region
      %s2725 = ssub.s32 32, 32
      %2726 = vsyncadd [#allocation8], %s2725
      %s2728 = sshll.u32 [#allocation11], 4
      %s2729 = int_to_ptr.vmem [resolvable:$true] %s2728
      %2731 = dma.vmem_to_hbm [thread:$0]  %s2729, 32, %s10, [#allocation8]
    $region53: #{ssl_net_forward.1} parent=1 // pred_fallthru
      _
    // Predicated region
    $region54: #{ssl_net_forward.1} parent=1 // pred_check
      _
    $region55: #{ssl_net_forward.1} parent=1 // pred_check_branch
      %2733 = sbr.rel (0) target = $region57
    $region56: #{ssl_net_forward.1} parent=1 // pred_region
      %2734 = dma.done [#allocation8], 32
    $region57: #{ssl_net_forward.1} parent=1 // pred_fallthru
      _
    %2735 = vsyncpa [#allocation7], 1
    %2736 = vsyncpa [#allocation10], 1
    %2737 = vsyncpa [#allocation8], 1

</llo_original>
